<compile_context>
chip_gen: v7x
topology: tpu7x:2x2x1
jax: 0.10.0
libtpu: 0.0.40
codegen_flags: <defaults>
</compile_context>

<pallas_src>
import functools

import numpy as np
import jax
import jax.numpy as jnp
from jax.experimental import pallas as pl
from jax.experimental.pallas import tpu as pltpu


def _fused_conv_block_kernel(x_ref, masks_ref, w1_ref, b1_ref, w2_ref, b2_ref,
                             o_ref, *, W, K):
    """Fused Conv->ReLU->Conv->ReLU for a block of Nb batch elements.

    x_ref    : (Nb, Cin, S)          input planes, S = H*W flattened on lanes
    masks_ref: (2K, S)               rows 0..K-1: row validity per kh,
                                     rows K..2K-1: col validity per kw (f32 0/1)
    w*_ref   : (K*K, Cout_l, Cin_l)  per-tap weight matrices (MXU operands)
    b*_ref   : (Cout_l, 1)
    o_ref    : (Nb, Cout, S)         lane-dense output (straight vst)
    """
    S = x_ref.shape[-1]
    nb = x_ref.shape[0]
    p = K // 2

    # Compose the per-tap 'same'-padding masks from 2K base vectors, hoisted out
    # of the batch / layer / tap loops.  Centre tap: no mask at all; kh==p or
    # kw==p taps: only one of the two vectors.
    tap_masks = []
    for kh in range(K):
        for kw in range(K):
            row = None if kh == p else masks_ref[kh:kh + 1, :]        # (1, S)
            col = None if kw == p else masks_ref[K + kw:K + kw + 1, :]  # (1, S)
            if row is None:
                tap_masks.append(col)            # None for the centre tap
            elif col is None:
                tap_masks.append(row)
            else:
                tap_masks.append(row * col)

    def conv_relu(inp, w_ref, b_ref):
        """inp: (Cin, S) f32 -> (Cout, S) f32, conv 'same' + bias + ReLU."""
        cout = b_ref.shape[0]
        acc = jnp.zeros((cout, S), jnp.float32)
        for kh in range(K):
            for kw in range(K):
                t = kh * K + kw
                off = (kh - p) * W + (kw - p)
                amt = (-off) % S
                # One XLU lane roll per tap; the mask realizes the zero padding
                # (including the within-row / plane wrap lanes).
                shifted = pltpu.roll(inp, amt, axis=1) if amt else inp
                m = tap_masks[t]
                masked = shifted if m is None else shifted * m
                # Channel contraction on the MXU; co-issues with the VPU/XLU
                # roll + mask work and accumulates in f32.
                acc = acc + jnp.dot(w_ref[t], masked,
                                    preferred_element_type=jnp.float32)
        return jnp.maximum(acc + b_ref[...], 0.0)        # bias + fused ReLU

    for n in range(nb):                                  # static unroll over batch block
        x = x_ref[n].astype(jnp.float32)
        h1 = conv_relu(x, w1_ref, b1_ref)                # layer-1 act stays on-chip
        o_ref[n] = conv_relu(h1, w2_ref, b2_ref).astype(o_ref.dtype)


def _pack_conv_params(w_oihw, b):
    """OIHW weights -> (K*K, Cout, Cin) per-tap matrices; bias -> (Cout, 1)."""
    cout, cin, K, _ = w_oihw.shape
    # Tap t = kh*K + kw holds weight[:, :, kh, kw] as a (Cout, Cin) matrix.
    w_taps = jnp.transpose(w_oihw, (2, 3, 0, 1)).reshape(K * K, cout, cin)
    return w_taps, b.reshape(cout, 1)


def _row_col_masks(H, W, K):
    """(2K, H*W) f32: rows 0..K-1 row-validity per kh, K..2K-1 col-validity per kw."""
    p = K // 2
    s = np.arange(H * W)
    hh, ww = s // W, s % W
    rows = []
    for kh in range(K):
        dh = kh - p
        rows.append(((hh + dh >= 0) & (hh + dh < H)).astype(np.float32))
    for kw in range(K):
        dw = kw - p
        rows.append(((ww + dw >= 0) & (ww + dw < W)).astype(np.float32))
    return jnp.asarray(np.stack(rows))


def _tensorcores_per_chip():
    """2 on v7x (dual TensorCore), else 1.  Best-effort; defaults to 1."""
    try:
        kind = jax.devices()[0].device_kind.lower()
        if "v7" in kind or "7x" in kind:
            return 2
    except Exception:
        pass
    return 1


@jax.jit
def conv_block_forward(x_nchw, params):
    """ConvBlock.forward: Conv->ReLU->Conv->ReLU.  Input/output are NCHW."""
    N, c_in, H, W = x_nchw.shape
    c_mid = params["w1"].shape[0]
    c_out = params["w2"].shape[0]
    K = params["w1"].shape[-1]
    if K % 2 == 0:
        raise ValueError("Only allowing odd kernel sizes.")
    S = H * W

    w1p, b1p = _pack_conv_params(params["w1"], params["b1"])
    w2p, b2p = _pack_conv_params(params["w2"], params["b2"])
    masks = _row_col_masks(H, W, K)
    x_flat = x_nchw.reshape(N, c_in, S)      # free reshape: merge trailing H, W

    # v5e/v6e: single grid step over the whole batch (amortize per-step overhead,
    # one larger DMA).  v7x: 2 parallel blocks so both TensorCores get work.
    n_cores = _tensorcores_per_chip()
    grid_n = n_cores if (N % n_cores == 0 and N >= n_cores) else 1
    nb = N // grid_n

    kernel = functools.partial(_fused_conv_block_kernel, W=W, K=K)

    out_flat = pl.pallas_call(
        kernel,
        out_shape=jax.ShapeDtypeStruct((N, c_out, S), x_nchw.dtype),
        grid=(grid_n,),
        in_specs=[
            pl.BlockSpec((nb, c_in, S), lambda g: (g, 0, 0)),
            # Remaining operands are constant across the grid -> resident in VMEM.
            pl.BlockSpec((2 * K, S), lambda g: (0, 0)),
            pl.BlockSpec((K * K, c_mid, c_in), lambda g: (0, 0, 0)),
            pl.BlockSpec((c_mid, 1), lambda g: (0, 0)),
            pl.BlockSpec((K * K, c_out, c_mid), lambda g: (0, 0, 0)),
            pl.BlockSpec((c_out, 1), lambda g: (0, 0)),
        ],
        out_specs=pl.BlockSpec((nb, c_out, S), lambda g: (g, 0, 0)),
        compiler_params=pltpu.CompilerParams(
            dimension_semantics=("parallel",)),     # batch blocks across TCs (v7x)
    )(x_flat, masks, w1p, b1p, w2p, b2p)

    return out_flat.reshape(N, c_out, H, W)          # free reshape back to NCHW


def init_conv_block_params(key, in_channels, out_channels, kernel_size):
    """Kaiming-normal (relu) weights in torch OIHW layout + torch-default bias."""
    if kernel_size % 2 == 0:
        raise ValueError("Only allowing odd kernel sizes.")
    params = {}
    cins = (in_channels, out_channels)
    for i, cin in enumerate(cins):
        key, kw_, kb_ = jax.random.split(key, 3)
        fan_in = cin * kernel_size * kernel_size
        std = (2.0 / fan_in) ** 0.5                  # kaiming_normal_, 'relu'
        w = std * jax.random.normal(
            kw_, (out_channels, cin, kernel_size, kernel_size), jnp.float32)
        bound = 1.0 / (fan_in ** 0.5)
        b = jax.random.uniform(kb_, (out_channels,), jnp.float32,
                               minval=-bound, maxval=bound)
        params[f"w{i + 1}"] = w
        params[f"b{i + 1}"] = b
    return params


def _reference_forward(x_nchw, params):
    """Pure-JAX reference (lax conv) for the correctness check."""
    y = x_nchw
    for i in (1, 2):
        y = jax.lax.conv_general_dilated(
            y, params[f"w{i}"], (1, 1), "SAME",
            dimension_numbers=("NCHW", "OIHW", "NCHW"))
        y = y + params[f"b{i}"][None, :, None, None]
        y = jnp.maximum(y, 0.0)
    return y


if __name__ == "__main__":
    in_channels, out_channels, kernel_size = 4, 8, 3
    N, H, W = 2, 16, 16

    key = jax.random.PRNGKey(0)
    kx, kp = jax.random.split(key)
    x = jax.random.normal(kx, (N, in_channels, H, W), jnp.float32)
    params = init_conv_block_params(kp, in_channels, out_channels, kernel_size)

    out = jax.block_until_ready(conv_block_forward(x, params))
    ref = _reference_forward(x, params)

    assert out.shape == (N, out_channels, H, W)
    assert jnp.allclose(out, ref, atol=1e-4, rtol=1e-4), "mismatch vs reference"

    print("KERNEL_OK")
</pallas_src>

<mosaic_0001>
module attributes {stable_mosaic.version = 11 : i64} {
  func.func @_fused_conv_block_kernel(%arg0: i32, %arg1: memref<2x4x256xf32, #tpu.memory_space<vmem>>, %arg2: memref<6x256xf32, #tpu.memory_space<vmem>>, %arg3: memref<9x8x4xf32, #tpu.memory_space<vmem>>, %arg4: memref<8x1xf32, #tpu.memory_space<vmem>>, %arg5: memref<9x8x8xf32, #tpu.memory_space<vmem>>, %arg6: memref<8x1xf32, #tpu.memory_space<vmem>>, %arg7: memref<2x8x256xf32, #tpu.memory_space<vmem>>) attributes {dimension_semantics = [#tpu.dimension_semantics<parallel>], iteration_bounds = array<i64: 1>, scalar_prefetch = 0 : i64, scratch_operands = 0 : i64, tpu.core_type = #tpu.core_type<tc>, window_params = [{transform_indices = @transform_0, window_bounds = array<i64: 2, 4, 256>}, {pipeline_mode = #tpu.pipeline_mode<synchronous>, transform_indices = @transform_1, window_bounds = array<i64: 6, 256>}, {pipeline_mode = #tpu.pipeline_mode<synchronous>, transform_indices = @transform_2, window_bounds = array<i64: 9, 8, 4>}, {pipeline_mode = #tpu.pipeline_mode<synchronous>, transform_indices = @transform_3, window_bounds = array<i64: 8, 1>}, {pipeline_mode = #tpu.pipeline_mode<synchronous>, transform_indices = @transform_4, window_bounds = array<i64: 9, 8, 8>}, {pipeline_mode = #tpu.pipeline_mode<synchronous>, transform_indices = @transform_5, window_bounds = array<i64: 8, 1>}, {transform_indices = @transform_6, window_bounds = array<i64: 2, 8, 256>}]} {
    %c0 = arith.constant 0 : index
    %c0_0 = arith.constant 0 : index
    %0 = vector.load %arg2[%c0, %c0_0] : memref<6x256xf32, #tpu.memory_space<vmem>>, vector<1x256xf32>
    %c3 = arith.constant 3 : index
    %c0_1 = arith.constant 0 : index
    %1 = vector.load %arg2[%c3, %c0_1] : memref<6x256xf32, #tpu.memory_space<vmem>>, vector<1x256xf32>
    %2 = arith.mulf %0, %1 : vector<1x256xf32>
    %c0_2 = arith.constant 0 : index
    %c0_3 = arith.constant 0 : index
    %3 = vector.load %arg2[%c0_2, %c0_3] : memref<6x256xf32, #tpu.memory_space<vmem>>, vector<1x256xf32>
    %c0_4 = arith.constant 0 : index
    %c0_5 = arith.constant 0 : index
    %4 = vector.load %arg2[%c0_4, %c0_5] : memref<6x256xf32, #tpu.memory_space<vmem>>, vector<1x256xf32>
    %c5 = arith.constant 5 : index
    %c0_6 = arith.constant 0 : index
    %5 = vector.load %arg2[%c5, %c0_6] : memref<6x256xf32, #tpu.memory_space<vmem>>, vector<1x256xf32>
    %6 = arith.mulf %4, %5 : vector<1x256xf32>
    %c3_7 = arith.constant 3 : index
    %c0_8 = arith.constant 0 : index
    %7 = vector.load %arg2[%c3_7, %c0_8] : memref<6x256xf32, #tpu.memory_space<vmem>>, vector<1x256xf32>
    %c5_9 = arith.constant 5 : index
    %c0_10 = arith.constant 0 : index
    %8 = vector.load %arg2[%c5_9, %c0_10] : memref<6x256xf32, #tpu.memory_space<vmem>>, vector<1x256xf32>
    %c2 = arith.constant 2 : index
    %c0_11 = arith.constant 0 : index
    %9 = vector.load %arg2[%c2, %c0_11] : memref<6x256xf32, #tpu.memory_space<vmem>>, vector<1x256xf32>
    %c3_12 = arith.constant 3 : index
    %c0_13 = arith.constant 0 : index
    %10 = vector.load %arg2[%c3_12, %c0_13] : memref<6x256xf32, #tpu.memory_space<vmem>>, vector<1x256xf32>
    %11 = arith.mulf %9, %10 : vector<1x256xf32>
    %c2_14 = arith.constant 2 : index
    %c0_15 = arith.constant 0 : index
    %12 = vector.load %arg2[%c2_14, %c0_15] : memref<6x256xf32, #tpu.memory_space<vmem>>, vector<1x256xf32>
    %c2_16 = arith.constant 2 : index
    %c0_17 = arith.constant 0 : index
    %13 = vector.load %arg2[%c2_16, %c0_17] : memref<6x256xf32, #tpu.memory_space<vmem>>, vector<1x256xf32>
    %c5_18 = arith.constant 5 : index
    %c0_19 = arith.constant 0 : index
    %14 = vector.load %arg2[%c5_18, %c0_19] : memref<6x256xf32, #tpu.memory_space<vmem>>, vector<1x256xf32>
    %15 = arith.mulf %13, %14 : vector<1x256xf32>
    %c0_20 = arith.constant 0 : index
    %c0_21 = arith.constant 0 : index
    %c0_22 = arith.constant 0 : index
    %16 = vector.load %arg1[%c0_20, %c0_21, %c0_22] : memref<2x4x256xf32, #tpu.memory_space<vmem>>, vector<1x4x256xf32>
    %17 = vector.shape_cast %16 : vector<1x4x256xf32> to vector<4x256xf32>
    %cst = arith.constant 0.000000e+00 : f32
    %18 = vector.broadcast %cst : f32 to vector<8x256xf32>
    %c17_i32 = arith.constant 17 : i32
    %19 = tpu.dynamic_rotate %17 by %c17_i32 dim 1 : vector<4x256xf32>, i32 -> vector<4x256xf32>
    %20 = vector.broadcast %2 : vector<1x256xf32> to vector<4x256xf32>
    %21 = arith.mulf %19, %20 : vector<4x256xf32>
    %c0_23 = arith.constant 0 : index
    %c0_24 = arith.constant 0 : index
    %c0_25 = arith.constant 0 : index
    %22 = vector.load %arg3[%c0_23, %c0_24, %c0_25] : memref<9x8x4xf32, #tpu.memory_space<vmem>>, vector<1x8x4xf32>
    %23 = vector.shape_cast %22 : vector<1x8x4xf32> to vector<8x4xf32>
    %cst_26 = arith.constant dense<0.000000e+00> : vector<8x256xf32>
    %24 = tpu.matmul %23, %21, %cst_26 {dimension_numbers = #tpu.dot_dimension_numbers<[1], [0], [0], [1], [0, 0, 1, 1], [], []>} : vector<8x4xf32>, vector<4x256xf32>, vector<8x256xf32> -> vector<8x256xf32>
    %25 = arith.addf %18, %24 : vector<8x256xf32>
    %c16_i32 = arith.constant 16 : i32
    %26 = tpu.dynamic_rotate %17 by %c16_i32 dim 1 : vector<4x256xf32>, i32 -> vector<4x256xf32>
    %27 = vector.broadcast %3 : vector<1x256xf32> to vector<4x256xf32>
    %28 = arith.mulf %26, %27 : vector<4x256xf32>
    %c1 = arith.constant 1 : index
    %c0_27 = arith.constant 0 : index
    %c0_28 = arith.constant 0 : index
    %29 = vector.load %arg3[%c1, %c0_27, %c0_28] : memref<9x8x4xf32, #tpu.memory_space<vmem>>, vector<1x8x4xf32>
    %30 = vector.shape_cast %29 : vector<1x8x4xf32> to vector<8x4xf32>
    %cst_29 = arith.constant dense<0.000000e+00> : vector<8x256xf32>
    %31 = tpu.matmul %30, %28, %cst_29 {dimension_numbers = #tpu.dot_dimension_numbers<[1], [0], [0], [1], [0, 0, 1, 1], [], []>} : vector<8x4xf32>, vector<4x256xf32>, vector<8x256xf32> -> vector<8x256xf32>
    %32 = arith.addf %25, %31 : vector<8x256xf32>
    %c15_i32 = arith.constant 15 : i32
    %33 = tpu.dynamic_rotate %17 by %c15_i32 dim 1 : vector<4x256xf32>, i32 -> vector<4x256xf32>
    %34 = vector.broadcast %6 : vector<1x256xf32> to vector<4x256xf32>
    %35 = arith.mulf %33, %34 : vector<4x256xf32>
    %c2_30 = arith.constant 2 : index
    %c0_31 = arith.constant 0 : index
    %c0_32 = arith.constant 0 : index
    %36 = vector.load %arg3[%c2_30, %c0_31, %c0_32] : memref<9x8x4xf32, #tpu.memory_space<vmem>>, vector<1x8x4xf32>
    %37 = vector.shape_cast %36 : vector<1x8x4xf32> to vector<8x4xf32>
    %cst_33 = arith.constant dense<0.000000e+00> : vector<8x256xf32>
    %38 = tpu.matmul %37, %35, %cst_33 {dimension_numbers = #tpu.dot_dimension_numbers<[1], [0], [0], [1], [0, 0, 1, 1], [], []>} : vector<8x4xf32>, vector<4x256xf32>, vector<8x256xf32> -> vector<8x256xf32>
    %39 = arith.addf %32, %38 : vector<8x256xf32>
    %c1_i32 = arith.constant 1 : i32
    %40 = tpu.dynamic_rotate %17 by %c1_i32 dim 1 : vector<4x256xf32>, i32 -> vector<4x256xf32>
    %41 = vector.broadcast %7 : vector<1x256xf32> to vector<4x256xf32>
    %42 = arith.mulf %40, %41 : vector<4x256xf32>
    %c3_34 = arith.constant 3 : index
    %c0_35 = arith.constant 0 : index
    %c0_36 = arith.constant 0 : index
    %43 = vector.load %arg3[%c3_34, %c0_35, %c0_36] : memref<9x8x4xf32, #tpu.memory_space<vmem>>, vector<1x8x4xf32>
    %44 = vector.shape_cast %43 : vector<1x8x4xf32> to vector<8x4xf32>
    %cst_37 = arith.constant dense<0.000000e+00> : vector<8x256xf32>
    %45 = tpu.matmul %44, %42, %cst_37 {dimension_numbers = #tpu.dot_dimension_numbers<[1], [0], [0], [1], [0, 0, 1, 1], [], []>} : vector<8x4xf32>, vector<4x256xf32>, vector<8x256xf32> -> vector<8x256xf32>
    %46 = arith.addf %39, %45 : vector<8x256xf32>
    %c4 = arith.constant 4 : index
    %c0_38 = arith.constant 0 : index
    %c0_39 = arith.constant 0 : index
    %47 = vector.load %arg3[%c4, %c0_38, %c0_39] : memref<9x8x4xf32, #tpu.memory_space<vmem>>, vector<1x8x4xf32>
    %48 = vector.shape_cast %47 : vector<1x8x4xf32> to vector<8x4xf32>
    %cst_40 = arith.constant dense<0.000000e+00> : vector<8x256xf32>
    %49 = tpu.matmul %48, %17, %cst_40 {dimension_numbers = #tpu.dot_dimension_numbers<[1], [0], [0], [1], [0, 0, 1, 1], [], []>} : vector<8x4xf32>, vector<4x256xf32>, vector<8x256xf32> -> vector<8x256xf32>
    %50 = arith.addf %46, %49 : vector<8x256xf32>
    %c255_i32 = arith.constant 255 : i32
    %51 = tpu.dynamic_rotate %17 by %c255_i32 dim 1 : vector<4x256xf32>, i32 -> vector<4x256xf32>
    %52 = vector.broadcast %8 : vector<1x256xf32> to vector<4x256xf32>
    %53 = arith.mulf %51, %52 : vector<4x256xf32>
    %c5_41 = arith.constant 5 : index
    %c0_42 = arith.constant 0 : index
    %c0_43 = arith.constant 0 : index
    %54 = vector.load %arg3[%c5_41, %c0_42, %c0_43] : memref<9x8x4xf32, #tpu.memory_space<vmem>>, vector<1x8x4xf32>
    %55 = vector.shape_cast %54 : vector<1x8x4xf32> to vector<8x4xf32>
    %cst_44 = arith.constant dense<0.000000e+00> : vector<8x256xf32>
    %56 = tpu.matmul %55, %53, %cst_44 {dimension_numbers = #tpu.dot_dimension_numbers<[1], [0], [0], [1], [0, 0, 1, 1], [], []>} : vector<8x4xf32>, vector<4x256xf32>, vector<8x256xf32> -> vector<8x256xf32>
    %57 = arith.addf %50, %56 : vector<8x256xf32>
    %c241_i32 = arith.constant 241 : i32
    %58 = tpu.dynamic_rotate %17 by %c241_i32 dim 1 : vector<4x256xf32>, i32 -> vector<4x256xf32>
    %59 = vector.broadcast %11 : vector<1x256xf32> to vector<4x256xf32>
    %60 = arith.mulf %58, %59 : vector<4x256xf32>
    %c6 = arith.constant 6 : index
    %c0_45 = arith.constant 0 : index
    %c0_46 = arith.constant 0 : index
    %61 = vector.load %arg3[%c6, %c0_45, %c0_46] : memref<9x8x4xf32, #tpu.memory_space<vmem>>, vector<1x8x4xf32>
    %62 = vector.shape_cast %61 : vector<1x8x4xf32> to vector<8x4xf32>
    %cst_47 = arith.constant dense<0.000000e+00> : vector<8x256xf32>
    %63 = tpu.matmul %62, %60, %cst_47 {dimension_numbers = #tpu.dot_dimension_numbers<[1], [0], [0], [1], [0, 0, 1, 1], [], []>} : vector<8x4xf32>, vector<4x256xf32>, vector<8x256xf32> -> vector<8x256xf32>
    %64 = arith.addf %57, %63 : vector<8x256xf32>
    %c240_i32 = arith.constant 240 : i32
    %65 = tpu.dynamic_rotate %17 by %c240_i32 dim 1 : vector<4x256xf32>, i32 -> vector<4x256xf32>
    %66 = vector.broadcast %12 : vector<1x256xf32> to vector<4x256xf32>
    %67 = arith.mulf %65, %66 : vector<4x256xf32>
    %c7 = arith.constant 7 : index
    %c0_48 = arith.constant 0 : index
    %c0_49 = arith.constant 0 : index
    %68 = vector.load %arg3[%c7, %c0_48, %c0_49] : memref<9x8x4xf32, #tpu.memory_space<vmem>>, vector<1x8x4xf32>
    %69 = vector.shape_cast %68 : vector<1x8x4xf32> to vector<8x4xf32>
    %cst_50 = arith.constant dense<0.000000e+00> : vector<8x256xf32>
    %70 = tpu.matmul %69, %67, %cst_50 {dimension_numbers = #tpu.dot_dimension_numbers<[1], [0], [0], [1], [0, 0, 1, 1], [], []>} : vector<8x4xf32>, vector<4x256xf32>, vector<8x256xf32> -> vector<8x256xf32>
    %71 = arith.addf %64, %70 : vector<8x256xf32>
    %c239_i32 = arith.constant 239 : i32
    %72 = tpu.dynamic_rotate %17 by %c239_i32 dim 1 : vector<4x256xf32>, i32 -> vector<4x256xf32>
    %73 = vector.broadcast %15 : vector<1x256xf32> to vector<4x256xf32>
    %74 = arith.mulf %72, %73 : vector<4x256xf32>
    %c8 = arith.constant 8 : index
    %c0_51 = arith.constant 0 : index
    %c0_52 = arith.constant 0 : index
    %75 = vector.load %arg3[%c8, %c0_51, %c0_52] : memref<9x8x4xf32, #tpu.memory_space<vmem>>, vector<1x8x4xf32>
    %76 = vector.shape_cast %75 : vector<1x8x4xf32> to vector<8x4xf32>
    %cst_53 = arith.constant dense<0.000000e+00> : vector<8x256xf32>
    %77 = tpu.matmul %76, %74, %cst_53 {dimension_numbers = #tpu.dot_dimension_numbers<[1], [0], [0], [1], [0, 0, 1, 1], [], []>} : vector<8x4xf32>, vector<4x256xf32>, vector<8x256xf32> -> vector<8x256xf32>
    %78 = arith.addf %71, %77 : vector<8x256xf32>
    %c0_54 = arith.constant 0 : index
    %c0_55 = arith.constant 0 : index
    %79 = vector.load %arg4[%c0_54, %c0_55] : memref<8x1xf32, #tpu.memory_space<vmem>>, vector<8x1xf32>
    %80 = vector.broadcast %79 : vector<8x1xf32> to vector<8x256xf32>
    %81 = arith.addf %78, %80 : vector<8x256xf32>
    %cst_56 = arith.constant 0.000000e+00 : f32
    %82 = vector.broadcast %cst_56 : f32 to vector<8x256xf32>
    %83 = arith.maximumf %81, %82 : vector<8x256xf32>
    %cst_57 = arith.constant 0.000000e+00 : f32
    %84 = vector.broadcast %cst_57 : f32 to vector<8x256xf32>
    %c17_i32_58 = arith.constant 17 : i32
    %85 = tpu.dynamic_rotate %83 by %c17_i32_58 dim 1 : vector<8x256xf32>, i32 -> vector<8x256xf32>
    %86 = vector.broadcast %2 : vector<1x256xf32> to vector<8x256xf32>
    %87 = arith.mulf %85, %86 : vector<8x256xf32>
    %c0_59 = arith.constant 0 : index
    %c0_60 = arith.constant 0 : index
    %c0_61 = arith.constant 0 : index
    %88 = vector.load %arg5[%c0_59, %c0_60, %c0_61] : memref<9x8x8xf32, #tpu.memory_space<vmem>>, vector<1x8x8xf32>
    %89 = vector.shape_cast %88 : vector<1x8x8xf32> to vector<8x8xf32>
    %cst_62 = arith.constant dense<0.000000e+00> : vector<8x256xf32>
    %90 = tpu.matmul %89, %87, %cst_62 {dimension_numbers = #tpu.dot_dimension_numbers<[1], [0], [0], [1], [0, 0, 1, 1], [], []>} : vector<8x8xf32>, vector<8x256xf32>, vector<8x256xf32> -> vector<8x256xf32>
    %91 = arith.addf %84, %90 : vector<8x256xf32>
    %c16_i32_63 = arith.constant 16 : i32
    %92 = tpu.dynamic_rotate %83 by %c16_i32_63 dim 1 : vector<8x256xf32>, i32 -> vector<8x256xf32>
    %93 = vector.broadcast %3 : vector<1x256xf32> to vector<8x256xf32>
    %94 = arith.mulf %92, %93 : vector<8x256xf32>
    %c1_64 = arith.constant 1 : index
    %c0_65 = arith.constant 0 : index
    %c0_66 = arith.constant 0 : index
    %95 = vector.load %arg5[%c1_64, %c0_65, %c0_66] : memref<9x8x8xf32, #tpu.memory_space<vmem>>, vector<1x8x8xf32>
    %96 = vector.shape_cast %95 : vector<1x8x8xf32> to vector<8x8xf32>
    %cst_67 = arith.constant dense<0.000000e+00> : vector<8x256xf32>
    %97 = tpu.matmul %96, %94, %cst_67 {dimension_numbers = #tpu.dot_dimension_numbers<[1], [0], [0], [1], [0, 0, 1, 1], [], []>} : vector<8x8xf32>, vector<8x256xf32>, vector<8x256xf32> -> vector<8x256xf32>
    %98 = arith.addf %91, %97 : vector<8x256xf32>
    %c15_i32_68 = arith.constant 15 : i32
    %99 = tpu.dynamic_rotate %83 by %c15_i32_68 dim 1 : vector<8x256xf32>, i32 -> vector<8x256xf32>
    %100 = vector.broadcast %6 : vector<1x256xf32> to vector<8x256xf32>
    %101 = arith.mulf %99, %100 : vector<8x256xf32>
    %c2_69 = arith.constant 2 : index
    %c0_70 = arith.constant 0 : index
    %c0_71 = arith.constant 0 : index
    %102 = vector.load %arg5[%c2_69, %c0_70, %c0_71] : memref<9x8x8xf32, #tpu.memory_space<vmem>>, vector<1x8x8xf32>
    %103 = vector.shape_cast %102 : vector<1x8x8xf32> to vector<8x8xf32>
    %cst_72 = arith.constant dense<0.000000e+00> : vector<8x256xf32>
    %104 = tpu.matmul %103, %101, %cst_72 {dimension_numbers = #tpu.dot_dimension_numbers<[1], [0], [0], [1], [0, 0, 1, 1], [], []>} : vector<8x8xf32>, vector<8x256xf32>, vector<8x256xf32> -> vector<8x256xf32>
    %105 = arith.addf %98, %104 : vector<8x256xf32>
    %c1_i32_73 = arith.constant 1 : i32
    %106 = tpu.dynamic_rotate %83 by %c1_i32_73 dim 1 : vector<8x256xf32>, i32 -> vector<8x256xf32>
    %107 = vector.broadcast %7 : vector<1x256xf32> to vector<8x256xf32>
    %108 = arith.mulf %106, %107 : vector<8x256xf32>
    %c3_74 = arith.constant 3 : index
    %c0_75 = arith.constant 0 : index
    %c0_76 = arith.constant 0 : index
    %109 = vector.load %arg5[%c3_74, %c0_75, %c0_76] : memref<9x8x8xf32, #tpu.memory_space<vmem>>, vector<1x8x8xf32>
    %110 = vector.shape_cast %109 : vector<1x8x8xf32> to vector<8x8xf32>
    %cst_77 = arith.constant dense<0.000000e+00> : vector<8x256xf32>
    %111 = tpu.matmul %110, %108, %cst_77 {dimension_numbers = #tpu.dot_dimension_numbers<[1], [0], [0], [1], [0, 0, 1, 1], [], []>} : vector<8x8xf32>, vector<8x256xf32>, vector<8x256xf32> -> vector<8x256xf32>
    %112 = arith.addf %105, %111 : vector<8x256xf32>
    %c4_78 = arith.constant 4 : index
    %c0_79 = arith.constant 0 : index
    %c0_80 = arith.constant 0 : index
    %113 = vector.load %arg5[%c4_78, %c0_79, %c0_80] : memref<9x8x8xf32, #tpu.memory_space<vmem>>, vector<1x8x8xf32>
    %114 = vector.shape_cast %113 : vector<1x8x8xf32> to vector<8x8xf32>
    %cst_81 = arith.constant dense<0.000000e+00> : vector<8x256xf32>
    %115 = tpu.matmul %114, %83, %cst_81 {dimension_numbers = #tpu.dot_dimension_numbers<[1], [0], [0], [1], [0, 0, 1, 1], [], []>} : vector<8x8xf32>, vector<8x256xf32>, vector<8x256xf32> -> vector<8x256xf32>
    %116 = arith.addf %112, %115 : vector<8x256xf32>
    %c255_i32_82 = arith.constant 255 : i32
    %117 = tpu.dynamic_rotate %83 by %c255_i32_82 dim 1 : vector<8x256xf32>, i32 -> vector<8x256xf32>
    %118 = vector.broadcast %8 : vector<1x256xf32> to vector<8x256xf32>
    %119 = arith.mulf %117, %118 : vector<8x256xf32>
    %c5_83 = arith.constant 5 : index
    %c0_84 = arith.constant 0 : index
    %c0_85 = arith.constant 0 : index
    %120 = vector.load %arg5[%c5_83, %c0_84, %c0_85] : memref<9x8x8xf32, #tpu.memory_space<vmem>>, vector<1x8x8xf32>
    %121 = vector.shape_cast %120 : vector<1x8x8xf32> to vector<8x8xf32>
    %cst_86 = arith.constant dense<0.000000e+00> : vector<8x256xf32>
    %122 = tpu.matmul %121, %119, %cst_86 {dimension_numbers = #tpu.dot_dimension_numbers<[1], [0], [0], [1], [0, 0, 1, 1], [], []>} : vector<8x8xf32>, vector<8x256xf32>, vector<8x256xf32> -> vector<8x256xf32>
    %123 = arith.addf %116, %122 : vector<8x256xf32>
    %c241_i32_87 = arith.constant 241 : i32
    %124 = tpu.dynamic_rotate %83 by %c241_i32_87 dim 1 : vector<8x256xf32>, i32 -> vector<8x256xf32>
    %125 = vector.broadcast %11 : vector<1x256xf32> to vector<8x256xf32>
    %126 = arith.mulf %124, %125 : vector<8x256xf32>
    %c6_88 = arith.constant 6 : index
    %c0_89 = arith.constant 0 : index
    %c0_90 = arith.constant 0 : index
    %127 = vector.load %arg5[%c6_88, %c0_89, %c0_90] : memref<9x8x8xf32, #tpu.memory_space<vmem>>, vector<1x8x8xf32>
    %128 = vector.shape_cast %127 : vector<1x8x8xf32> to vector<8x8xf32>
    %cst_91 = arith.constant dense<0.000000e+00> : vector<8x256xf32>
    %129 = tpu.matmul %128, %126, %cst_91 {dimension_numbers = #tpu.dot_dimension_numbers<[1], [0], [0], [1], [0, 0, 1, 1], [], []>} : vector<8x8xf32>, vector<8x256xf32>, vector<8x256xf32> -> vector<8x256xf32>
    %130 = arith.addf %123, %129 : vector<8x256xf32>
    %c240_i32_92 = arith.constant 240 : i32
    %131 = tpu.dynamic_rotate %83 by %c240_i32_92 dim 1 : vector<8x256xf32>, i32 -> vector<8x256xf32>
    %132 = vector.broadcast %12 : vector<1x256xf32> to vector<8x256xf32>
    %133 = arith.mulf %131, %132 : vector<8x256xf32>
    %c7_93 = arith.constant 7 : index
    %c0_94 = arith.constant 0 : index
    %c0_95 = arith.constant 0 : index
    %134 = vector.load %arg5[%c7_93, %c0_94, %c0_95] : memref<9x8x8xf32, #tpu.memory_space<vmem>>, vector<1x8x8xf32>
    %135 = vector.shape_cast %134 : vector<1x8x8xf32> to vector<8x8xf32>
    %cst_96 = arith.constant dense<0.000000e+00> : vector<8x256xf32>
    %136 = tpu.matmul %135, %133, %cst_96 {dimension_numbers = #tpu.dot_dimension_numbers<[1], [0], [0], [1], [0, 0, 1, 1], [], []>} : vector<8x8xf32>, vector<8x256xf32>, vector<8x256xf32> -> vector<8x256xf32>
    %137 = arith.addf %130, %136 : vector<8x256xf32>
    %c239_i32_97 = arith.constant 239 : i32
    %138 = tpu.dynamic_rotate %83 by %c239_i32_97 dim 1 : vector<8x256xf32>, i32 -> vector<8x256xf32>
    %139 = vector.broadcast %15 : vector<1x256xf32> to vector<8x256xf32>
    %140 = arith.mulf %138, %139 : vector<8x256xf32>
    %c8_98 = arith.constant 8 : index
    %c0_99 = arith.constant 0 : index
    %c0_100 = arith.constant 0 : index
    %141 = vector.load %arg5[%c8_98, %c0_99, %c0_100] : memref<9x8x8xf32, #tpu.memory_space<vmem>>, vector<1x8x8xf32>
    %142 = vector.shape_cast %141 : vector<1x8x8xf32> to vector<8x8xf32>
    %cst_101 = arith.constant dense<0.000000e+00> : vector<8x256xf32>
    %143 = tpu.matmul %142, %140, %cst_101 {dimension_numbers = #tpu.dot_dimension_numbers<[1], [0], [0], [1], [0, 0, 1, 1], [], []>} : vector<8x8xf32>, vector<8x256xf32>, vector<8x256xf32> -> vector<8x256xf32>
    %144 = arith.addf %137, %143 : vector<8x256xf32>
    %c0_102 = arith.constant 0 : index
    %c0_103 = arith.constant 0 : index
    %145 = vector.load %arg6[%c0_102, %c0_103] : memref<8x1xf32, #tpu.memory_space<vmem>>, vector<8x1xf32>
    %146 = vector.broadcast %145 : vector<8x1xf32> to vector<8x256xf32>
    %147 = arith.addf %144, %146 : vector<8x256xf32>
    %cst_104 = arith.constant 0.000000e+00 : f32
    %148 = vector.broadcast %cst_104 : f32 to vector<8x256xf32>
    %149 = arith.maximumf %147, %148 : vector<8x256xf32>
    %c0_105 = arith.constant 0 : index
    %c0_106 = arith.constant 0 : index
    %c0_107 = arith.constant 0 : index
    %150 = vector.load %arg7[%c0_105, %c0_106, %c0_107] : memref<2x8x256xf32, #tpu.memory_space<vmem>>, vector<1x8x256xf32>
    %151 = vector.shape_cast %150 : vector<1x8x256xf32> to vector<8x256xf32>
    %152 = vector.shape_cast %149 : vector<8x256xf32> to vector<1x8x256xf32>
    tpu.vector_store %arg7[%c0_105, %c0_106, %c0_107], %152 {strides = array<i32>} : memref<2x8x256xf32, #tpu.memory_space<vmem>>, vector<1x8x256xf32>,
    %c1_108 = arith.constant 1 : index
    %c0_109 = arith.constant 0 : index
    %c0_110 = arith.constant 0 : index
    %153 = vector.load %arg1[%c1_108, %c0_109, %c0_110] : memref<2x4x256xf32, #tpu.memory_space<vmem>>, vector<1x4x256xf32>
    %154 = vector.shape_cast %153 : vector<1x4x256xf32> to vector<4x256xf32>
    %cst_111 = arith.constant 0.000000e+00 : f32
    %155 = vector.broadcast %cst_111 : f32 to vector<8x256xf32>
    %c17_i32_112 = arith.constant 17 : i32
    %156 = tpu.dynamic_rotate %154 by %c17_i32_112 dim 1 : vector<4x256xf32>, i32 -> vector<4x256xf32>
    %157 = vector.broadcast %2 : vector<1x256xf32> to vector<4x256xf32>
    %158 = arith.mulf %156, %157 : vector<4x256xf32>
    %c0_113 = arith.constant 0 : index
    %c0_114 = arith.constant 0 : index
    %c0_115 = arith.constant 0 : index
    %159 = vector.load %arg3[%c0_113, %c0_114, %c0_115] : memref<9x8x4xf32, #tpu.memory_space<vmem>>, vector<1x8x4xf32>
    %160 = vector.shape_cast %159 : vector<1x8x4xf32> to vector<8x4xf32>
    %cst_116 = arith.constant dense<0.000000e+00> : vector<8x256xf32>
    %161 = tpu.matmul %160, %158, %cst_116 {dimension_numbers = #tpu.dot_dimension_numbers<[1], [0], [0], [1], [0, 0, 1, 1], [], []>} : vector<8x4xf32>, vector<4x256xf32>, vector<8x256xf32> -> vector<8x256xf32>
    %162 = arith.addf %155, %161 : vector<8x256xf32>
    %c16_i32_117 = arith.constant 16 : i32
    %163 = tpu.dynamic_rotate %154 by %c16_i32_117 dim 1 : vector<4x256xf32>, i32 -> vector<4x256xf32>
    %164 = vector.broadcast %3 : vector<1x256xf32> to vector<4x256xf32>
    %165 = arith.mulf %163, %164 : vector<4x256xf32>
    %c1_118 = arith.constant 1 : index
    %c0_119 = arith.constant 0 : index
    %c0_120 = arith.constant 0 : index
    %166 = vector.load %arg3[%c1_118, %c0_119, %c0_120] : memref<9x8x4xf32, #tpu.memory_space<vmem>>, vector<1x8x4xf32>
    %167 = vector.shape_cast %166 : vector<1x8x4xf32> to vector<8x4xf32>
    %cst_121 = arith.constant dense<0.000000e+00> : vector<8x256xf32>
    %168 = tpu.matmul %167, %165, %cst_121 {dimension_numbers = #tpu.dot_dimension_numbers<[1], [0], [0], [1], [0, 0, 1, 1], [], []>} : vector<8x4xf32>, vector<4x256xf32>, vector<8x256xf32> -> vector<8x256xf32>
    %169 = arith.addf %162, %168 : vector<8x256xf32>
    %c15_i32_122 = arith.constant 15 : i32
    %170 = tpu.dynamic_rotate %154 by %c15_i32_122 dim 1 : vector<4x256xf32>, i32 -> vector<4x256xf32>
    %171 = vector.broadcast %6 : vector<1x256xf32> to vector<4x256xf32>
    %172 = arith.mulf %170, %171 : vector<4x256xf32>
    %c2_123 = arith.constant 2 : index
    %c0_124 = arith.constant 0 : index
    %c0_125 = arith.constant 0 : index
    %173 = vector.load %arg3[%c2_123, %c0_124, %c0_125] : memref<9x8x4xf32, #tpu.memory_space<vmem>>, vector<1x8x4xf32>
    %174 = vector.shape_cast %173 : vector<1x8x4xf32> to vector<8x4xf32>
    %cst_126 = arith.constant dense<0.000000e+00> : vector<8x256xf32>
    %175 = tpu.matmul %174, %172, %cst_126 {dimension_numbers = #tpu.dot_dimension_numbers<[1], [0], [0], [1], [0, 0, 1, 1], [], []>} : vector<8x4xf32>, vector<4x256xf32>, vector<8x256xf32> -> vector<8x256xf32>
    %176 = arith.addf %169, %175 : vector<8x256xf32>
    %c1_i32_127 = arith.constant 1 : i32
    %177 = tpu.dynamic_rotate %154 by %c1_i32_127 dim 1 : vector<4x256xf32>, i32 -> vector<4x256xf32>
    %178 = vector.broadcast %7 : vector<1x256xf32> to vector<4x256xf32>
    %179 = arith.mulf %177, %178 : vector<4x256xf32>
    %c3_128 = arith.constant 3 : index
    %c0_129 = arith.constant 0 : index
    %c0_130 = arith.constant 0 : index
    %180 = vector.load %arg3[%c3_128, %c0_129, %c0_130] : memref<9x8x4xf32, #tpu.memory_space<vmem>>, vector<1x8x4xf32>
    %181 = vector.shape_cast %180 : vector<1x8x4xf32> to vector<8x4xf32>
    %cst_131 = arith.constant dense<0.000000e+00> : vector<8x256xf32>
    %182 = tpu.matmul %181, %179, %cst_131 {dimension_numbers = #tpu.dot_dimension_numbers<[1], [0], [0], [1], [0, 0, 1, 1], [], []>} : vector<8x4xf32>, vector<4x256xf32>, vector<8x256xf32> -> vector<8x256xf32>
    %183 = arith.addf %176, %182 : vector<8x256xf32>
    %c4_132 = arith.constant 4 : index
    %c0_133 = arith.constant 0 : index
    %c0_134 = arith.constant 0 : index
    %184 = vector.load %arg3[%c4_132, %c0_133, %c0_134] : memref<9x8x4xf32, #tpu.memory_space<vmem>>, vector<1x8x4xf32>
    %185 = vector.shape_cast %184 : vector<1x8x4xf32> to vector<8x4xf32>
    %cst_135 = arith.constant dense<0.000000e+00> : vector<8x256xf32>
    %186 = tpu.matmul %185, %154, %cst_135 {dimension_numbers = #tpu.dot_dimension_numbers<[1], [0], [0], [1], [0, 0, 1, 1], [], []>} : vector<8x4xf32>, vector<4x256xf32>, vector<8x256xf32> -> vector<8x256xf32>
    %187 = arith.addf %183, %186 : vector<8x256xf32>
    %c255_i32_136 = arith.constant 255 : i32
    %188 = tpu.dynamic_rotate %154 by %c255_i32_136 dim 1 : vector<4x256xf32>, i32 -> vector<4x256xf32>
    %189 = vector.broadcast %8 : vector<1x256xf32> to vector<4x256xf32>
    %190 = arith.mulf %188, %189 : vector<4x256xf32>
    %c5_137 = arith.constant 5 : index
    %c0_138 = arith.constant 0 : index
    %c0_139 = arith.constant 0 : index
    %191 = vector.load %arg3[%c5_137, %c0_138, %c0_139] : memref<9x8x4xf32, #tpu.memory_space<vmem>>, vector<1x8x4xf32>
    %192 = vector.shape_cast %191 : vector<1x8x4xf32> to vector<8x4xf32>
    %cst_140 = arith.constant dense<0.000000e+00> : vector<8x256xf32>
    %193 = tpu.matmul %192, %190, %cst_140 {dimension_numbers = #tpu.dot_dimension_numbers<[1], [0], [0], [1], [0, 0, 1, 1], [], []>} : vector<8x4xf32>, vector<4x256xf32>, vector<8x256xf32> -> vector<8x256xf32>
    %194 = arith.addf %187, %193 : vector<8x256xf32>
    %c241_i32_141 = arith.constant 241 : i32
    %195 = tpu.dynamic_rotate %154 by %c241_i32_141 dim 1 : vector<4x256xf32>, i32 -> vector<4x256xf32>
    %196 = vector.broadcast %11 : vector<1x256xf32> to vector<4x256xf32>
    %197 = arith.mulf %195, %196 : vector<4x256xf32>
    %c6_142 = arith.constant 6 : index
    %c0_143 = arith.constant 0 : index
    %c0_144 = arith.constant 0 : index
    %198 = vector.load %arg3[%c6_142, %c0_143, %c0_144] : memref<9x8x4xf32, #tpu.memory_space<vmem>>, vector<1x8x4xf32>
    %199 = vector.shape_cast %198 : vector<1x8x4xf32> to vector<8x4xf32>
    %cst_145 = arith.constant dense<0.000000e+00> : vector<8x256xf32>
    %200 = tpu.matmul %199, %197, %cst_145 {dimension_numbers = #tpu.dot_dimension_numbers<[1], [0], [0], [1], [0, 0, 1, 1], [], []>} : vector<8x4xf32>, vector<4x256xf32>, vector<8x256xf32> -> vector<8x256xf32>
    %201 = arith.addf %194, %200 : vector<8x256xf32>
    %c240_i32_146 = arith.constant 240 : i32
    %202 = tpu.dynamic_rotate %154 by %c240_i32_146 dim 1 : vector<4x256xf32>, i32 -> vector<4x256xf32>
    %203 = vector.broadcast %12 : vector<1x256xf32> to vector<4x256xf32>
    %204 = arith.mulf %202, %203 : vector<4x256xf32>
    %c7_147 = arith.constant 7 : index
    %c0_148 = arith.constant 0 : index
    %c0_149 = arith.constant 0 : index
    %205 = vector.load %arg3[%c7_147, %c0_148, %c0_149] : memref<9x8x4xf32, #tpu.memory_space<vmem>>, vector<1x8x4xf32>
    %206 = vector.shape_cast %205 : vector<1x8x4xf32> to vector<8x4xf32>
    %cst_150 = arith.constant dense<0.000000e+00> : vector<8x256xf32>
    %207 = tpu.matmul %206, %204, %cst_150 {dimension_numbers = #tpu.dot_dimension_numbers<[1], [0], [0], [1], [0, 0, 1, 1], [], []>} : vector<8x4xf32>, vector<4x256xf32>, vector<8x256xf32> -> vector<8x256xf32>
    %208 = arith.addf %201, %207 : vector<8x256xf32>
    %c239_i32_151 = arith.constant 239 : i32
    %209 = tpu.dynamic_rotate %154 by %c239_i32_151 dim 1 : vector<4x256xf32>, i32 -> vector<4x256xf32>
    %210 = vector.broadcast %15 : vector<1x256xf32> to vector<4x256xf32>
    %211 = arith.mulf %209, %210 : vector<4x256xf32>
    %c8_152 = arith.constant 8 : index
    %c0_153 = arith.constant 0 : index
    %c0_154 = arith.constant 0 : index
    %212 = vector.load %arg3[%c8_152, %c0_153, %c0_154] : memref<9x8x4xf32, #tpu.memory_space<vmem>>, vector<1x8x4xf32>
    %213 = vector.shape_cast %212 : vector<1x8x4xf32> to vector<8x4xf32>
    %cst_155 = arith.constant dense<0.000000e+00> : vector<8x256xf32>
    %214 = tpu.matmul %213, %211, %cst_155 {dimension_numbers = #tpu.dot_dimension_numbers<[1], [0], [0], [1], [0, 0, 1, 1], [], []>} : vector<8x4xf32>, vector<4x256xf32>, vector<8x256xf32> -> vector<8x256xf32>
    %215 = arith.addf %208, %214 : vector<8x256xf32>
    %c0_156 = arith.constant 0 : index
    %c0_157 = arith.constant 0 : index
    %216 = vector.load %arg4[%c0_156, %c0_157] : memref<8x1xf32, #tpu.memory_space<vmem>>, vector<8x1xf32>
    %217 = vector.broadcast %216 : vector<8x1xf32> to vector<8x256xf32>
    %218 = arith.addf %215, %217 : vector<8x256xf32>
    %cst_158 = arith.constant 0.000000e+00 : f32
    %219 = vector.broadcast %cst_158 : f32 to vector<8x256xf32>
    %220 = arith.maximumf %218, %219 : vector<8x256xf32>
    %cst_159 = arith.constant 0.000000e+00 : f32
    %221 = vector.broadcast %cst_159 : f32 to vector<8x256xf32>
    %c17_i32_160 = arith.constant 17 : i32
    %222 = tpu.dynamic_rotate %220 by %c17_i32_160 dim 1 : vector<8x256xf32>, i32 -> vector<8x256xf32>
    %223 = vector.broadcast %2 : vector<1x256xf32> to vector<8x256xf32>
    %224 = arith.mulf %222, %223 : vector<8x256xf32>
    %c0_161 = arith.constant 0 : index
    %c0_162 = arith.constant 0 : index
    %c0_163 = arith.constant 0 : index
    %225 = vector.load %arg5[%c0_161, %c0_162, %c0_163] : memref<9x8x8xf32, #tpu.memory_space<vmem>>, vector<1x8x8xf32>
    %226 = vector.shape_cast %225 : vector<1x8x8xf32> to vector<8x8xf32>
    %cst_164 = arith.constant dense<0.000000e+00> : vector<8x256xf32>
    %227 = tpu.matmul %226, %224, %cst_164 {dimension_numbers = #tpu.dot_dimension_numbers<[1], [0], [0], [1], [0, 0, 1, 1], [], []>} : vector<8x8xf32>, vector<8x256xf32>, vector<8x256xf32> -> vector<8x256xf32>
    %228 = arith.addf %221, %227 : vector<8x256xf32>
    %c16_i32_165 = arith.constant 16 : i32
    %229 = tpu.dynamic_rotate %220 by %c16_i32_165 dim 1 : vector<8x256xf32>, i32 -> vector<8x256xf32>
    %230 = vector.broadcast %3 : vector<1x256xf32> to vector<8x256xf32>
    %231 = arith.mulf %229, %230 : vector<8x256xf32>
    %c1_166 = arith.constant 1 : index
    %c0_167 = arith.constant 0 : index
    %c0_168 = arith.constant 0 : index
    %232 = vector.load %arg5[%c1_166, %c0_167, %c0_168] : memref<9x8x8xf32, #tpu.memory_space<vmem>>, vector<1x8x8xf32>
    %233 = vector.shape_cast %232 : vector<1x8x8xf32> to vector<8x8xf32>
    %cst_169 = arith.constant dense<0.000000e+00> : vector<8x256xf32>
    %234 = tpu.matmul %233, %231, %cst_169 {dimension_numbers = #tpu.dot_dimension_numbers<[1], [0], [0], [1], [0, 0, 1, 1], [], []>} : vector<8x8xf32>, vector<8x256xf32>, vector<8x256xf32> -> vector<8x256xf32>
    %235 = arith.addf %228, %234 : vector<8x256xf32>
    %c15_i32_170 = arith.constant 15 : i32
    %236 = tpu.dynamic_rotate %220 by %c15_i32_170 dim 1 : vector<8x256xf32>, i32 -> vector<8x256xf32>
    %237 = vector.broadcast %6 : vector<1x256xf32> to vector<8x256xf32>
    %238 = arith.mulf %236, %237 : vector<8x256xf32>
    %c2_171 = arith.constant 2 : index
    %c0_172 = arith.constant 0 : index
    %c0_173 = arith.constant 0 : index
    %239 = vector.load %arg5[%c2_171, %c0_172, %c0_173] : memref<9x8x8xf32, #tpu.memory_space<vmem>>, vector<1x8x8xf32>
    %240 = vector.shape_cast %239 : vector<1x8x8xf32> to vector<8x8xf32>
    %cst_174 = arith.constant dense<0.000000e+00> : vector<8x256xf32>
    %241 = tpu.matmul %240, %238, %cst_174 {dimension_numbers = #tpu.dot_dimension_numbers<[1], [0], [0], [1], [0, 0, 1, 1], [], []>} : vector<8x8xf32>, vector<8x256xf32>, vector<8x256xf32> -> vector<8x256xf32>
    %242 = arith.addf %235, %241 : vector<8x256xf32>
    %c1_i32_175 = arith.constant 1 : i32
    %243 = tpu.dynamic_rotate %220 by %c1_i32_175 dim 1 : vector<8x256xf32>, i32 -> vector<8x256xf32>
    %244 = vector.broadcast %7 : vector<1x256xf32> to vector<8x256xf32>
    %245 = arith.mulf %243, %244 : vector<8x256xf32>
    %c3_176 = arith.constant 3 : index
    %c0_177 = arith.constant 0 : index
    %c0_178 = arith.constant 0 : index
    %246 = vector.load %arg5[%c3_176, %c0_177, %c0_178] : memref<9x8x8xf32, #tpu.memory_space<vmem>>, vector<1x8x8xf32>
    %247 = vector.shape_cast %246 : vector<1x8x8xf32> to vector<8x8xf32>
    %cst_179 = arith.constant dense<0.000000e+00> : vector<8x256xf32>
    %248 = tpu.matmul %247, %245, %cst_179 {dimension_numbers = #tpu.dot_dimension_numbers<[1], [0], [0], [1], [0, 0, 1, 1], [], []>} : vector<8x8xf32>, vector<8x256xf32>, vector<8x256xf32> -> vector<8x256xf32>
    %249 = arith.addf %242, %248 : vector<8x256xf32>
    %c4_180 = arith.constant 4 : index
    %c0_181 = arith.constant 0 : index
    %c0_182 = arith.constant 0 : index
    %250 = vector.load %arg5[%c4_180, %c0_181, %c0_182] : memref<9x8x8xf32, #tpu.memory_space<vmem>>, vector<1x8x8xf32>
    %251 = vector.shape_cast %250 : vector<1x8x8xf32> to vector<8x8xf32>
    %cst_183 = arith.constant dense<0.000000e+00> : vector<8x256xf32>
    %252 = tpu.matmul %251, %220, %cst_183 {dimension_numbers = #tpu.dot_dimension_numbers<[1], [0], [0], [1], [0, 0, 1, 1], [], []>} : vector<8x8xf32>, vector<8x256xf32>, vector<8x256xf32> -> vector<8x256xf32>
    %253 = arith.addf %249, %252 : vector<8x256xf32>
    %c255_i32_184 = arith.constant 255 : i32
    %254 = tpu.dynamic_rotate %220 by %c255_i32_184 dim 1 : vector<8x256xf32>, i32 -> vector<8x256xf32>
    %255 = vector.broadcast %8 : vector<1x256xf32> to vector<8x256xf32>
    %256 = arith.mulf %254, %255 : vector<8x256xf32>
    %c5_185 = arith.constant 5 : index
    %c0_186 = arith.constant 0 : index
    %c0_187 = arith.constant 0 : index
    %257 = vector.load %arg5[%c5_185, %c0_186, %c0_187] : memref<9x8x8xf32, #tpu.memory_space<vmem>>, vector<1x8x8xf32>
    %258 = vector.shape_cast %257 : vector<1x8x8xf32> to vector<8x8xf32>
    %cst_188 = arith.constant dense<0.000000e+00> : vector<8x256xf32>
    %259 = tpu.matmul %258, %256, %cst_188 {dimension_numbers = #tpu.dot_dimension_numbers<[1], [0], [0], [1], [0, 0, 1, 1], [], []>} : vector<8x8xf32>, vector<8x256xf32>, vector<8x256xf32> -> vector<8x256xf32>
    %260 = arith.addf %253, %259 : vector<8x256xf32>
    %c241_i32_189 = arith.constant 241 : i32
    %261 = tpu.dynamic_rotate %220 by %c241_i32_189 dim 1 : vector<8x256xf32>, i32 -> vector<8x256xf32>
    %262 = vector.broadcast %11 : vector<1x256xf32> to vector<8x256xf32>
    %263 = arith.mulf %261, %262 : vector<8x256xf32>
    %c6_190 = arith.constant 6 : index
    %c0_191 = arith.constant 0 : index
    %c0_192 = arith.constant 0 : index
    %264 = vector.load %arg5[%c6_190, %c0_191, %c0_192] : memref<9x8x8xf32, #tpu.memory_space<vmem>>, vector<1x8x8xf32>
    %265 = vector.shape_cast %264 : vector<1x8x8xf32> to vector<8x8xf32>
    %cst_193 = arith.constant dense<0.000000e+00> : vector<8x256xf32>
    %266 = tpu.matmul %265, %263, %cst_193 {dimension_numbers = #tpu.dot_dimension_numbers<[1], [0], [0], [1], [0, 0, 1, 1], [], []>} : vector<8x8xf32>, vector<8x256xf32>, vector<8x256xf32> -> vector<8x256xf32>
    %267 = arith.addf %260, %266 : vector<8x256xf32>
    %c240_i32_194 = arith.constant 240 : i32
    %268 = tpu.dynamic_rotate %220 by %c240_i32_194 dim 1 : vector<8x256xf32>, i32 -> vector<8x256xf32>
    %269 = vector.broadcast %12 : vector<1x256xf32> to vector<8x256xf32>
    %270 = arith.mulf %268, %269 : vector<8x256xf32>
    %c7_195 = arith.constant 7 : index
    %c0_196 = arith.constant 0 : index
    %c0_197 = arith.constant 0 : index
    %271 = vector.load %arg5[%c7_195, %c0_196, %c0_197] : memref<9x8x8xf32, #tpu.memory_space<vmem>>, vector<1x8x8xf32>
    %272 = vector.shape_cast %271 : vector<1x8x8xf32> to vector<8x8xf32>
    %cst_198 = arith.constant dense<0.000000e+00> : vector<8x256xf32>
    %273 = tpu.matmul %272, %270, %cst_198 {dimension_numbers = #tpu.dot_dimension_numbers<[1], [0], [0], [1], [0, 0, 1, 1], [], []>} : vector<8x8xf32>, vector<8x256xf32>, vector<8x256xf32> -> vector<8x256xf32>
    %274 = arith.addf %267, %273 : vector<8x256xf32>
    %c239_i32_199 = arith.constant 239 : i32
    %275 = tpu.dynamic_rotate %220 by %c239_i32_199 dim 1 : vector<8x256xf32>, i32 -> vector<8x256xf32>
    %276 = vector.broadcast %15 : vector<1x256xf32> to vector<8x256xf32>
    %277 = arith.mulf %275, %276 : vector<8x256xf32>
    %c8_200 = arith.constant 8 : index
    %c0_201 = arith.constant 0 : index
    %c0_202 = arith.constant 0 : index
    %278 = vector.load %arg5[%c8_200, %c0_201, %c0_202] : memref<9x8x8xf32, #tpu.memory_space<vmem>>, vector<1x8x8xf32>
    %279 = vector.shape_cast %278 : vector<1x8x8xf32> to vector<8x8xf32>
    %cst_203 = arith.constant dense<0.000000e+00> : vector<8x256xf32>
    %280 = tpu.matmul %279, %277, %cst_203 {dimension_numbers = #tpu.dot_dimension_numbers<[1], [0], [0], [1], [0, 0, 1, 1], [], []>} : vector<8x8xf32>, vector<8x256xf32>, vector<8x256xf32> -> vector<8x256xf32>
    %281 = arith.addf %274, %280 : vector<8x256xf32>
    %c0_204 = arith.constant 0 : index
    %c0_205 = arith.constant 0 : index
    %282 = vector.load %arg6[%c0_204, %c0_205] : memref<8x1xf32, #tpu.memory_space<vmem>>, vector<8x1xf32>
    %283 = vector.broadcast %282 : vector<8x1xf32> to vector<8x256xf32>
    %284 = arith.addf %281, %283 : vector<8x256xf32>
    %cst_206 = arith.constant 0.000000e+00 : f32
    %285 = vector.broadcast %cst_206 : f32 to vector<8x256xf32>
    %286 = arith.maximumf %284, %285 : vector<8x256xf32>
    %c1_207 = arith.constant 1 : index
    %c0_208 = arith.constant 0 : index
    %c0_209 = arith.constant 0 : index
    %287 = vector.load %arg7[%c1_207, %c0_208, %c0_209] : memref<2x8x256xf32, #tpu.memory_space<vmem>>, vector<1x8x256xf32>
    %288 = vector.shape_cast %287 : vector<1x8x256xf32> to vector<8x256xf32>
    %289 = vector.shape_cast %286 : vector<8x256xf32> to vector<1x8x256xf32>
    tpu.vector_store %arg7[%c1_207, %c0_208, %c0_209], %289 {strides = array<i32>} : memref<2x8x256xf32, #tpu.memory_space<vmem>>, vector<1x8x256xf32>,
    return
  }
  func.func @transform_0(%arg0: i32) -> (i32, i32, i32) {
    %c0_i32 = arith.constant 0 : i32
    %c0_i32_0 = arith.constant 0 : i32
    %c0_i32_1 = arith.constant 0 : i32
    return %arg0, %c0_i32, %c0_i32_0 : i32, i32, i32
  }
  func.func @transform_1(%arg0: i32) -> (i32, i32) {
    %c0_i32 = arith.constant 0 : i32
    %c0_i32_0 = arith.constant 0 : i32
    %c0_i32_1 = arith.constant 0 : i32
    return %c0_i32, %c0_i32_0 : i32, i32
  }
  func.func @transform_2(%arg0: i32) -> (i32, i32, i32) {
    %c0_i32 = arith.constant 0 : i32
    %c0_i32_0 = arith.constant 0 : i32
    %c0_i32_1 = arith.constant 0 : i32
    %c0_i32_2 = arith.constant 0 : i32
    return %c0_i32, %c0_i32_0, %c0_i32_1 : i32, i32, i32
  }
  func.func @transform_3(%arg0: i32) -> (i32, i32) {
    %c0_i32 = arith.constant 0 : i32
    %c0_i32_0 = arith.constant 0 : i32
    %c0_i32_1 = arith.constant 0 : i32
    return %c0_i32, %c0_i32_0 : i32, i32
  }
  func.func @transform_4(%arg0: i32) -> (i32, i32, i32) {
    %c0_i32 = arith.constant 0 : i32
    %c0_i32_0 = arith.constant 0 : i32
    %c0_i32_1 = arith.constant 0 : i32
    %c0_i32_2 = arith.constant 0 : i32
    return %c0_i32, %c0_i32_0, %c0_i32_1 : i32, i32, i32
  }
  func.func @transform_5(%arg0: i32) -> (i32, i32) {
    %c0_i32 = arith.constant 0 : i32
    %c0_i32_0 = arith.constant 0 : i32
    %c0_i32_1 = arith.constant 0 : i32
    return %c0_i32, %c0_i32_0 : i32, i32
  }
  func.func @transform_6(%arg0: i32) -> (i32, i32, i32) {
    %c0_i32 = arith.constant 0 : i32
    %c0_i32_0 = arith.constant 0 : i32
    %c0_i32_1 = arith.constant 0 : i32
    return %arg0, %c0_i32, %c0_i32_0 : i32, i32, i32
  }
}

</mosaic_0001>

<llo_original>
// kernel: conv_block_forward.1
$region0: #{conv_block_forward.1}
  #allocation0 [shape = 'u32[]', space=smem, size = 0x4, offset = 0x4, fixed_abs, tag = 'smem constant byte address 0x4 - core index']
  #allocation1 [shape = 'u32[144,128]{1,0:T(1,128)}', space=vmem, size = 0x12000, scoped, tag = 'internal scratch']
  %s0 = inlined_call_operand.vmem [shape: f32[2,4,256], index: 0, kind: input, shape index: {}]
  %s1 = inlined_call_operand.vmem [shape: f32[6,256], index: 1, kind: input, shape index: {}]
  %s2 = inlined_call_operand.vmem [shape: f32[9,8,4], index: 2, kind: input, shape index: {}]
  %s3 = inlined_call_operand.vmem [shape: f32[8,1], index: 3, kind: input, shape index: {}]
  %s4 = inlined_call_operand.vmem [shape: f32[9,8,8], index: 4, kind: input, shape index: {}]
  %s5 = inlined_call_operand.vmem [shape: f32[8,1], index: 5, kind: input, shape index: {}]
  %s6 = inlined_call_operand.vmem [shape: f32[2,8,256], index: 6, kind: output, shape index: {}]
  %s7 = sld [smem:[#allocation0]]
  $region34: #{conv_block_forward.1} parent=0
    _
  %s9 = ssub.s32 1, %s7
  %s10 = scalar_select 0, %s9, %s7
  // Predicated region
  $region2: #{conv_block_forward.1} parent=0 // pred_check
    _
  $region3: #{conv_block_forward.1} parent=0 // pred_check_branch
    %12 = sbr.rel (0) target = $region5
  $region4: #{conv_block_forward.1} parent=0 // pred_region
    _
  $region5: #{conv_block_forward.1} parent=0 // pred_fallthru
    _
  // Predicated region
  $region6: #{conv_block_forward.1} parent=0 // pred_check
    _
  $region7: #{conv_block_forward.1} parent=0 // pred_check_branch
    %14 = sbr.rel (0) target = $region9
  $region8: #{conv_block_forward.1} parent=0 // pred_region
    _
  $region9: #{conv_block_forward.1} parent=0 // pred_fallthru
    _
  // Predicated region
  $region10: #{conv_block_forward.1} parent=0 // pred_check
    _
  $region11: #{conv_block_forward.1} parent=0 // pred_check_branch
    %16 = sbr.rel (0) target = $region13
  $region12: #{conv_block_forward.1} parent=0 // pred_region
    _
  $region13: #{conv_block_forward.1} parent=0 // pred_fallthru
    _
  // Predicated region
  $region14: #{conv_block_forward.1} parent=0 // pred_check
    _
  $region15: #{conv_block_forward.1} parent=0 // pred_check_branch
    %18 = sbr.rel (0) target = $region17
  $region16: #{conv_block_forward.1} parent=0 // pred_region
    _
  $region17: #{conv_block_forward.1} parent=0 // pred_fallthru
    _
  // Predicated region
  $region18: #{conv_block_forward.1} parent=0 // pred_check
    _
  $region19: #{conv_block_forward.1} parent=0 // pred_check_branch
    %20 = sbr.rel (0) target = $region21
  $region20: #{conv_block_forward.1} parent=0 // pred_region
    _
  $region21: #{conv_block_forward.1} parent=0 // pred_fallthru
    _
  // Predicated region
  $region22: #{conv_block_forward.1} parent=0 // pred_check
    _
  $region23: #{conv_block_forward.1} parent=0 // pred_check_branch
    %22 = sbr.rel (0) target = $region25
  $region24: #{conv_block_forward.1} parent=0 // pred_region
    _
  $region25: #{conv_block_forward.1} parent=0 // pred_fallthru
    _
  %v23 = vld [vmem:[%s1] ss:$8 sm:$0x3]
  %s24 = scalar_lea.vmem %s1, 3
  %v25 = vld [vmem:[%s24] ss:$8 sm:$0x3]
  %v26 = vmul.f32 %v23, %v25
  %s27 = scalar_lea.vmem %s1, 5
  %v28 = vld [vmem:[%s27] ss:$8 sm:$0x3]
  %v29 = vmul.f32 %v23, %v28
  %s30 = scalar_lea.vmem %s1, 2
  %v31 = vld [vmem:[%s30] ss:$8 sm:$0x3]
  %v32 = vmul.f32 %v31, %v25
  %v33 = vmul.f32 %v31, %v28
  %v34 = vld [vmem:[%s0] sm:$0xff]
  %v36 = vcombine.high %v34, %v34
  %38 = vrot.lane.b32.xlu0 %v34, 17
  %v39 = vpop.permute.xlu0 %38
  %40 = vrot.lane.b32.xlu0 %v36, 17
  %v41 = vpop.permute.xlu0 %40
  %v42 = vlaneseq
  %v43 = vand.u32 %v42, 127
  %vm44 = vcmp.lt.s32.totalorder %v43, 17
  %v45 = vsel %vm44, %v39, %v41
  %v46 = vsel %vm44, %v41, %v39
  %v48 = vlaneseq
  %v49 = vshrl.u32 %v48, 7
  %v50 = vsub.s32 0, %v49
  %v51 = vrot.slane %v26, %v50
  %v52 = vlaneseq
  %v53 = vshrl.u32 %v52, 7
  %v54 = vsub.s32 1, %v53
  %v55 = vrot.slane %v26, %v54
  %v58 = vmul.f32 %v46, %v51
  %v59 = vmul.f32 %v45, %v55
  %v60 = vld [vmem:[%s2] sm:$0xff]
  %61 = vrot.lane.b32.xlu0 %v34, 16
  %v62 = vpop.permute.xlu0 %61
  %63 = vrot.lane.b32.xlu0 %v36, 16
  %v64 = vpop.permute.xlu0 %63
  %vm65 = vcmp.lt.s32.totalorder %v43, 16
  %v66 = vsel %vm65, %v62, %v64
  %v67 = vsel %vm65, %v64, %v62
  %v69 = vlaneseq
  %v70 = vshrl.u32 %v69, 7
  %v71 = vsub.s32 0, %v70
  %v72 = vrot.slane %v23, %v71
  %v73 = vlaneseq
  %v74 = vshrl.u32 %v73, 7
  %v75 = vsub.s32 1, %v74
  %v76 = vrot.slane %v23, %v75
  %v79 = vmul.f32 %v67, %v72
  %v80 = vmul.f32 %v66, %v76
  %s81 = scalar_lea.vmem %s2, 8
  %v82 = vld [vmem:[%s81] sm:$0xff]
  %vm83 = vcmask 31744
  %v85 = vsel %vm83, %v82, 0
  %vm87 = vcmask 1043456
  %v89 = vsel %vm87, %v79, 0
  %v92 = vsel %vm87, %v80, 0
  %94 = vmatprep.subr.mxu0 %v92
  %95 = vmatpush1.msra.mxu0 %v89
  %96 = vmatprep.subr.mxu0 0.0
  %97 = vmatpush1.msra.mxu0 0.0
  %98 = vmatprep.subr.mxu0 0.0
  %99 = vmatpush1.msra.mxu0 0.0
  %100 = vmatprep.subr.mxu0 0.0
  %101 = vmatpush1.msra.mxu0 0.0
  %102 = vmatprep.subr.mxu0 0.0
  %103 = vmatpush1.msra.mxu0 0.0
  %104 = vmatprep.subr.mxu0 0.0
  %105 = vmatpush1.msra.mxu0 0.0
  %106 = vmatprep.subr.mxu0 0.0
  %107 = vmatpush1.msra.mxu0 0.0
  %108 = vmatprep.subr.mxu0 0.0
  %109 = vmatpush1.msra.mxu0 0.0
  %110 = vmatprep.subr.mxu0 0.0
  %111 = vmatpush1.msra.mxu0 0.0
  %112 = vmatprep.subr.mxu0 0.0
  %113 = vmatpush1.msra.mxu0 0.0
  %114 = vmatprep.subr.mxu0 0.0
  %115 = vmatpush1.msra.mxu0 0.0
  %116 = vmatprep.subr.mxu0 0.0
  %117 = vmatpush1.msra.mxu0 0.0
  %118 = vmatprep.subr.mxu0 0.0
  %119 = vmatpush1.msra.mxu0 0.0
  %120 = vmatprep.subr.mxu0 0.0
  %121 = vmatpush1.msra.mxu0 0.0
  %122 = vmatprep.subr.mxu0 0.0
  %123 = vmatpush1.msra.mxu0 0.0
  %124 = vmatprep.subr.mxu0 0.0
  %125 = vmatpush1.msra.mxu0 0.0
  %126 = vmatprep.subr.mxu0 0.0
  %127 = vmatpush1.msra.mxu0 0.0
  %128 = vmatprep.subr.mxu0 0.0
  %129 = vmatpush1.msra.mxu0 0.0
  %130 = vmatprep.subr.mxu0 0.0
  %131 = vmatpush1.msra.mxu0 0.0
  %132 = vmatprep.subr.mxu0 0.0
  %133 = vmatpush1.msra.mxu0 0.0
  %134 = vmatprep.subr.mxu0 0.0
  %135 = vmatpush1.msra.mxu0 0.0
  %136 = vmatprep.subr.mxu0 0.0
  %137 = vmatpush1.msra.mxu0 0.0
  %138 = vmatprep.subr.mxu0 0.0
  %139 = vmatpush1.msra.mxu0 0.0
  %140 = vmatprep.subr.mxu0 0.0
  %141 = vmatpush1.msra.mxu0 0.0
  %142 = vmatprep.subr.mxu0 0.0
  %143 = vmatpush1.msra.mxu0 0.0
  %144 = vmatprep.subr.mxu0 0.0
  %145 = vmatpush1.msra.mxu0 0.0
  %146 = vmatprep.subr.mxu0 0.0
  %147 = vmatpush1.msra.mxu0 0.0
  %148 = vmatprep.subr.mxu0 0.0
  %149 = vmatpush1.msra.mxu0 0.0
  %150 = vmatprep.subr.mxu0 0.0
  %151 = vmatpush1.msra.mxu0 0.0
  %152 = vmatprep.subr.mxu0 0.0
  %153 = vmatpush1.msra.mxu0 0.0
  %154 = vmatprep.subr.mxu0 0.0
  %155 = vmatpush1.msra.mxu0 0.0
  %156 = vmatprep.subr.mxu0 0.0
  %157 = vmatpush1.msra.mxu0 0.0
  %158 = vmatprep.mubr.f32.mxu0 0.0
  %159 = vmatmul.mubr.f32.gmra.mrb[0].mxu0 %v85
  %v160 = vpop.f32.mrb[0].mxu0
  %v161 = vadd.f32 0.0, %v160
  %v162 = vpop.f32.mrb[0].mxu0
  %v163 = vadd.f32 0.0, %v162
  %164 = vdwg.mxu0
  %v166 = vsel %vm83, %v60, 0
  %v169 = vsel %vm87, %v58, 0
  %v172 = vsel %vm87, %v59, 0
  %174 = vmatprep.subr.mxu0 %v172
  %175 = vmatpush1.msra.mxu0 %v169
  %176 = vmatprep.subr.mxu0 0.0
  %177 = vmatpush1.msra.mxu0 0.0
  %178 = vmatprep.subr.mxu0 0.0
  %179 = vmatpush1.msra.mxu0 0.0
  %180 = vmatprep.subr.mxu0 0.0
  %181 = vmatpush1.msra.mxu0 0.0
  %182 = vmatprep.subr.mxu0 0.0
  %183 = vmatpush1.msra.mxu0 0.0
  %184 = vmatprep.subr.mxu0 0.0
  %185 = vmatpush1.msra.mxu0 0.0
  %186 = vmatprep.subr.mxu0 0.0
  %187 = vmatpush1.msra.mxu0 0.0
  %188 = vmatprep.subr.mxu0 0.0
  %189 = vmatpush1.msra.mxu0 0.0
  %190 = vmatprep.subr.mxu0 0.0
  %191 = vmatpush1.msra.mxu0 0.0
  %192 = vmatprep.subr.mxu0 0.0
  %193 = vmatpush1.msra.mxu0 0.0
  %194 = vmatprep.subr.mxu0 0.0
  %195 = vmatpush1.msra.mxu0 0.0
  %196 = vmatprep.subr.mxu0 0.0
  %197 = vmatpush1.msra.mxu0 0.0
  %198 = vmatprep.subr.mxu0 0.0
  %199 = vmatpush1.msra.mxu0 0.0
  %200 = vmatprep.subr.mxu0 0.0
  %201 = vmatpush1.msra.mxu0 0.0
  %202 = vmatprep.subr.mxu0 0.0
  %203 = vmatpush1.msra.mxu0 0.0
  %204 = vmatprep.subr.mxu0 0.0
  %205 = vmatpush1.msra.mxu0 0.0
  %206 = vmatprep.subr.mxu0 0.0
  %207 = vmatpush1.msra.mxu0 0.0
  %208 = vmatprep.subr.mxu0 0.0
  %209 = vmatpush1.msra.mxu0 0.0
  %210 = vmatprep.subr.mxu0 0.0
  %211 = vmatpush1.msra.mxu0 0.0
  %212 = vmatprep.subr.mxu0 0.0
  %213 = vmatpush1.msra.mxu0 0.0
  %214 = vmatprep.subr.mxu0 0.0
  %215 = vmatpush1.msra.mxu0 0.0
  %216 = vmatprep.subr.mxu0 0.0
  %217 = vmatpush1.msra.mxu0 0.0
  %218 = vmatprep.subr.mxu0 0.0
  %219 = vmatpush1.msra.mxu0 0.0
  %220 = vmatprep.subr.mxu0 0.0
  %221 = vmatpush1.msra.mxu0 0.0
  %222 = vmatprep.subr.mxu0 0.0
  %223 = vmatpush1.msra.mxu0 0.0
  %224 = vmatprep.subr.mxu0 0.0
  %225 = vmatpush1.msra.mxu0 0.0
  %226 = vmatprep.subr.mxu0 0.0
  %227 = vmatpush1.msra.mxu0 0.0
  %228 = vmatprep.subr.mxu0 0.0
  %229 = vmatpush1.msra.mxu0 0.0
  %230 = vmatprep.subr.mxu0 0.0
  %231 = vmatpush1.msra.mxu0 0.0
  %232 = vmatprep.subr.mxu0 0.0
  %233 = vmatpush1.msra.mxu0 0.0
  %234 = vmatprep.subr.mxu0 0.0
  %235 = vmatpush1.msra.mxu0 0.0
  %236 = vmatprep.subr.mxu0 0.0
  %237 = vmatpush1.msra.mxu0 0.0
  %238 = vmatprep.mubr.f32.mxu0 0.0
  %239 = vmatmul.mubr.f32.gmra.mrb[0].mxu0 %v166
  %v240 = vpop.f32.mrb[0].mxu0
  %v241 = vadd.f32 %v161, %v240
  %v242 = vpop.f32.mrb[0].mxu0
  %v243 = vadd.f32 %v163, %v242
  %244 = vdwg.mxu0
  %245 = vrot.lane.b32.xlu0 %v34, 15
  %v246 = vpop.permute.xlu0 %245
  %247 = vrot.lane.b32.xlu0 %v36, 15
  %v248 = vpop.permute.xlu0 %247
  %vm249 = vcmp.lt.s32.totalorder %v43, 15
  %v250 = vsel %vm249, %v246, %v248
  %v251 = vsel %vm249, %v248, %v246
  %v253 = vlaneseq
  %v254 = vshrl.u32 %v253, 7
  %v255 = vsub.s32 0, %v254
  %v256 = vrot.slane %v29, %v255
  %v257 = vlaneseq
  %v258 = vshrl.u32 %v257, 7
  %v259 = vsub.s32 1, %v258
  %v260 = vrot.slane %v29, %v259
  %v263 = vmul.f32 %v251, %v256
  %v264 = vmul.f32 %v250, %v260
  %s265 = scalar_lea.vmem %s2, 16
  %v266 = vld [vmem:[%s265] sm:$0xff]
  %v268 = vsel %vm83, %v266, 0
  %v271 = vsel %vm87, %v263, 0
  %v274 = vsel %vm87, %v264, 0
  %276 = vmatprep.subr.mxu0 %v274
  %277 = vmatpush1.msra.mxu0 %v271
  %278 = vmatprep.subr.mxu0 0.0
  %279 = vmatpush1.msra.mxu0 0.0
  %280 = vmatprep.subr.mxu0 0.0
  %281 = vmatpush1.msra.mxu0 0.0
  %282 = vmatprep.subr.mxu0 0.0
  %283 = vmatpush1.msra.mxu0 0.0
  %284 = vmatprep.subr.mxu0 0.0
  %285 = vmatpush1.msra.mxu0 0.0
  %286 = vmatprep.subr.mxu0 0.0
  %287 = vmatpush1.msra.mxu0 0.0
  %288 = vmatprep.subr.mxu0 0.0
  %289 = vmatpush1.msra.mxu0 0.0
  %290 = vmatprep.subr.mxu0 0.0
  %291 = vmatpush1.msra.mxu0 0.0
  %292 = vmatprep.subr.mxu0 0.0
  %293 = vmatpush1.msra.mxu0 0.0
  %294 = vmatprep.subr.mxu0 0.0
  %295 = vmatpush1.msra.mxu0 0.0
  %296 = vmatprep.subr.mxu0 0.0
  %297 = vmatpush1.msra.mxu0 0.0
  %298 = vmatprep.subr.mxu0 0.0
  %299 = vmatpush1.msra.mxu0 0.0
  %300 = vmatprep.subr.mxu0 0.0
  %301 = vmatpush1.msra.mxu0 0.0
  %302 = vmatprep.subr.mxu0 0.0
  %303 = vmatpush1.msra.mxu0 0.0
  %304 = vmatprep.subr.mxu0 0.0
  %305 = vmatpush1.msra.mxu0 0.0
  %306 = vmatprep.subr.mxu0 0.0
  %307 = vmatpush1.msra.mxu0 0.0
  %308 = vmatprep.subr.mxu0 0.0
  %309 = vmatpush1.msra.mxu0 0.0
  %310 = vmatprep.subr.mxu0 0.0
  %311 = vmatpush1.msra.mxu0 0.0
  %312 = vmatprep.subr.mxu0 0.0
  %313 = vmatpush1.msra.mxu0 0.0
  %314 = vmatprep.subr.mxu0 0.0
  %315 = vmatpush1.msra.mxu0 0.0
  %316 = vmatprep.subr.mxu0 0.0
  %317 = vmatpush1.msra.mxu0 0.0
  %318 = vmatprep.subr.mxu0 0.0
  %319 = vmatpush1.msra.mxu0 0.0
  %320 = vmatprep.subr.mxu0 0.0
  %321 = vmatpush1.msra.mxu0 0.0
  %322 = vmatprep.subr.mxu0 0.0
  %323 = vmatpush1.msra.mxu0 0.0
  %324 = vmatprep.subr.mxu0 0.0
  %325 = vmatpush1.msra.mxu0 0.0
  %326 = vmatprep.subr.mxu0 0.0
  %327 = vmatpush1.msra.mxu0 0.0
  %328 = vmatprep.subr.mxu0 0.0
  %329 = vmatpush1.msra.mxu0 0.0
  %330 = vmatprep.subr.mxu0 0.0
  %331 = vmatpush1.msra.mxu0 0.0
  %332 = vmatprep.subr.mxu0 0.0
  %333 = vmatpush1.msra.mxu0 0.0
  %334 = vmatprep.subr.mxu0 0.0
  %335 = vmatpush1.msra.mxu0 0.0
  %336 = vmatprep.subr.mxu0 0.0
  %337 = vmatpush1.msra.mxu0 0.0
  %338 = vmatprep.subr.mxu0 0.0
  %339 = vmatpush1.msra.mxu0 0.0
  %340 = vmatprep.mubr.f32.mxu0 0.0
  %341 = vmatmul.mubr.f32.gmra.mrb[0].mxu0 %v268
  %v342 = vpop.f32.mrb[0].mxu0
  %v343 = vadd.f32 0.0, %v342
  %v344 = vpop.f32.mrb[0].mxu0
  %v345 = vadd.f32 0.0, %v344
  %346 = vdwg.mxu0
  %v347 = vadd.f32 %v241, %v343
  %v348 = vadd.f32 %v243, %v345
  %349 = vrot.lane.b32.xlu0 %v34, 1
  %v350 = vpop.permute.xlu0 %349
  %351 = vrot.lane.b32.xlu0 %v36, 1
  %v352 = vpop.permute.xlu0 %351
  %vm353 = vcmp.lt.s32.totalorder %v43, 1
  %v354 = vsel %vm353, %v350, %v352
  %v355 = vsel %vm353, %v352, %v350
  %v357 = vlaneseq
  %v358 = vshrl.u32 %v357, 7
  %v359 = vsub.s32 0, %v358
  %v360 = vrot.slane %v25, %v359
  %v361 = vlaneseq
  %v362 = vshrl.u32 %v361, 7
  %v363 = vsub.s32 1, %v362
  %v364 = vrot.slane %v25, %v363
  %v367 = vmul.f32 %v355, %v360
  %v368 = vmul.f32 %v354, %v364
  %s369 = scalar_lea.vmem %s2, 24
  %v370 = vld [vmem:[%s369] sm:$0xff]
  %v372 = vsel %vm83, %v370, 0
  %v375 = vsel %vm87, %v367, 0
  %v378 = vsel %vm87, %v368, 0
  %380 = vmatprep.subr.mxu0 %v378
  %381 = vmatpush1.msra.mxu0 %v375
  %382 = vmatprep.subr.mxu0 0.0
  %383 = vmatpush1.msra.mxu0 0.0
  %384 = vmatprep.subr.mxu0 0.0
  %385 = vmatpush1.msra.mxu0 0.0
  %386 = vmatprep.subr.mxu0 0.0
  %387 = vmatpush1.msra.mxu0 0.0
  %388 = vmatprep.subr.mxu0 0.0
  %389 = vmatpush1.msra.mxu0 0.0
  %390 = vmatprep.subr.mxu0 0.0
  %391 = vmatpush1.msra.mxu0 0.0
  %392 = vmatprep.subr.mxu0 0.0
  %393 = vmatpush1.msra.mxu0 0.0
  %394 = vmatprep.subr.mxu0 0.0
  %395 = vmatpush1.msra.mxu0 0.0
  %396 = vmatprep.subr.mxu0 0.0
  %397 = vmatpush1.msra.mxu0 0.0
  %398 = vmatprep.subr.mxu0 0.0
  %399 = vmatpush1.msra.mxu0 0.0
  %400 = vmatprep.subr.mxu0 0.0
  %401 = vmatpush1.msra.mxu0 0.0
  %402 = vmatprep.subr.mxu0 0.0
  %403 = vmatpush1.msra.mxu0 0.0
  %404 = vmatprep.subr.mxu0 0.0
  %405 = vmatpush1.msra.mxu0 0.0
  %406 = vmatprep.subr.mxu0 0.0
  %407 = vmatpush1.msra.mxu0 0.0
  %408 = vmatprep.subr.mxu0 0.0
  %409 = vmatpush1.msra.mxu0 0.0
  %410 = vmatprep.subr.mxu0 0.0
  %411 = vmatpush1.msra.mxu0 0.0
  %412 = vmatprep.subr.mxu0 0.0
  %413 = vmatpush1.msra.mxu0 0.0
  %414 = vmatprep.subr.mxu0 0.0
  %415 = vmatpush1.msra.mxu0 0.0
  %416 = vmatprep.subr.mxu0 0.0
  %417 = vmatpush1.msra.mxu0 0.0
  %418 = vmatprep.subr.mxu0 0.0
  %419 = vmatpush1.msra.mxu0 0.0
  %420 = vmatprep.subr.mxu0 0.0
  %421 = vmatpush1.msra.mxu0 0.0
  %422 = vmatprep.subr.mxu0 0.0
  %423 = vmatpush1.msra.mxu0 0.0
  %424 = vmatprep.subr.mxu0 0.0
  %425 = vmatpush1.msra.mxu0 0.0
  %426 = vmatprep.subr.mxu0 0.0
  %427 = vmatpush1.msra.mxu0 0.0
  %428 = vmatprep.subr.mxu0 0.0
  %429 = vmatpush1.msra.mxu0 0.0
  %430 = vmatprep.subr.mxu0 0.0
  %431 = vmatpush1.msra.mxu0 0.0
  %432 = vmatprep.subr.mxu0 0.0
  %433 = vmatpush1.msra.mxu0 0.0
  %434 = vmatprep.subr.mxu0 0.0
  %435 = vmatpush1.msra.mxu0 0.0
  %436 = vmatprep.subr.mxu0 0.0
  %437 = vmatpush1.msra.mxu0 0.0
  %438 = vmatprep.subr.mxu0 0.0
  %439 = vmatpush1.msra.mxu0 0.0
  %440 = vmatprep.subr.mxu0 0.0
  %441 = vmatpush1.msra.mxu0 0.0
  %442 = vmatprep.subr.mxu0 0.0
  %443 = vmatpush1.msra.mxu0 0.0
  %444 = vmatprep.mubr.f32.mxu0 0.0
  %445 = vmatmul.mubr.f32.gmra.mrb[0].mxu0 %v372
  %v446 = vpop.f32.mrb[0].mxu0
  %v447 = vadd.f32 0.0, %v446
  %v448 = vpop.f32.mrb[0].mxu0
  %v449 = vadd.f32 0.0, %v448
  %450 = vdwg.mxu0
  %v451 = vadd.f32 %v347, %v447
  %v452 = vadd.f32 %v348, %v449
  %s453 = scalar_lea.vmem %s2, 32
  %v454 = vld [vmem:[%s453] sm:$0xff]
  %v456 = vsel %vm83, %v454, 0
  %v458 = vsel %vm87, %v34, 0
  %v460 = vsel %vm87, %v36, 0
  %462 = vmatprep.subr.mxu0 %v460
  %463 = vmatpush1.msra.mxu0 %v458
  %464 = vmatprep.subr.mxu0 0.0
  %465 = vmatpush1.msra.mxu0 0.0
  %466 = vmatprep.subr.mxu0 0.0
  %467 = vmatpush1.msra.mxu0 0.0
  %468 = vmatprep.subr.mxu0 0.0
  %469 = vmatpush1.msra.mxu0 0.0
  %470 = vmatprep.subr.mxu0 0.0
  %471 = vmatpush1.msra.mxu0 0.0
  %472 = vmatprep.subr.mxu0 0.0
  %473 = vmatpush1.msra.mxu0 0.0
  %474 = vmatprep.subr.mxu0 0.0
  %475 = vmatpush1.msra.mxu0 0.0
  %476 = vmatprep.subr.mxu0 0.0
  %477 = vmatpush1.msra.mxu0 0.0
  %478 = vmatprep.subr.mxu0 0.0
  %479 = vmatpush1.msra.mxu0 0.0
  %480 = vmatprep.subr.mxu0 0.0
  %481 = vmatpush1.msra.mxu0 0.0
  %482 = vmatprep.subr.mxu0 0.0
  %483 = vmatpush1.msra.mxu0 0.0
  %484 = vmatprep.subr.mxu0 0.0
  %485 = vmatpush1.msra.mxu0 0.0
  %486 = vmatprep.subr.mxu0 0.0
  %487 = vmatpush1.msra.mxu0 0.0
  %488 = vmatprep.subr.mxu0 0.0
  %489 = vmatpush1.msra.mxu0 0.0
  %490 = vmatprep.subr.mxu0 0.0
  %491 = vmatpush1.msra.mxu0 0.0
  %492 = vmatprep.subr.mxu0 0.0
  %493 = vmatpush1.msra.mxu0 0.0
  %494 = vmatprep.subr.mxu0 0.0
  %495 = vmatpush1.msra.mxu0 0.0
  %496 = vmatprep.subr.mxu0 0.0
  %497 = vmatpush1.msra.mxu0 0.0
  %498 = vmatprep.subr.mxu0 0.0
  %499 = vmatpush1.msra.mxu0 0.0
  %500 = vmatprep.subr.mxu0 0.0
  %501 = vmatpush1.msra.mxu0 0.0
  %502 = vmatprep.subr.mxu0 0.0
  %503 = vmatpush1.msra.mxu0 0.0
  %504 = vmatprep.subr.mxu0 0.0
  %505 = vmatpush1.msra.mxu0 0.0
  %506 = vmatprep.subr.mxu0 0.0
  %507 = vmatpush1.msra.mxu0 0.0
  %508 = vmatprep.subr.mxu0 0.0
  %509 = vmatpush1.msra.mxu0 0.0
  %510 = vmatprep.subr.mxu0 0.0
  %511 = vmatpush1.msra.mxu0 0.0
  %512 = vmatprep.subr.mxu0 0.0
  %513 = vmatpush1.msra.mxu0 0.0
  %514 = vmatprep.subr.mxu0 0.0
  %515 = vmatpush1.msra.mxu0 0.0
  %516 = vmatprep.subr.mxu0 0.0
  %517 = vmatpush1.msra.mxu0 0.0
  %518 = vmatprep.subr.mxu0 0.0
  %519 = vmatpush1.msra.mxu0 0.0
  %520 = vmatprep.subr.mxu0 0.0
  %521 = vmatpush1.msra.mxu0 0.0
  %522 = vmatprep.subr.mxu0 0.0
  %523 = vmatpush1.msra.mxu0 0.0
  %524 = vmatprep.subr.mxu0 0.0
  %525 = vmatpush1.msra.mxu0 0.0
  %526 = vmatprep.mubr.f32.mxu0 0.0
  %527 = vmatmul.mubr.f32.gmra.mrb[0].mxu0 %v456
  %v528 = vpop.f32.mrb[0].mxu0
  %v529 = vadd.f32 0.0, %v528
  %v530 = vpop.f32.mrb[0].mxu0
  %v531 = vadd.f32 0.0, %v530
  %532 = vdwg.mxu0
  %v533 = vadd.f32 %v451, %v529
  %v534 = vadd.f32 %v452, %v531
  %535 = vrot.lane.b32.xlu0 %v34, 127
  %v536 = vpop.permute.xlu0 %535
  %537 = vrot.lane.b32.xlu0 %v36, 127
  %v538 = vpop.permute.xlu0 %537
  %vm539 = vcmp.lt.s32.totalorder %v43, 127
  %v540 = vsel %vm539, %v536, %v538
  %v541 = vsel %vm539, %v538, %v536
  %v543 = vlaneseq
  %v544 = vshrl.u32 %v543, 7
  %v545 = vsub.s32 0, %v544
  %v546 = vrot.slane %v28, %v545
  %v547 = vlaneseq
  %v548 = vshrl.u32 %v547, 7
  %v549 = vsub.s32 1, %v548
  %v550 = vrot.slane %v28, %v549
  %v553 = vmul.f32 %v540, %v546
  %v554 = vmul.f32 %v541, %v550
  %s555 = scalar_lea.vmem %s2, 40
  %v556 = vld [vmem:[%s555] sm:$0xff]
  %v558 = vsel %vm83, %v556, 0
  %v561 = vsel %vm87, %v553, 0
  %v564 = vsel %vm87, %v554, 0
  %566 = vmatprep.subr.mxu0 %v564
  %567 = vmatpush1.msra.mxu0 %v561
  %568 = vmatprep.subr.mxu0 0.0
  %569 = vmatpush1.msra.mxu0 0.0
  %570 = vmatprep.subr.mxu0 0.0
  %571 = vmatpush1.msra.mxu0 0.0
  %572 = vmatprep.subr.mxu0 0.0
  %573 = vmatpush1.msra.mxu0 0.0
  %574 = vmatprep.subr.mxu0 0.0
  %575 = vmatpush1.msra.mxu0 0.0
  %576 = vmatprep.subr.mxu0 0.0
  %577 = vmatpush1.msra.mxu0 0.0
  %578 = vmatprep.subr.mxu0 0.0
  %579 = vmatpush1.msra.mxu0 0.0
  %580 = vmatprep.subr.mxu0 0.0
  %581 = vmatpush1.msra.mxu0 0.0
  %582 = vmatprep.subr.mxu0 0.0
  %583 = vmatpush1.msra.mxu0 0.0
  %584 = vmatprep.subr.mxu0 0.0
  %585 = vmatpush1.msra.mxu0 0.0
  %586 = vmatprep.subr.mxu0 0.0
  %587 = vmatpush1.msra.mxu0 0.0
  %588 = vmatprep.subr.mxu0 0.0
  %589 = vmatpush1.msra.mxu0 0.0
  %590 = vmatprep.subr.mxu0 0.0
  %591 = vmatpush1.msra.mxu0 0.0
  %592 = vmatprep.subr.mxu0 0.0
  %593 = vmatpush1.msra.mxu0 0.0
  %594 = vmatprep.subr.mxu0 0.0
  %595 = vmatpush1.msra.mxu0 0.0
  %596 = vmatprep.subr.mxu0 0.0
  %597 = vmatpush1.msra.mxu0 0.0
  %598 = vmatprep.subr.mxu0 0.0
  %599 = vmatpush1.msra.mxu0 0.0
  %600 = vmatprep.subr.mxu0 0.0
  %601 = vmatpush1.msra.mxu0 0.0
  %602 = vmatprep.subr.mxu0 0.0
  %603 = vmatpush1.msra.mxu0 0.0
  %604 = vmatprep.subr.mxu0 0.0
  %605 = vmatpush1.msra.mxu0 0.0
  %606 = vmatprep.subr.mxu0 0.0
  %607 = vmatpush1.msra.mxu0 0.0
  %608 = vmatprep.subr.mxu0 0.0
  %609 = vmatpush1.msra.mxu0 0.0
  %610 = vmatprep.subr.mxu0 0.0
  %611 = vmatpush1.msra.mxu0 0.0
  %612 = vmatprep.subr.mxu0 0.0
  %613 = vmatpush1.msra.mxu0 0.0
  %614 = vmatprep.subr.mxu0 0.0
  %615 = vmatpush1.msra.mxu0 0.0
  %616 = vmatprep.subr.mxu0 0.0
  %617 = vmatpush1.msra.mxu0 0.0
  %618 = vmatprep.subr.mxu0 0.0
  %619 = vmatpush1.msra.mxu0 0.0
  %620 = vmatprep.subr.mxu0 0.0
  %621 = vmatpush1.msra.mxu0 0.0
  %622 = vmatprep.subr.mxu0 0.0
  %623 = vmatpush1.msra.mxu0 0.0
  %624 = vmatprep.subr.mxu0 0.0
  %625 = vmatpush1.msra.mxu0 0.0
  %626 = vmatprep.subr.mxu0 0.0
  %627 = vmatpush1.msra.mxu0 0.0
  %628 = vmatprep.subr.mxu0 0.0
  %629 = vmatpush1.msra.mxu0 0.0
  %630 = vmatprep.mubr.f32.mxu0 0.0
  %631 = vmatmul.mubr.f32.gmra.mrb[0].mxu0 %v558
  %v632 = vpop.f32.mrb[0].mxu0
  %v633 = vadd.f32 0.0, %v632
  %v634 = vpop.f32.mrb[0].mxu0
  %v635 = vadd.f32 0.0, %v634
  %636 = vdwg.mxu0
  %v637 = vadd.f32 %v533, %v633
  %v638 = vadd.f32 %v534, %v635
  %639 = vrot.lane.b32.xlu0 %v34, 113
  %v640 = vpop.permute.xlu0 %639
  %641 = vrot.lane.b32.xlu0 %v36, 113
  %v642 = vpop.permute.xlu0 %641
  %vm643 = vcmp.lt.s32.totalorder %v43, 113
  %v644 = vsel %vm643, %v640, %v642
  %v645 = vsel %vm643, %v642, %v640
  %v647 = vlaneseq
  %v648 = vshrl.u32 %v647, 7
  %v649 = vsub.s32 0, %v648
  %v650 = vrot.slane %v32, %v649
  %v651 = vlaneseq
  %v652 = vshrl.u32 %v651, 7
  %v653 = vsub.s32 1, %v652
  %v654 = vrot.slane %v32, %v653
  %v657 = vmul.f32 %v644, %v650
  %v658 = vmul.f32 %v645, %v654
  %s659 = scalar_lea.vmem %s2, 48
  %v660 = vld [vmem:[%s659] sm:$0xff]
  %v662 = vsel %vm83, %v660, 0
  %v665 = vsel %vm87, %v657, 0
  %v668 = vsel %vm87, %v658, 0
  %670 = vmatprep.subr.mxu0 %v668
  %671 = vmatpush1.msra.mxu0 %v665
  %672 = vmatprep.subr.mxu0 0.0
  %673 = vmatpush1.msra.mxu0 0.0
  %674 = vmatprep.subr.mxu0 0.0
  %675 = vmatpush1.msra.mxu0 0.0
  %676 = vmatprep.subr.mxu0 0.0
  %677 = vmatpush1.msra.mxu0 0.0
  %678 = vmatprep.subr.mxu0 0.0
  %679 = vmatpush1.msra.mxu0 0.0
  %680 = vmatprep.subr.mxu0 0.0
  %681 = vmatpush1.msra.mxu0 0.0
  %682 = vmatprep.subr.mxu0 0.0
  %683 = vmatpush1.msra.mxu0 0.0
  %684 = vmatprep.subr.mxu0 0.0
  %685 = vmatpush1.msra.mxu0 0.0
  %686 = vmatprep.subr.mxu0 0.0
  %687 = vmatpush1.msra.mxu0 0.0
  %688 = vmatprep.subr.mxu0 0.0
  %689 = vmatpush1.msra.mxu0 0.0
  %690 = vmatprep.subr.mxu0 0.0
  %691 = vmatpush1.msra.mxu0 0.0
  %692 = vmatprep.subr.mxu0 0.0
  %693 = vmatpush1.msra.mxu0 0.0
  %694 = vmatprep.subr.mxu0 0.0
  %695 = vmatpush1.msra.mxu0 0.0
  %696 = vmatprep.subr.mxu0 0.0
  %697 = vmatpush1.msra.mxu0 0.0
  %698 = vmatprep.subr.mxu0 0.0
  %699 = vmatpush1.msra.mxu0 0.0
  %700 = vmatprep.subr.mxu0 0.0
  %701 = vmatpush1.msra.mxu0 0.0
  %702 = vmatprep.subr.mxu0 0.0
  %703 = vmatpush1.msra.mxu0 0.0
  %704 = vmatprep.subr.mxu0 0.0
  %705 = vmatpush1.msra.mxu0 0.0
  %706 = vmatprep.subr.mxu0 0.0
  %707 = vmatpush1.msra.mxu0 0.0
  %708 = vmatprep.subr.mxu0 0.0
  %709 = vmatpush1.msra.mxu0 0.0
  %710 = vmatprep.subr.mxu0 0.0
  %711 = vmatpush1.msra.mxu0 0.0
  %712 = vmatprep.subr.mxu0 0.0
  %713 = vmatpush1.msra.mxu0 0.0
  %714 = vmatprep.subr.mxu0 0.0
  %715 = vmatpush1.msra.mxu0 0.0
  %716 = vmatprep.subr.mxu0 0.0
  %717 = vmatpush1.msra.mxu0 0.0
  %718 = vmatprep.subr.mxu0 0.0
  %719 = vmatpush1.msra.mxu0 0.0
  %720 = vmatprep.subr.mxu0 0.0
  %721 = vmatpush1.msra.mxu0 0.0
  %722 = vmatprep.subr.mxu0 0.0
  %723 = vmatpush1.msra.mxu0 0.0
  %724 = vmatprep.subr.mxu0 0.0
  %725 = vmatpush1.msra.mxu0 0.0
  %726 = vmatprep.subr.mxu0 0.0
  %727 = vmatpush1.msra.mxu0 0.0
  %728 = vmatprep.subr.mxu0 0.0
  %729 = vmatpush1.msra.mxu0 0.0
  %730 = vmatprep.subr.mxu0 0.0
  %731 = vmatpush1.msra.mxu0 0.0
  %732 = vmatprep.subr.mxu0 0.0
  %733 = vmatpush1.msra.mxu0 0.0
  %734 = vmatprep.mubr.f32.mxu0 0.0
  %735 = vmatmul.mubr.f32.gmra.mrb[0].mxu0 %v662
  %v736 = vpop.f32.mrb[0].mxu0
  %v737 = vadd.f32 0.0, %v736
  %v738 = vpop.f32.mrb[0].mxu0
  %v739 = vadd.f32 0.0, %v738
  %740 = vdwg.mxu0
  %v741 = vadd.f32 %v637, %v737
  %v742 = vadd.f32 %v638, %v739
  %743 = vrot.lane.b32.xlu0 %v34, 112
  %v744 = vpop.permute.xlu0 %743
  %745 = vrot.lane.b32.xlu0 %v36, 112
  %v746 = vpop.permute.xlu0 %745
  %vm747 = vcmp.lt.s32.totalorder %v43, 112
  %v748 = vsel %vm747, %v744, %v746
  %v749 = vsel %vm747, %v746, %v744
  %v751 = vlaneseq
  %v752 = vshrl.u32 %v751, 7
  %v753 = vsub.s32 0, %v752
  %v754 = vrot.slane %v31, %v753
  %v755 = vlaneseq
  %v756 = vshrl.u32 %v755, 7
  %v757 = vsub.s32 1, %v756
  %v758 = vrot.slane %v31, %v757
  %v761 = vmul.f32 %v748, %v754
  %v762 = vmul.f32 %v749, %v758
  %s763 = scalar_lea.vmem %s2, 56
  %v764 = vld [vmem:[%s763] sm:$0xff]
  %v766 = vsel %vm83, %v764, 0
  %v769 = vsel %vm87, %v761, 0
  %v772 = vsel %vm87, %v762, 0
  %774 = vmatprep.subr.mxu0 %v772
  %775 = vmatpush1.msra.mxu0 %v769
  %776 = vmatprep.subr.mxu0 0.0
  %777 = vmatpush1.msra.mxu0 0.0
  %778 = vmatprep.subr.mxu0 0.0
  %779 = vmatpush1.msra.mxu0 0.0
  %780 = vmatprep.subr.mxu0 0.0
  %781 = vmatpush1.msra.mxu0 0.0
  %782 = vmatprep.subr.mxu0 0.0
  %783 = vmatpush1.msra.mxu0 0.0
  %784 = vmatprep.subr.mxu0 0.0
  %785 = vmatpush1.msra.mxu0 0.0
  %786 = vmatprep.subr.mxu0 0.0
  %787 = vmatpush1.msra.mxu0 0.0
  %788 = vmatprep.subr.mxu0 0.0
  %789 = vmatpush1.msra.mxu0 0.0
  %790 = vmatprep.subr.mxu0 0.0
  %791 = vmatpush1.msra.mxu0 0.0
  %792 = vmatprep.subr.mxu0 0.0
  %793 = vmatpush1.msra.mxu0 0.0
  %794 = vmatprep.subr.mxu0 0.0
  %795 = vmatpush1.msra.mxu0 0.0
  %796 = vmatprep.subr.mxu0 0.0
  %797 = vmatpush1.msra.mxu0 0.0
  %798 = vmatprep.subr.mxu0 0.0
  %799 = vmatpush1.msra.mxu0 0.0
  %800 = vmatprep.subr.mxu0 0.0
  %801 = vmatpush1.msra.mxu0 0.0
  %802 = vmatprep.subr.mxu0 0.0
  %803 = vmatpush1.msra.mxu0 0.0
  %804 = vmatprep.subr.mxu0 0.0
  %805 = vmatpush1.msra.mxu0 0.0
  %806 = vmatprep.subr.mxu0 0.0
  %807 = vmatpush1.msra.mxu0 0.0
  %808 = vmatprep.subr.mxu0 0.0
  %809 = vmatpush1.msra.mxu0 0.0
  %810 = vmatprep.subr.mxu0 0.0
  %811 = vmatpush1.msra.mxu0 0.0
  %812 = vmatprep.subr.mxu0 0.0
  %813 = vmatpush1.msra.mxu0 0.0
  %814 = vmatprep.subr.mxu0 0.0
  %815 = vmatpush1.msra.mxu0 0.0
  %816 = vmatprep.subr.mxu0 0.0
  %817 = vmatpush1.msra.mxu0 0.0
  %818 = vmatprep.subr.mxu0 0.0
  %819 = vmatpush1.msra.mxu0 0.0
  %820 = vmatprep.subr.mxu0 0.0
  %821 = vmatpush1.msra.mxu0 0.0
  %822 = vmatprep.subr.mxu0 0.0
  %823 = vmatpush1.msra.mxu0 0.0
  %824 = vmatprep.subr.mxu0 0.0
  %825 = vmatpush1.msra.mxu0 0.0
  %826 = vmatprep.subr.mxu0 0.0
  %827 = vmatpush1.msra.mxu0 0.0
  %828 = vmatprep.subr.mxu0 0.0
  %829 = vmatpush1.msra.mxu0 0.0
  %830 = vmatprep.subr.mxu0 0.0
  %831 = vmatpush1.msra.mxu0 0.0
  %832 = vmatprep.subr.mxu0 0.0
  %833 = vmatpush1.msra.mxu0 0.0
  %834 = vmatprep.subr.mxu0 0.0
  %835 = vmatpush1.msra.mxu0 0.0
  %836 = vmatprep.subr.mxu0 0.0
  %837 = vmatpush1.msra.mxu0 0.0
  %838 = vmatprep.mubr.f32.mxu0 0.0
  %839 = vmatmul.mubr.f32.gmra.mrb[0].mxu0 %v766
  %v840 = vpop.f32.mrb[0].mxu0
  %v841 = vadd.f32 0.0, %v840
  %v842 = vpop.f32.mrb[0].mxu0
  %v843 = vadd.f32 0.0, %v842
  %844 = vdwg.mxu0
  %v845 = vadd.f32 %v741, %v841
  %v846 = vadd.f32 %v742, %v843
  %847 = vrot.lane.b32.xlu0 %v34, 111
  %v848 = vpop.permute.xlu0 %847
  %849 = vrot.lane.b32.xlu0 %v36, 111
  %v850 = vpop.permute.xlu0 %849
  %vm851 = vcmp.lt.s32.totalorder %v43, 111
  %v852 = vsel %vm851, %v848, %v850
  %v853 = vsel %vm851, %v850, %v848
  %v855 = vlaneseq
  %v856 = vshrl.u32 %v855, 7
  %v857 = vsub.s32 0, %v856
  %v858 = vrot.slane %v33, %v857
  %v859 = vlaneseq
  %v860 = vshrl.u32 %v859, 7
  %v861 = vsub.s32 1, %v860
  %v862 = vrot.slane %v33, %v861
  %v865 = vmul.f32 %v852, %v858
  %v866 = vmul.f32 %v853, %v862
  %s867 = scalar_lea.vmem %s2, 64
  %v868 = vld [vmem:[%s867] sm:$0xff]
  %v870 = vsel %vm83, %v868, 0
  %v873 = vsel %vm87, %v865, 0
  %v876 = vsel %vm87, %v866, 0
  %878 = vmatprep.subr.mxu0 %v876
  %879 = vmatpush1.msra.mxu0 %v873
  %880 = vmatprep.subr.mxu0 0.0
  %881 = vmatpush1.msra.mxu0 0.0
  %882 = vmatprep.subr.mxu0 0.0
  %883 = vmatpush1.msra.mxu0 0.0
  %884 = vmatprep.subr.mxu0 0.0
  %885 = vmatpush1.msra.mxu0 0.0
  %886 = vmatprep.subr.mxu0 0.0
  %887 = vmatpush1.msra.mxu0 0.0
  %888 = vmatprep.subr.mxu0 0.0
  %889 = vmatpush1.msra.mxu0 0.0
  %890 = vmatprep.subr.mxu0 0.0
  %891 = vmatpush1.msra.mxu0 0.0
  %892 = vmatprep.subr.mxu0 0.0
  %893 = vmatpush1.msra.mxu0 0.0
  %894 = vmatprep.subr.mxu0 0.0
  %895 = vmatpush1.msra.mxu0 0.0
  %896 = vmatprep.subr.mxu0 0.0
  %897 = vmatpush1.msra.mxu0 0.0
  %898 = vmatprep.subr.mxu0 0.0
  %899 = vmatpush1.msra.mxu0 0.0
  %900 = vmatprep.subr.mxu0 0.0
  %901 = vmatpush1.msra.mxu0 0.0
  %902 = vmatprep.subr.mxu0 0.0
  %903 = vmatpush1.msra.mxu0 0.0
  %904 = vmatprep.subr.mxu0 0.0
  %905 = vmatpush1.msra.mxu0 0.0
  %906 = vmatprep.subr.mxu0 0.0
  %907 = vmatpush1.msra.mxu0 0.0
  %908 = vmatprep.subr.mxu0 0.0
  %909 = vmatpush1.msra.mxu0 0.0
  %910 = vmatprep.subr.mxu0 0.0
  %911 = vmatpush1.msra.mxu0 0.0
  %912 = vmatprep.subr.mxu0 0.0
  %913 = vmatpush1.msra.mxu0 0.0
  %914 = vmatprep.subr.mxu0 0.0
  %915 = vmatpush1.msra.mxu0 0.0
  %916 = vmatprep.subr.mxu0 0.0
  %917 = vmatpush1.msra.mxu0 0.0
  %918 = vmatprep.subr.mxu0 0.0
  %919 = vmatpush1.msra.mxu0 0.0
  %920 = vmatprep.subr.mxu0 0.0
  %921 = vmatpush1.msra.mxu0 0.0
  %922 = vmatprep.subr.mxu0 0.0
  %923 = vmatpush1.msra.mxu0 0.0
  %924 = vmatprep.subr.mxu0 0.0
  %925 = vmatpush1.msra.mxu0 0.0
  %926 = vmatprep.subr.mxu0 0.0
  %927 = vmatpush1.msra.mxu0 0.0
  %928 = vmatprep.subr.mxu0 0.0
  %929 = vmatpush1.msra.mxu0 0.0
  %930 = vmatprep.subr.mxu0 0.0
  %931 = vmatpush1.msra.mxu0 0.0
  %932 = vmatprep.subr.mxu0 0.0
  %933 = vmatpush1.msra.mxu0 0.0
  %934 = vmatprep.subr.mxu0 0.0
  %935 = vmatpush1.msra.mxu0 0.0
  %936 = vmatprep.subr.mxu0 0.0
  %937 = vmatpush1.msra.mxu0 0.0
  %938 = vmatprep.subr.mxu0 0.0
  %939 = vmatpush1.msra.mxu0 0.0
  %940 = vmatprep.subr.mxu0 0.0
  %941 = vmatpush1.msra.mxu0 0.0
  %942 = vmatprep.mubr.f32.mxu0 0.0
  %943 = vmatmul.mubr.f32.gmra.mrb[0].mxu0 %v870
  %v944 = vpop.f32.mrb[0].mxu0
  %v945 = vadd.f32 0.0, %v944
  %v946 = vpop.f32.mrb[0].mxu0
  %v947 = vadd.f32 0.0, %v946
  %948 = vdwg.mxu0
  %v949 = vadd.f32 %v845, %v945
  %v950 = vadd.f32 %v846, %v947
  %v951 = vld [vmem:[%s3] sm:$0xff]
  %953 = vset.pattern.permute.xlu0 0
  %954 = vperm.xlu0 %953, %v951
  %v955 = vpop.permute.xlu0 %954
  %v957 = vadd.f32 %v949, %v955
  %v958 = vadd.f32 %v950, %v955
  %v959 = vmax.f32 %v957, 0.0
  %v960 = vmax.f32 %v958, 0.0
  %961 = vrot.lane.b32.xlu0 %v959, 17
  %v962 = vpop.permute.xlu0 %961
  %963 = vrot.lane.b32.xlu0 %v960, 17
  %v964 = vpop.permute.xlu0 %963
  %v965 = vsel %vm44, %v962, %v964
  %v966 = vsel %vm44, %v964, %v962
  %v967 = vmul.f32 %v966, %v51
  %v968 = vmul.f32 %v965, %v55
  %v969 = vld [vmem:[%s4] sm:$0xff]
  %970 = vrot.lane.b32.xlu0 %v959, 16
  %v971 = vpop.permute.xlu0 %970
  %972 = vrot.lane.b32.xlu0 %v960, 16
  %v973 = vpop.permute.xlu0 %972
  %v974 = vsel %vm65, %v971, %v973
  %v975 = vsel %vm65, %v973, %v971
  %v976 = vmul.f32 %v975, %v72
  %v977 = vmul.f32 %v974, %v76
  %s978 = scalar_lea.vmem %s4, 8
  %v979 = vld [vmem:[%s978] sm:$0xff]
  %vm980 = vcmask 64512
  %v982 = vsel %vm980, %v979, 0
  %984 = vmatprep.subr.mxu0 %v977
  %985 = vmatpush1.msra.mxu0 %v976
  %986 = vmatprep.subr.mxu0 0.0
  %987 = vmatpush1.msra.mxu0 0.0
  %988 = vmatprep.subr.mxu0 0.0
  %989 = vmatpush1.msra.mxu0 0.0
  %990 = vmatprep.subr.mxu0 0.0
  %991 = vmatpush1.msra.mxu0 0.0
  %992 = vmatprep.subr.mxu0 0.0
  %993 = vmatpush1.msra.mxu0 0.0
  %994 = vmatprep.subr.mxu0 0.0
  %995 = vmatpush1.msra.mxu0 0.0
  %996 = vmatprep.subr.mxu0 0.0
  %997 = vmatpush1.msra.mxu0 0.0
  %998 = vmatprep.subr.mxu0 0.0
  %999 = vmatpush1.msra.mxu0 0.0
  %1000 = vmatprep.subr.mxu0 0.0
  %1001 = vmatpush1.msra.mxu0 0.0
  %1002 = vmatprep.subr.mxu0 0.0
  %1003 = vmatpush1.msra.mxu0 0.0
  %1004 = vmatprep.subr.mxu0 0.0
  %1005 = vmatpush1.msra.mxu0 0.0
  %1006 = vmatprep.subr.mxu0 0.0
  %1007 = vmatpush1.msra.mxu0 0.0
  %1008 = vmatprep.subr.mxu0 0.0
  %1009 = vmatpush1.msra.mxu0 0.0
  %1010 = vmatprep.subr.mxu0 0.0
  %1011 = vmatpush1.msra.mxu0 0.0
  %1012 = vmatprep.subr.mxu0 0.0
  %1013 = vmatpush1.msra.mxu0 0.0
  %1014 = vmatprep.subr.mxu0 0.0
  %1015 = vmatpush1.msra.mxu0 0.0
  %1016 = vmatprep.subr.mxu0 0.0
  %1017 = vmatpush1.msra.mxu0 0.0
  %1018 = vmatprep.subr.mxu0 0.0
  %1019 = vmatpush1.msra.mxu0 0.0
  %1020 = vmatprep.subr.mxu0 0.0
  %1021 = vmatpush1.msra.mxu0 0.0
  %1022 = vmatprep.subr.mxu0 0.0
  %1023 = vmatpush1.msra.mxu0 0.0
  %1024 = vmatprep.subr.mxu0 0.0
  %1025 = vmatpush1.msra.mxu0 0.0
  %1026 = vmatprep.subr.mxu0 0.0
  %1027 = vmatpush1.msra.mxu0 0.0
  %1028 = vmatprep.subr.mxu0 0.0
  %1029 = vmatpush1.msra.mxu0 0.0
  %1030 = vmatprep.subr.mxu0 0.0
  %1031 = vmatpush1.msra.mxu0 0.0
  %1032 = vmatprep.subr.mxu0 0.0
  %1033 = vmatpush1.msra.mxu0 0.0
  %1034 = vmatprep.subr.mxu0 0.0
  %1035 = vmatpush1.msra.mxu0 0.0
  %1036 = vmatprep.subr.mxu0 0.0
  %1037 = vmatpush1.msra.mxu0 0.0
  %1038 = vmatprep.subr.mxu0 0.0
  %1039 = vmatpush1.msra.mxu0 0.0
  %1040 = vmatprep.subr.mxu0 0.0
  %1041 = vmatpush1.msra.mxu0 0.0
  %1042 = vmatprep.subr.mxu0 0.0
  %1043 = vmatpush1.msra.mxu0 0.0
  %1044 = vmatprep.subr.mxu0 0.0
  %1045 = vmatpush1.msra.mxu0 0.0
  %1046 = vmatprep.subr.mxu0 0.0
  %1047 = vmatpush1.msra.mxu0 0.0
  %1048 = vmatprep.mubr.f32.mxu0 0.0
  %1049 = vmatmul.mubr.f32.gmra.mrb[0].mxu0 %v982
  %v1050 = vpop.f32.mrb[0].mxu0
  %v1051 = vadd.f32 0.0, %v1050
  %v1052 = vpop.f32.mrb[0].mxu0
  %v1053 = vadd.f32 0.0, %v1052
  %1054 = vdwg.mxu0
  %v1056 = vsel %vm980, %v969, 0
  %1058 = vmatprep.subr.mxu0 %v968
  %1059 = vmatpush1.msra.mxu0 %v967
  %1060 = vmatprep.subr.mxu0 0.0
  %1061 = vmatpush1.msra.mxu0 0.0
  %1062 = vmatprep.subr.mxu0 0.0
  %1063 = vmatpush1.msra.mxu0 0.0
  %1064 = vmatprep.subr.mxu0 0.0
  %1065 = vmatpush1.msra.mxu0 0.0
  %1066 = vmatprep.subr.mxu0 0.0
  %1067 = vmatpush1.msra.mxu0 0.0
  %1068 = vmatprep.subr.mxu0 0.0
  %1069 = vmatpush1.msra.mxu0 0.0
  %1070 = vmatprep.subr.mxu0 0.0
  %1071 = vmatpush1.msra.mxu0 0.0
  %1072 = vmatprep.subr.mxu0 0.0
  %1073 = vmatpush1.msra.mxu0 0.0
  %1074 = vmatprep.subr.mxu0 0.0
  %1075 = vmatpush1.msra.mxu0 0.0
  %1076 = vmatprep.subr.mxu0 0.0
  %1077 = vmatpush1.msra.mxu0 0.0
  %1078 = vmatprep.subr.mxu0 0.0
  %1079 = vmatpush1.msra.mxu0 0.0
  %1080 = vmatprep.subr.mxu0 0.0
  %1081 = vmatpush1.msra.mxu0 0.0
  %1082 = vmatprep.subr.mxu0 0.0
  %1083 = vmatpush1.msra.mxu0 0.0
  %1084 = vmatprep.subr.mxu0 0.0
  %1085 = vmatpush1.msra.mxu0 0.0
  %1086 = vmatprep.subr.mxu0 0.0
  %1087 = vmatpush1.msra.mxu0 0.0
  %1088 = vmatprep.subr.mxu0 0.0
  %1089 = vmatpush1.msra.mxu0 0.0
  %1090 = vmatprep.subr.mxu0 0.0
  %1091 = vmatpush1.msra.mxu0 0.0
  %1092 = vmatprep.subr.mxu0 0.0
  %1093 = vmatpush1.msra.mxu0 0.0
  %1094 = vmatprep.subr.mxu0 0.0
  %1095 = vmatpush1.msra.mxu0 0.0
  %1096 = vmatprep.subr.mxu0 0.0
  %1097 = vmatpush1.msra.mxu0 0.0
  %1098 = vmatprep.subr.mxu0 0.0
  %1099 = vmatpush1.msra.mxu0 0.0
  %1100 = vmatprep.subr.mxu0 0.0
  %1101 = vmatpush1.msra.mxu0 0.0
  %1102 = vmatprep.subr.mxu0 0.0
  %1103 = vmatpush1.msra.mxu0 0.0
  %1104 = vmatprep.subr.mxu0 0.0
  %1105 = vmatpush1.msra.mxu0 0.0
  %1106 = vmatprep.subr.mxu0 0.0
  %1107 = vmatpush1.msra.mxu0 0.0
  %1108 = vmatprep.subr.mxu0 0.0
  %1109 = vmatpush1.msra.mxu0 0.0
  %1110 = vmatprep.subr.mxu0 0.0
  %1111 = vmatpush1.msra.mxu0 0.0
  %1112 = vmatprep.subr.mxu0 0.0
  %1113 = vmatpush1.msra.mxu0 0.0
  %1114 = vmatprep.subr.mxu0 0.0
  %1115 = vmatpush1.msra.mxu0 0.0
  %1116 = vmatprep.subr.mxu0 0.0
  %1117 = vmatpush1.msra.mxu0 0.0
  %1118 = vmatprep.subr.mxu0 0.0
  %1119 = vmatpush1.msra.mxu0 0.0
  %1120 = vmatprep.subr.mxu0 0.0
  %1121 = vmatpush1.msra.mxu0 0.0
  %1122 = vmatprep.mubr.f32.mxu0 0.0
  %1123 = vmatmul.mubr.f32.gmra.mrb[0].mxu0 %v1056
  %v1124 = vpop.f32.mrb[0].mxu0
  %v1125 = vadd.f32 %v1051, %v1124
  %v1126 = vpop.f32.mrb[0].mxu0
  %v1127 = vadd.f32 %v1053, %v1126
  %1128 = vdwg.mxu0
  %1129 = vrot.lane.b32.xlu0 %v959, 15
  %v1130 = vpop.permute.xlu0 %1129
  %1131 = vrot.lane.b32.xlu0 %v960, 15
  %v1132 = vpop.permute.xlu0 %1131
  %v1133 = vsel %vm249, %v1130, %v1132
  %v1134 = vsel %vm249, %v1132, %v1130
  %v1135 = vmul.f32 %v1134, %v256
  %v1136 = vmul.f32 %v1133, %v260
  %s1137 = scalar_lea.vmem %s4, 16
  %v1138 = vld [vmem:[%s1137] sm:$0xff]
  %v1140 = vsel %vm980, %v1138, 0
  %1142 = vmatprep.subr.mxu0 %v1136
  %1143 = vmatpush1.msra.mxu0 %v1135
  %1144 = vmatprep.subr.mxu0 0.0
  %1145 = vmatpush1.msra.mxu0 0.0
  %1146 = vmatprep.subr.mxu0 0.0
  %1147 = vmatpush1.msra.mxu0 0.0
  %1148 = vmatprep.subr.mxu0 0.0
  %1149 = vmatpush1.msra.mxu0 0.0
  %1150 = vmatprep.subr.mxu0 0.0
  %1151 = vmatpush1.msra.mxu0 0.0
  %1152 = vmatprep.subr.mxu0 0.0
  %1153 = vmatpush1.msra.mxu0 0.0
  %1154 = vmatprep.subr.mxu0 0.0
  %1155 = vmatpush1.msra.mxu0 0.0
  %1156 = vmatprep.subr.mxu0 0.0
  %1157 = vmatpush1.msra.mxu0 0.0
  %1158 = vmatprep.subr.mxu0 0.0
  %1159 = vmatpush1.msra.mxu0 0.0
  %1160 = vmatprep.subr.mxu0 0.0
  %1161 = vmatpush1.msra.mxu0 0.0
  %1162 = vmatprep.subr.mxu0 0.0
  %1163 = vmatpush1.msra.mxu0 0.0
  %1164 = vmatprep.subr.mxu0 0.0
  %1165 = vmatpush1.msra.mxu0 0.0
  %1166 = vmatprep.subr.mxu0 0.0
  %1167 = vmatpush1.msra.mxu0 0.0
  %1168 = vmatprep.subr.mxu0 0.0
  %1169 = vmatpush1.msra.mxu0 0.0
  %1170 = vmatprep.subr.mxu0 0.0
  %1171 = vmatpush1.msra.mxu0 0.0
  %1172 = vmatprep.subr.mxu0 0.0
  %1173 = vmatpush1.msra.mxu0 0.0
  %1174 = vmatprep.subr.mxu0 0.0
  %1175 = vmatpush1.msra.mxu0 0.0
  %1176 = vmatprep.subr.mxu0 0.0
  %1177 = vmatpush1.msra.mxu0 0.0
  %1178 = vmatprep.subr.mxu0 0.0
  %1179 = vmatpush1.msra.mxu0 0.0
  %1180 = vmatprep.subr.mxu0 0.0
  %1181 = vmatpush1.msra.mxu0 0.0
  %1182 = vmatprep.subr.mxu0 0.0
  %1183 = vmatpush1.msra.mxu0 0.0
  %1184 = vmatprep.subr.mxu0 0.0
  %1185 = vmatpush1.msra.mxu0 0.0
  %1186 = vmatprep.subr.mxu0 0.0
  %1187 = vmatpush1.msra.mxu0 0.0
  %1188 = vmatprep.subr.mxu0 0.0
  %1189 = vmatpush1.msra.mxu0 0.0
  %1190 = vmatprep.subr.mxu0 0.0
  %1191 = vmatpush1.msra.mxu0 0.0
  %1192 = vmatprep.subr.mxu0 0.0
  %1193 = vmatpush1.msra.mxu0 0.0
  %1194 = vmatprep.subr.mxu0 0.0
  %1195 = vmatpush1.msra.mxu0 0.0
  %1196 = vmatprep.subr.mxu0 0.0
  %1197 = vmatpush1.msra.mxu0 0.0
  %1198 = vmatprep.subr.mxu0 0.0
  %1199 = vmatpush1.msra.mxu0 0.0
  %1200 = vmatprep.subr.mxu0 0.0
  %1201 = vmatpush1.msra.mxu0 0.0
  %1202 = vmatprep.subr.mxu0 0.0
  %1203 = vmatpush1.msra.mxu0 0.0
  %1204 = vmatprep.subr.mxu0 0.0
  %1205 = vmatpush1.msra.mxu0 0.0
  %1206 = vmatprep.mubr.f32.mxu0 0.0
  %1207 = vmatmul.mubr.f32.gmra.mrb[0].mxu0 %v1140
  %v1208 = vpop.f32.mrb[0].mxu0
  %v1209 = vadd.f32 0.0, %v1208
  %v1210 = vpop.f32.mrb[0].mxu0
  %v1211 = vadd.f32 0.0, %v1210
  %1212 = vdwg.mxu0
  %v1213 = vadd.f32 %v1125, %v1209
  %v1214 = vadd.f32 %v1127, %v1211
  %1215 = vrot.lane.b32.xlu0 %v959, 1
  %v1216 = vpop.permute.xlu0 %1215
  %1217 = vrot.lane.b32.xlu0 %v960, 1
  %v1218 = vpop.permute.xlu0 %1217
  %v1219 = vsel %vm353, %v1216, %v1218
  %v1220 = vsel %vm353, %v1218, %v1216
  %v1221 = vmul.f32 %v1220, %v360
  %v1222 = vmul.f32 %v1219, %v364
  %s1223 = scalar_lea.vmem %s4, 24
  %v1224 = vld [vmem:[%s1223] sm:$0xff]
  %v1226 = vsel %vm980, %v1224, 0
  %1228 = vmatprep.subr.mxu0 %v1222
  %1229 = vmatpush1.msra.mxu0 %v1221
  %1230 = vmatprep.subr.mxu0 0.0
  %1231 = vmatpush1.msra.mxu0 0.0
  %1232 = vmatprep.subr.mxu0 0.0
  %1233 = vmatpush1.msra.mxu0 0.0
  %1234 = vmatprep.subr.mxu0 0.0
  %1235 = vmatpush1.msra.mxu0 0.0
  %1236 = vmatprep.subr.mxu0 0.0
  %1237 = vmatpush1.msra.mxu0 0.0
  %1238 = vmatprep.subr.mxu0 0.0
  %1239 = vmatpush1.msra.mxu0 0.0
  %1240 = vmatprep.subr.mxu0 0.0
  %1241 = vmatpush1.msra.mxu0 0.0
  %1242 = vmatprep.subr.mxu0 0.0
  %1243 = vmatpush1.msra.mxu0 0.0
  %1244 = vmatprep.subr.mxu0 0.0
  %1245 = vmatpush1.msra.mxu0 0.0
  %1246 = vmatprep.subr.mxu0 0.0
  %1247 = vmatpush1.msra.mxu0 0.0
  %1248 = vmatprep.subr.mxu0 0.0
  %1249 = vmatpush1.msra.mxu0 0.0
  %1250 = vmatprep.subr.mxu0 0.0
  %1251 = vmatpush1.msra.mxu0 0.0
  %1252 = vmatprep.subr.mxu0 0.0
  %1253 = vmatpush1.msra.mxu0 0.0
  %1254 = vmatprep.subr.mxu0 0.0
  %1255 = vmatpush1.msra.mxu0 0.0
  %1256 = vmatprep.subr.mxu0 0.0
  %1257 = vmatpush1.msra.mxu0 0.0
  %1258 = vmatprep.subr.mxu0 0.0
  %1259 = vmatpush1.msra.mxu0 0.0
  %1260 = vmatprep.subr.mxu0 0.0
  %1261 = vmatpush1.msra.mxu0 0.0
  %1262 = vmatprep.subr.mxu0 0.0
  %1263 = vmatpush1.msra.mxu0 0.0
  %1264 = vmatprep.subr.mxu0 0.0
  %1265 = vmatpush1.msra.mxu0 0.0
  %1266 = vmatprep.subr.mxu0 0.0
  %1267 = vmatpush1.msra.mxu0 0.0
  %1268 = vmatprep.subr.mxu0 0.0
  %1269 = vmatpush1.msra.mxu0 0.0
  %1270 = vmatprep.subr.mxu0 0.0
  %1271 = vmatpush1.msra.mxu0 0.0
  %1272 = vmatprep.subr.mxu0 0.0
  %1273 = vmatpush1.msra.mxu0 0.0
  %1274 = vmatprep.subr.mxu0 0.0
  %1275 = vmatpush1.msra.mxu0 0.0
  %1276 = vmatprep.subr.mxu0 0.0
  %1277 = vmatpush1.msra.mxu0 0.0
  %1278 = vmatprep.subr.mxu0 0.0
  %1279 = vmatpush1.msra.mxu0 0.0
  %1280 = vmatprep.subr.mxu0 0.0
  %1281 = vmatpush1.msra.mxu0 0.0
  %1282 = vmatprep.subr.mxu0 0.0
  %1283 = vmatpush1.msra.mxu0 0.0
  %1284 = vmatprep.subr.mxu0 0.0
  %1285 = vmatpush1.msra.mxu0 0.0
  %1286 = vmatprep.subr.mxu0 0.0
  %1287 = vmatpush1.msra.mxu0 0.0
  %1288 = vmatprep.subr.mxu0 0.0
  %1289 = vmatpush1.msra.mxu0 0.0
  %1290 = vmatprep.subr.mxu0 0.0
  %1291 = vmatpush1.msra.mxu0 0.0
  %1292 = vmatprep.mubr.f32.mxu0 0.0
  %1293 = vmatmul.mubr.f32.gmra.mrb[0].mxu0 %v1226
  %v1294 = vpop.f32.mrb[0].mxu0
  %v1295 = vadd.f32 0.0, %v1294
  %v1296 = vpop.f32.mrb[0].mxu0
  %v1297 = vadd.f32 0.0, %v1296
  %1298 = vdwg.mxu0
  %v1299 = vadd.f32 %v1213, %v1295
  %v1300 = vadd.f32 %v1214, %v1297
  %s1301 = scalar_lea.vmem %s4, 32
  %v1302 = vld [vmem:[%s1301] sm:$0xff]
  %v1304 = vsel %vm980, %v1302, 0
  %1306 = vmatprep.subr.mxu0 %v960
  %1307 = vmatpush1.msra.mxu0 %v959
  %1308 = vmatprep.subr.mxu0 0.0
  %1309 = vmatpush1.msra.mxu0 0.0
  %1310 = vmatprep.subr.mxu0 0.0
  %1311 = vmatpush1.msra.mxu0 0.0
  %1312 = vmatprep.subr.mxu0 0.0
  %1313 = vmatpush1.msra.mxu0 0.0
  %1314 = vmatprep.subr.mxu0 0.0
  %1315 = vmatpush1.msra.mxu0 0.0
  %1316 = vmatprep.subr.mxu0 0.0
  %1317 = vmatpush1.msra.mxu0 0.0
  %1318 = vmatprep.subr.mxu0 0.0
  %1319 = vmatpush1.msra.mxu0 0.0
  %1320 = vmatprep.subr.mxu0 0.0
  %1321 = vmatpush1.msra.mxu0 0.0
  %1322 = vmatprep.subr.mxu0 0.0
  %1323 = vmatpush1.msra.mxu0 0.0
  %1324 = vmatprep.subr.mxu0 0.0
  %1325 = vmatpush1.msra.mxu0 0.0
  %1326 = vmatprep.subr.mxu0 0.0
  %1327 = vmatpush1.msra.mxu0 0.0
  %1328 = vmatprep.subr.mxu0 0.0
  %1329 = vmatpush1.msra.mxu0 0.0
  %1330 = vmatprep.subr.mxu0 0.0
  %1331 = vmatpush1.msra.mxu0 0.0
  %1332 = vmatprep.subr.mxu0 0.0
  %1333 = vmatpush1.msra.mxu0 0.0
  %1334 = vmatprep.subr.mxu0 0.0
  %1335 = vmatpush1.msra.mxu0 0.0
  %1336 = vmatprep.subr.mxu0 0.0
  %1337 = vmatpush1.msra.mxu0 0.0
  %1338 = vmatprep.subr.mxu0 0.0
  %1339 = vmatpush1.msra.mxu0 0.0
  %1340 = vmatprep.subr.mxu0 0.0
  %1341 = vmatpush1.msra.mxu0 0.0
  %1342 = vmatprep.subr.mxu0 0.0
  %1343 = vmatpush1.msra.mxu0 0.0
  %1344 = vmatprep.subr.mxu0 0.0
  %1345 = vmatpush1.msra.mxu0 0.0
  %1346 = vmatprep.subr.mxu0 0.0
  %1347 = vmatpush1.msra.mxu0 0.0
  %1348 = vmatprep.subr.mxu0 0.0
  %1349 = vmatpush1.msra.mxu0 0.0
  %1350 = vmatprep.subr.mxu0 0.0
  %1351 = vmatpush1.msra.mxu0 0.0
  %1352 = vmatprep.subr.mxu0 0.0
  %1353 = vmatpush1.msra.mxu0 0.0
  %1354 = vmatprep.subr.mxu0 0.0
  %1355 = vmatpush1.msra.mxu0 0.0
  %1356 = vmatprep.subr.mxu0 0.0
  %1357 = vmatpush1.msra.mxu0 0.0
  %1358 = vmatprep.subr.mxu0 0.0
  %1359 = vmatpush1.msra.mxu0 0.0
  %1360 = vmatprep.subr.mxu0 0.0
  %1361 = vmatpush1.msra.mxu0 0.0
  %1362 = vmatprep.subr.mxu0 0.0
  %1363 = vmatpush1.msra.mxu0 0.0
  %1364 = vmatprep.subr.mxu0 0.0
  %1365 = vmatpush1.msra.mxu0 0.0
  %1366 = vmatprep.subr.mxu0 0.0
  %1367 = vmatpush1.msra.mxu0 0.0
  %1368 = vmatprep.subr.mxu0 0.0
  %1369 = vmatpush1.msra.mxu0 0.0
  %1370 = vmatprep.mubr.f32.mxu0 0.0
  %1371 = vmatmul.mubr.f32.gmra.mrb[0].mxu0 %v1304
  %v1372 = vpop.f32.mrb[0].mxu0
  %v1373 = vadd.f32 0.0, %v1372
  %v1374 = vpop.f32.mrb[0].mxu0
  %v1375 = vadd.f32 0.0, %v1374
  %1376 = vdwg.mxu0
  %v1377 = vadd.f32 %v1299, %v1373
  %v1378 = vadd.f32 %v1300, %v1375
  %1379 = vrot.lane.b32.xlu0 %v959, 127
  %v1380 = vpop.permute.xlu0 %1379
  %1381 = vrot.lane.b32.xlu0 %v960, 127
  %v1382 = vpop.permute.xlu0 %1381
  %v1383 = vsel %vm539, %v1380, %v1382
  %v1384 = vsel %vm539, %v1382, %v1380
  %v1385 = vmul.f32 %v1383, %v546
  %v1386 = vmul.f32 %v1384, %v550
  %s1387 = scalar_lea.vmem %s4, 40
  %v1388 = vld [vmem:[%s1387] sm:$0xff]
  %v1390 = vsel %vm980, %v1388, 0
  %1392 = vmatprep.subr.mxu0 %v1386
  %1393 = vmatpush1.msra.mxu0 %v1385
  %1394 = vmatprep.subr.mxu0 0.0
  %1395 = vmatpush1.msra.mxu0 0.0
  %1396 = vmatprep.subr.mxu0 0.0
  %1397 = vmatpush1.msra.mxu0 0.0
  %1398 = vmatprep.subr.mxu0 0.0
  %1399 = vmatpush1.msra.mxu0 0.0
  %1400 = vmatprep.subr.mxu0 0.0
  %1401 = vmatpush1.msra.mxu0 0.0
  %1402 = vmatprep.subr.mxu0 0.0
  %1403 = vmatpush1.msra.mxu0 0.0
  %1404 = vmatprep.subr.mxu0 0.0
  %1405 = vmatpush1.msra.mxu0 0.0
  %1406 = vmatprep.subr.mxu0 0.0
  %1407 = vmatpush1.msra.mxu0 0.0
  %1408 = vmatprep.subr.mxu0 0.0
  %1409 = vmatpush1.msra.mxu0 0.0
  %1410 = vmatprep.subr.mxu0 0.0
  %1411 = vmatpush1.msra.mxu0 0.0
  %1412 = vmatprep.subr.mxu0 0.0
  %1413 = vmatpush1.msra.mxu0 0.0
  %1414 = vmatprep.subr.mxu0 0.0
  %1415 = vmatpush1.msra.mxu0 0.0
  %1416 = vmatprep.subr.mxu0 0.0
  %1417 = vmatpush1.msra.mxu0 0.0
  %1418 = vmatprep.subr.mxu0 0.0
  %1419 = vmatpush1.msra.mxu0 0.0
  %1420 = vmatprep.subr.mxu0 0.0
  %1421 = vmatpush1.msra.mxu0 0.0
  %1422 = vmatprep.subr.mxu0 0.0
  %1423 = vmatpush1.msra.mxu0 0.0
  %1424 = vmatprep.subr.mxu0 0.0
  %1425 = vmatpush1.msra.mxu0 0.0
  %1426 = vmatprep.subr.mxu0 0.0
  %1427 = vmatpush1.msra.mxu0 0.0
  %1428 = vmatprep.subr.mxu0 0.0
  %1429 = vmatpush1.msra.mxu0 0.0
  %1430 = vmatprep.subr.mxu0 0.0
  %1431 = vmatpush1.msra.mxu0 0.0
  %1432 = vmatprep.subr.mxu0 0.0
  %1433 = vmatpush1.msra.mxu0 0.0
  %1434 = vmatprep.subr.mxu0 0.0
  %1435 = vmatpush1.msra.mxu0 0.0
  %1436 = vmatprep.subr.mxu0 0.0
  %1437 = vmatpush1.msra.mxu0 0.0
  %1438 = vmatprep.subr.mxu0 0.0
  %1439 = vmatpush1.msra.mxu0 0.0
  %1440 = vmatprep.subr.mxu0 0.0
  %1441 = vmatpush1.msra.mxu0 0.0
  %1442 = vmatprep.subr.mxu0 0.0
  %1443 = vmatpush1.msra.mxu0 0.0
  %1444 = vmatprep.subr.mxu0 0.0
  %1445 = vmatpush1.msra.mxu0 0.0
  %1446 = vmatprep.subr.mxu0 0.0
  %1447 = vmatpush1.msra.mxu0 0.0
  %1448 = vmatprep.subr.mxu0 0.0
  %1449 = vmatpush1.msra.mxu0 0.0
  %1450 = vmatprep.subr.mxu0 0.0
  %1451 = vmatpush1.msra.mxu0 0.0
  %1452 = vmatprep.subr.mxu0 0.0
  %1453 = vmatpush1.msra.mxu0 0.0
  %1454 = vmatprep.subr.mxu0 0.0
  %1455 = vmatpush1.msra.mxu0 0.0
  %1456 = vmatprep.mubr.f32.mxu0 0.0
  %1457 = vmatmul.mubr.f32.gmra.mrb[0].mxu0 %v1390
  %v1458 = vpop.f32.mrb[0].mxu0
  %v1459 = vadd.f32 0.0, %v1458
  %v1460 = vpop.f32.mrb[0].mxu0
  %v1461 = vadd.f32 0.0, %v1460
  %1462 = vdwg.mxu0
  %v1463 = vadd.f32 %v1377, %v1459
  %v1464 = vadd.f32 %v1378, %v1461
  %1465 = vrot.lane.b32.xlu0 %v959, 113
  %v1466 = vpop.permute.xlu0 %1465
  %1467 = vrot.lane.b32.xlu0 %v960, 113
  %v1468 = vpop.permute.xlu0 %1467
  %v1469 = vsel %vm643, %v1466, %v1468
  %v1470 = vsel %vm643, %v1468, %v1466
  %v1471 = vmul.f32 %v1469, %v650
  %v1472 = vmul.f32 %v1470, %v654
  %s1473 = scalar_lea.vmem %s4, 48
  %v1474 = vld [vmem:[%s1473] sm:$0xff]
  %v1476 = vsel %vm980, %v1474, 0
  %1478 = vmatprep.subr.mxu0 %v1472
  %1479 = vmatpush1.msra.mxu0 %v1471
  %1480 = vmatprep.subr.mxu0 0.0
  %1481 = vmatpush1.msra.mxu0 0.0
  %1482 = vmatprep.subr.mxu0 0.0
  %1483 = vmatpush1.msra.mxu0 0.0
  %1484 = vmatprep.subr.mxu0 0.0
  %1485 = vmatpush1.msra.mxu0 0.0
  %1486 = vmatprep.subr.mxu0 0.0
  %1487 = vmatpush1.msra.mxu0 0.0
  %1488 = vmatprep.subr.mxu0 0.0
  %1489 = vmatpush1.msra.mxu0 0.0
  %1490 = vmatprep.subr.mxu0 0.0
  %1491 = vmatpush1.msra.mxu0 0.0
  %1492 = vmatprep.subr.mxu0 0.0
  %1493 = vmatpush1.msra.mxu0 0.0
  %1494 = vmatprep.subr.mxu0 0.0
  %1495 = vmatpush1.msra.mxu0 0.0
  %1496 = vmatprep.subr.mxu0 0.0
  %1497 = vmatpush1.msra.mxu0 0.0
  %1498 = vmatprep.subr.mxu0 0.0
  %1499 = vmatpush1.msra.mxu0 0.0
  %1500 = vmatprep.subr.mxu0 0.0
  %1501 = vmatpush1.msra.mxu0 0.0
  %1502 = vmatprep.subr.mxu0 0.0
  %1503 = vmatpush1.msra.mxu0 0.0
  %1504 = vmatprep.subr.mxu0 0.0
  %1505 = vmatpush1.msra.mxu0 0.0
  %1506 = vmatprep.subr.mxu0 0.0
  %1507 = vmatpush1.msra.mxu0 0.0
  %1508 = vmatprep.subr.mxu0 0.0
  %1509 = vmatpush1.msra.mxu0 0.0
  %1510 = vmatprep.subr.mxu0 0.0
  %1511 = vmatpush1.msra.mxu0 0.0
  %1512 = vmatprep.subr.mxu0 0.0
  %1513 = vmatpush1.msra.mxu0 0.0
  %1514 = vmatprep.subr.mxu0 0.0
  %1515 = vmatpush1.msra.mxu0 0.0
  %1516 = vmatprep.subr.mxu0 0.0
  %1517 = vmatpush1.msra.mxu0 0.0
  %1518 = vmatprep.subr.mxu0 0.0
  %1519 = vmatpush1.msra.mxu0 0.0
  %1520 = vmatprep.subr.mxu0 0.0
  %1521 = vmatpush1.msra.mxu0 0.0
  %1522 = vmatprep.subr.mxu0 0.0
  %1523 = vmatpush1.msra.mxu0 0.0
  %1524 = vmatprep.subr.mxu0 0.0
  %1525 = vmatpush1.msra.mxu0 0.0
  %1526 = vmatprep.subr.mxu0 0.0
  %1527 = vmatpush1.msra.mxu0 0.0
  %1528 = vmatprep.subr.mxu0 0.0
  %1529 = vmatpush1.msra.mxu0 0.0
  %1530 = vmatprep.subr.mxu0 0.0
  %1531 = vmatpush1.msra.mxu0 0.0
  %1532 = vmatprep.subr.mxu0 0.0
  %1533 = vmatpush1.msra.mxu0 0.0
  %1534 = vmatprep.subr.mxu0 0.0
  %1535 = vmatpush1.msra.mxu0 0.0
  %1536 = vmatprep.subr.mxu0 0.0
  %1537 = vmatpush1.msra.mxu0 0.0
  %1538 = vmatprep.subr.mxu0 0.0
  %1539 = vmatpush1.msra.mxu0 0.0
  %1540 = vmatprep.subr.mxu0 0.0
  %1541 = vmatpush1.msra.mxu0 0.0
  %1542 = vmatprep.mubr.f32.mxu0 0.0
  %1543 = vmatmul.mubr.f32.gmra.mrb[0].mxu0 %v1476
  %v1544 = vpop.f32.mrb[0].mxu0
  %v1545 = vadd.f32 0.0, %v1544
  %v1546 = vpop.f32.mrb[0].mxu0
  %v1547 = vadd.f32 0.0, %v1546
  %1548 = vdwg.mxu0
  %v1549 = vadd.f32 %v1463, %v1545
  %v1550 = vadd.f32 %v1464, %v1547
  %1551 = vrot.lane.b32.xlu0 %v959, 112
  %v1552 = vpop.permute.xlu0 %1551
  %1553 = vrot.lane.b32.xlu0 %v960, 112
  %v1554 = vpop.permute.xlu0 %1553
  %v1555 = vsel %vm747, %v1552, %v1554
  %v1556 = vsel %vm747, %v1554, %v1552
  %v1557 = vmul.f32 %v1555, %v754
  %v1558 = vmul.f32 %v1556, %v758
  %s1559 = scalar_lea.vmem %s4, 56
  %v1560 = vld [vmem:[%s1559] sm:$0xff]
  %v1562 = vsel %vm980, %v1560, 0
  %1564 = vmatprep.subr.mxu0 %v1558
  %1565 = vmatpush1.msra.mxu0 %v1557
  %1566 = vmatprep.subr.mxu0 0.0
  %1567 = vmatpush1.msra.mxu0 0.0
  %1568 = vmatprep.subr.mxu0 0.0
  %1569 = vmatpush1.msra.mxu0 0.0
  %1570 = vmatprep.subr.mxu0 0.0
  %1571 = vmatpush1.msra.mxu0 0.0
  %1572 = vmatprep.subr.mxu0 0.0
  %1573 = vmatpush1.msra.mxu0 0.0
  %1574 = vmatprep.subr.mxu0 0.0
  %1575 = vmatpush1.msra.mxu0 0.0
  %1576 = vmatprep.subr.mxu0 0.0
  %1577 = vmatpush1.msra.mxu0 0.0
  %1578 = vmatprep.subr.mxu0 0.0
  %1579 = vmatpush1.msra.mxu0 0.0
  %1580 = vmatprep.subr.mxu0 0.0
  %1581 = vmatpush1.msra.mxu0 0.0
  %1582 = vmatprep.subr.mxu0 0.0
  %1583 = vmatpush1.msra.mxu0 0.0
  %1584 = vmatprep.subr.mxu0 0.0
  %1585 = vmatpush1.msra.mxu0 0.0
  %1586 = vmatprep.subr.mxu0 0.0
  %1587 = vmatpush1.msra.mxu0 0.0
  %1588 = vmatprep.subr.mxu0 0.0
  %1589 = vmatpush1.msra.mxu0 0.0
  %1590 = vmatprep.subr.mxu0 0.0
  %1591 = vmatpush1.msra.mxu0 0.0
  %1592 = vmatprep.subr.mxu0 0.0
  %1593 = vmatpush1.msra.mxu0 0.0
  %1594 = vmatprep.subr.mxu0 0.0
  %1595 = vmatpush1.msra.mxu0 0.0
  %1596 = vmatprep.subr.mxu0 0.0
  %1597 = vmatpush1.msra.mxu0 0.0
  %1598 = vmatprep.subr.mxu0 0.0
  %1599 = vmatpush1.msra.mxu0 0.0
  %1600 = vmatprep.subr.mxu0 0.0
  %1601 = vmatpush1.msra.mxu0 0.0
  %1602 = vmatprep.subr.mxu0 0.0
  %1603 = vmatpush1.msra.mxu0 0.0
  %1604 = vmatprep.subr.mxu0 0.0
  %1605 = vmatpush1.msra.mxu0 0.0
  %1606 = vmatprep.subr.mxu0 0.0
  %1607 = vmatpush1.msra.mxu0 0.0
  %1608 = vmatprep.subr.mxu0 0.0
  %1609 = vmatpush1.msra.mxu0 0.0
  %1610 = vmatprep.subr.mxu0 0.0
  %1611 = vmatpush1.msra.mxu0 0.0
  %1612 = vmatprep.subr.mxu0 0.0
  %1613 = vmatpush1.msra.mxu0 0.0
  %1614 = vmatprep.subr.mxu0 0.0
  %1615 = vmatpush1.msra.mxu0 0.0
  %1616 = vmatprep.subr.mxu0 0.0
  %1617 = vmatpush1.msra.mxu0 0.0
  %1618 = vmatprep.subr.mxu0 0.0
  %1619 = vmatpush1.msra.mxu0 0.0
  %1620 = vmatprep.subr.mxu0 0.0
  %1621 = vmatpush1.msra.mxu0 0.0
  %1622 = vmatprep.subr.mxu0 0.0
  %1623 = vmatpush1.msra.mxu0 0.0
  %1624 = vmatprep.subr.mxu0 0.0
  %1625 = vmatpush1.msra.mxu0 0.0
  %1626 = vmatprep.subr.mxu0 0.0
  %1627 = vmatpush1.msra.mxu0 0.0
  %1628 = vmatprep.mubr.f32.mxu0 0.0
  %1629 = vmatmul.mubr.f32.gmra.mrb[0].mxu0 %v1562
  %v1630 = vpop.f32.mrb[0].mxu0
  %v1631 = vadd.f32 0.0, %v1630
  %v1632 = vpop.f32.mrb[0].mxu0
  %v1633 = vadd.f32 0.0, %v1632
  %1634 = vdwg.mxu0
  %v1635 = vadd.f32 %v1549, %v1631
  %v1636 = vadd.f32 %v1550, %v1633
  %1637 = vrot.lane.b32.xlu0 %v959, 111
  %v1638 = vpop.permute.xlu0 %1637
  %1639 = vrot.lane.b32.xlu0 %v960, 111
  %v1640 = vpop.permute.xlu0 %1639
  %v1641 = vsel %vm851, %v1638, %v1640
  %v1642 = vsel %vm851, %v1640, %v1638
  %v1643 = vmul.f32 %v1641, %v858
  %v1644 = vmul.f32 %v1642, %v862
  %s1645 = scalar_lea.vmem %s4, 64
  %v1646 = vld [vmem:[%s1645] sm:$0xff]
  %v1648 = vsel %vm980, %v1646, 0
  %1650 = vmatprep.subr.mxu0 %v1644
  %1651 = vmatpush1.msra.mxu0 %v1643
  %1652 = vmatprep.subr.mxu0 0.0
  %1653 = vmatpush1.msra.mxu0 0.0
  %1654 = vmatprep.subr.mxu0 0.0
  %1655 = vmatpush1.msra.mxu0 0.0
  %1656 = vmatprep.subr.mxu0 0.0
  %1657 = vmatpush1.msra.mxu0 0.0
  %1658 = vmatprep.subr.mxu0 0.0
  %1659 = vmatpush1.msra.mxu0 0.0
  %1660 = vmatprep.subr.mxu0 0.0
  %1661 = vmatpush1.msra.mxu0 0.0
  %1662 = vmatprep.subr.mxu0 0.0
  %1663 = vmatpush1.msra.mxu0 0.0
  %1664 = vmatprep.subr.mxu0 0.0
  %1665 = vmatpush1.msra.mxu0 0.0
  %1666 = vmatprep.subr.mxu0 0.0
  %1667 = vmatpush1.msra.mxu0 0.0
  %1668 = vmatprep.subr.mxu0 0.0
  %1669 = vmatpush1.msra.mxu0 0.0
  %1670 = vmatprep.subr.mxu0 0.0
  %1671 = vmatpush1.msra.mxu0 0.0
  %1672 = vmatprep.subr.mxu0 0.0
  %1673 = vmatpush1.msra.mxu0 0.0
  %1674 = vmatprep.subr.mxu0 0.0
  %1675 = vmatpush1.msra.mxu0 0.0
  %1676 = vmatprep.subr.mxu0 0.0
  %1677 = vmatpush1.msra.mxu0 0.0
  %1678 = vmatprep.subr.mxu0 0.0
  %1679 = vmatpush1.msra.mxu0 0.0
  %1680 = vmatprep.subr.mxu0 0.0
  %1681 = vmatpush1.msra.mxu0 0.0
  %1682 = vmatprep.subr.mxu0 0.0
  %1683 = vmatpush1.msra.mxu0 0.0
  %1684 = vmatprep.subr.mxu0 0.0
  %1685 = vmatpush1.msra.mxu0 0.0
  %1686 = vmatprep.subr.mxu0 0.0
  %1687 = vmatpush1.msra.mxu0 0.0
  %1688 = vmatprep.subr.mxu0 0.0
  %1689 = vmatpush1.msra.mxu0 0.0
  %1690 = vmatprep.subr.mxu0 0.0
  %1691 = vmatpush1.msra.mxu0 0.0
  %1692 = vmatprep.subr.mxu0 0.0
  %1693 = vmatpush1.msra.mxu0 0.0
  %1694 = vmatprep.subr.mxu0 0.0
  %1695 = vmatpush1.msra.mxu0 0.0
  %1696 = vmatprep.subr.mxu0 0.0
  %1697 = vmatpush1.msra.mxu0 0.0
  %1698 = vmatprep.subr.mxu0 0.0
  %1699 = vmatpush1.msra.mxu0 0.0
  %1700 = vmatprep.subr.mxu0 0.0
  %1701 = vmatpush1.msra.mxu0 0.0
  %1702 = vmatprep.subr.mxu0 0.0
  %1703 = vmatpush1.msra.mxu0 0.0
  %1704 = vmatprep.subr.mxu0 0.0
  %1705 = vmatpush1.msra.mxu0 0.0
  %1706 = vmatprep.subr.mxu0 0.0
  %1707 = vmatpush1.msra.mxu0 0.0
  %1708 = vmatprep.subr.mxu0 0.0
  %1709 = vmatpush1.msra.mxu0 0.0
  %1710 = vmatprep.subr.mxu0 0.0
  %1711 = vmatpush1.msra.mxu0 0.0
  %1712 = vmatprep.subr.mxu0 0.0
  %1713 = vmatpush1.msra.mxu0 0.0
  %1714 = vmatprep.mubr.f32.mxu0 0.0
  %1715 = vmatmul.mubr.f32.gmra.mrb[0].mxu0 %v1648
  %v1716 = vpop.f32.mrb[0].mxu0
  %v1717 = vadd.f32 0.0, %v1716
  %v1718 = vpop.f32.mrb[0].mxu0
  %v1719 = vadd.f32 0.0, %v1718
  %1720 = vdwg.mxu0
  %v1721 = vadd.f32 %v1635, %v1717
  %v1722 = vadd.f32 %v1636, %v1719
  %v1723 = vld [vmem:[%s5] sm:$0xff]
  %1725 = vset.pattern.permute.xlu0 0
  %1726 = vperm.xlu0 %1725, %v1723
  %v1727 = vpop.permute.xlu0 %1726
  %v1729 = vadd.f32 %v1721, %v1727
  %v1730 = vadd.f32 %v1722, %v1727
  %v1731 = vmax.f32 %v1729, 0.0
  %v1732 = vmax.f32 %v1730, 0.0
  %1733 = vst [vmem:[%s6] sm:$0xff] %v1731
  %1734 = vst [vmem:[%s6 + $0x8] sm:$0xff] %v1732
  %s1735 = scalar_lea.vmem %s0, 8
  %v1736 = vld [vmem:[%s1735] sm:$0xff]
  %v1738 = vcombine.high %v1736, %v1736
  %1740 = vrot.lane.b32.xlu0 %v1736, 17
  %v1741 = vpop.permute.xlu0 %1740
  %1742 = vrot.lane.b32.xlu0 %v1738, 17
  %v1743 = vpop.permute.xlu0 %1742
  %v1744 = vsel %vm44, %v1741, %v1743
  %v1745 = vsel %vm44, %v1743, %v1741
  %v1746 = vmul.f32 %v1745, %v51
  %v1747 = vmul.f32 %v1744, %v55
  %v1748 = vld [vmem:[%s2] sm:$0xff]
  %1749 = vrot.lane.b32.xlu0 %v1736, 16
  %v1750 = vpop.permute.xlu0 %1749
  %1751 = vrot.lane.b32.xlu0 %v1738, 16
  %v1752 = vpop.permute.xlu0 %1751
  %v1753 = vsel %vm65, %v1750, %v1752
  %v1754 = vsel %vm65, %v1752, %v1750
  %v1755 = vmul.f32 %v1754, %v72
  %v1756 = vmul.f32 %v1753, %v76
  %v1757 = vld [vmem:[%s81] sm:$0xff]
  %v1759 = vsel %vm83, %v1757, 0
  %v1762 = vsel %vm87, %v1755, 0
  %v1765 = vsel %vm87, %v1756, 0
  %1767 = vmatprep.subr.mxu0 %v1765
  %1768 = vmatpush1.msra.mxu0 %v1762
  %1769 = vmatprep.subr.mxu0 0.0
  %1770 = vmatpush1.msra.mxu0 0.0
  %1771 = vmatprep.subr.mxu0 0.0
  %1772 = vmatpush1.msra.mxu0 0.0
  %1773 = vmatprep.subr.mxu0 0.0
  %1774 = vmatpush1.msra.mxu0 0.0
  %1775 = vmatprep.subr.mxu0 0.0
  %1776 = vmatpush1.msra.mxu0 0.0
  %1777 = vmatprep.subr.mxu0 0.0
  %1778 = vmatpush1.msra.mxu0 0.0
  %1779 = vmatprep.subr.mxu0 0.0
  %1780 = vmatpush1.msra.mxu0 0.0
  %1781 = vmatprep.subr.mxu0 0.0
  %1782 = vmatpush1.msra.mxu0 0.0
  %1783 = vmatprep.subr.mxu0 0.0
  %1784 = vmatpush1.msra.mxu0 0.0
  %1785 = vmatprep.subr.mxu0 0.0
  %1786 = vmatpush1.msra.mxu0 0.0
  %1787 = vmatprep.subr.mxu0 0.0
  %1788 = vmatpush1.msra.mxu0 0.0
  %1789 = vmatprep.subr.mxu0 0.0
  %1790 = vmatpush1.msra.mxu0 0.0
  %1791 = vmatprep.subr.mxu0 0.0
  %1792 = vmatpush1.msra.mxu0 0.0
  %1793 = vmatprep.subr.mxu0 0.0
  %1794 = vmatpush1.msra.mxu0 0.0
  %1795 = vmatprep.subr.mxu0 0.0
  %1796 = vmatpush1.msra.mxu0 0.0
  %1797 = vmatprep.subr.mxu0 0.0
  %1798 = vmatpush1.msra.mxu0 0.0
  %1799 = vmatprep.subr.mxu0 0.0
  %1800 = vmatpush1.msra.mxu0 0.0
  %1801 = vmatprep.subr.mxu0 0.0
  %1802 = vmatpush1.msra.mxu0 0.0
  %1803 = vmatprep.subr.mxu0 0.0
  %1804 = vmatpush1.msra.mxu0 0.0
  %1805 = vmatprep.subr.mxu0 0.0
  %1806 = vmatpush1.msra.mxu0 0.0
  %1807 = vmatprep.subr.mxu0 0.0
  %1808 = vmatpush1.msra.mxu0 0.0
  %1809 = vmatprep.subr.mxu0 0.0
  %1810 = vmatpush1.msra.mxu0 0.0
  %1811 = vmatprep.subr.mxu0 0.0
  %1812 = vmatpush1.msra.mxu0 0.0
  %1813 = vmatprep.subr.mxu0 0.0
  %1814 = vmatpush1.msra.mxu0 0.0
  %1815 = vmatprep.subr.mxu0 0.0
  %1816 = vmatpush1.msra.mxu0 0.0
  %1817 = vmatprep.subr.mxu0 0.0
  %1818 = vmatpush1.msra.mxu0 0.0
  %1819 = vmatprep.subr.mxu0 0.0
  %1820 = vmatpush1.msra.mxu0 0.0
  %1821 = vmatprep.subr.mxu0 0.0
  %1822 = vmatpush1.msra.mxu0 0.0
  %1823 = vmatprep.subr.mxu0 0.0
  %1824 = vmatpush1.msra.mxu0 0.0
  %1825 = vmatprep.subr.mxu0 0.0
  %1826 = vmatpush1.msra.mxu0 0.0
  %1827 = vmatprep.subr.mxu0 0.0
  %1828 = vmatpush1.msra.mxu0 0.0
  %1829 = vmatprep.subr.mxu0 0.0
  %1830 = vmatpush1.msra.mxu0 0.0
  %1831 = vmatprep.mubr.f32.mxu0 0.0
  %1832 = vmatmul.mubr.f32.gmra.mrb[0].mxu0 %v1759
  %v1833 = vpop.f32.mrb[0].mxu0
  %v1834 = vadd.f32 0.0, %v1833
  %v1835 = vpop.f32.mrb[0].mxu0
  %v1836 = vadd.f32 0.0, %v1835
  %1837 = vdwg.mxu0
  %v1839 = vsel %vm83, %v1748, 0
  %v1842 = vsel %vm87, %v1746, 0
  %v1845 = vsel %vm87, %v1747, 0
  %1847 = vmatprep.subr.mxu0 %v1845
  %1848 = vmatpush1.msra.mxu0 %v1842
  %1849 = vmatprep.subr.mxu0 0.0
  %1850 = vmatpush1.msra.mxu0 0.0
  %1851 = vmatprep.subr.mxu0 0.0
  %1852 = vmatpush1.msra.mxu0 0.0
  %1853 = vmatprep.subr.mxu0 0.0
  %1854 = vmatpush1.msra.mxu0 0.0
  %1855 = vmatprep.subr.mxu0 0.0
  %1856 = vmatpush1.msra.mxu0 0.0
  %1857 = vmatprep.subr.mxu0 0.0
  %1858 = vmatpush1.msra.mxu0 0.0
  %1859 = vmatprep.subr.mxu0 0.0
  %1860 = vmatpush1.msra.mxu0 0.0
  %1861 = vmatprep.subr.mxu0 0.0
  %1862 = vmatpush1.msra.mxu0 0.0
  %1863 = vmatprep.subr.mxu0 0.0
  %1864 = vmatpush1.msra.mxu0 0.0
  %1865 = vmatprep.subr.mxu0 0.0
  %1866 = vmatpush1.msra.mxu0 0.0
  %1867 = vmatprep.subr.mxu0 0.0
  %1868 = vmatpush1.msra.mxu0 0.0
  %1869 = vmatprep.subr.mxu0 0.0
  %1870 = vmatpush1.msra.mxu0 0.0
  %1871 = vmatprep.subr.mxu0 0.0
  %1872 = vmatpush1.msra.mxu0 0.0
  %1873 = vmatprep.subr.mxu0 0.0
  %1874 = vmatpush1.msra.mxu0 0.0
  %1875 = vmatprep.subr.mxu0 0.0
  %1876 = vmatpush1.msra.mxu0 0.0
  %1877 = vmatprep.subr.mxu0 0.0
  %1878 = vmatpush1.msra.mxu0 0.0
  %1879 = vmatprep.subr.mxu0 0.0
  %1880 = vmatpush1.msra.mxu0 0.0
  %1881 = vmatprep.subr.mxu0 0.0
  %1882 = vmatpush1.msra.mxu0 0.0
  %1883 = vmatprep.subr.mxu0 0.0
  %1884 = vmatpush1.msra.mxu0 0.0
  %1885 = vmatprep.subr.mxu0 0.0
  %1886 = vmatpush1.msra.mxu0 0.0
  %1887 = vmatprep.subr.mxu0 0.0
  %1888 = vmatpush1.msra.mxu0 0.0
  %1889 = vmatprep.subr.mxu0 0.0
  %1890 = vmatpush1.msra.mxu0 0.0
  %1891 = vmatprep.subr.mxu0 0.0
  %1892 = vmatpush1.msra.mxu0 0.0
  %1893 = vmatprep.subr.mxu0 0.0
  %1894 = vmatpush1.msra.mxu0 0.0
  %1895 = vmatprep.subr.mxu0 0.0
  %1896 = vmatpush1.msra.mxu0 0.0
  %1897 = vmatprep.subr.mxu0 0.0
  %1898 = vmatpush1.msra.mxu0 0.0
  %1899 = vmatprep.subr.mxu0 0.0
  %1900 = vmatpush1.msra.mxu0 0.0
  %1901 = vmatprep.subr.mxu0 0.0
  %1902 = vmatpush1.msra.mxu0 0.0
  %1903 = vmatprep.subr.mxu0 0.0
  %1904 = vmatpush1.msra.mxu0 0.0
  %1905 = vmatprep.subr.mxu0 0.0
  %1906 = vmatpush1.msra.mxu0 0.0
  %1907 = vmatprep.subr.mxu0 0.0
  %1908 = vmatpush1.msra.mxu0 0.0
  %1909 = vmatprep.subr.mxu0 0.0
  %1910 = vmatpush1.msra.mxu0 0.0
  %1911 = vmatprep.mubr.f32.mxu0 0.0
  %1912 = vmatmul.mubr.f32.gmra.mrb[0].mxu0 %v1839
  %v1913 = vpop.f32.mrb[0].mxu0
  %v1914 = vadd.f32 %v1834, %v1913
  %v1915 = vpop.f32.mrb[0].mxu0
  %v1916 = vadd.f32 %v1836, %v1915
  %1917 = vdwg.mxu0
  %1918 = vrot.lane.b32.xlu0 %v1736, 15
  %v1919 = vpop.permute.xlu0 %1918
  %1920 = vrot.lane.b32.xlu0 %v1738, 15
  %v1921 = vpop.permute.xlu0 %1920
  %v1922 = vsel %vm249, %v1919, %v1921
  %v1923 = vsel %vm249, %v1921, %v1919
  %v1924 = vmul.f32 %v1923, %v256
  %v1925 = vmul.f32 %v1922, %v260
  %v1926 = vld [vmem:[%s265] sm:$0xff]
  %v1928 = vsel %vm83, %v1926, 0
  %v1931 = vsel %vm87, %v1924, 0
  %v1934 = vsel %vm87, %v1925, 0
  %1936 = vmatprep.subr.mxu0 %v1934
  %1937 = vmatpush1.msra.mxu0 %v1931
  %1938 = vmatprep.subr.mxu0 0.0
  %1939 = vmatpush1.msra.mxu0 0.0
  %1940 = vmatprep.subr.mxu0 0.0
  %1941 = vmatpush1.msra.mxu0 0.0
  %1942 = vmatprep.subr.mxu0 0.0
  %1943 = vmatpush1.msra.mxu0 0.0
  %1944 = vmatprep.subr.mxu0 0.0
  %1945 = vmatpush1.msra.mxu0 0.0
  %1946 = vmatprep.subr.mxu0 0.0
  %1947 = vmatpush1.msra.mxu0 0.0
  %1948 = vmatprep.subr.mxu0 0.0
  %1949 = vmatpush1.msra.mxu0 0.0
  %1950 = vmatprep.subr.mxu0 0.0
  %1951 = vmatpush1.msra.mxu0 0.0
  %1952 = vmatprep.subr.mxu0 0.0
  %1953 = vmatpush1.msra.mxu0 0.0
  %1954 = vmatprep.subr.mxu0 0.0
  %1955 = vmatpush1.msra.mxu0 0.0
  %1956 = vmatprep.subr.mxu0 0.0
  %1957 = vmatpush1.msra.mxu0 0.0
  %1958 = vmatprep.subr.mxu0 0.0
  %1959 = vmatpush1.msra.mxu0 0.0
  %1960 = vmatprep.subr.mxu0 0.0
  %1961 = vmatpush1.msra.mxu0 0.0
  %1962 = vmatprep.subr.mxu0 0.0
  %1963 = vmatpush1.msra.mxu0 0.0
  %1964 = vmatprep.subr.mxu0 0.0
  %1965 = vmatpush1.msra.mxu0 0.0
  %1966 = vmatprep.subr.mxu0 0.0
  %1967 = vmatpush1.msra.mxu0 0.0
  %1968 = vmatprep.subr.mxu0 0.0
  %1969 = vmatpush1.msra.mxu0 0.0
  %1970 = vmatprep.subr.mxu0 0.0
  %1971 = vmatpush1.msra.mxu0 0.0
  %1972 = vmatprep.subr.mxu0 0.0
  %1973 = vmatpush1.msra.mxu0 0.0
  %1974 = vmatprep.subr.mxu0 0.0
  %1975 = vmatpush1.msra.mxu0 0.0
  %1976 = vmatprep.subr.mxu0 0.0
  %1977 = vmatpush1.msra.mxu0 0.0
  %1978 = vmatprep.subr.mxu0 0.0
  %1979 = vmatpush1.msra.mxu0 0.0
  %1980 = vmatprep.subr.mxu0 0.0
  %1981 = vmatpush1.msra.mxu0 0.0
  %1982 = vmatprep.subr.mxu0 0.0
  %1983 = vmatpush1.msra.mxu0 0.0
  %1984 = vmatprep.subr.mxu0 0.0
  %1985 = vmatpush1.msra.mxu0 0.0
  %1986 = vmatprep.subr.mxu0 0.0
  %1987 = vmatpush1.msra.mxu0 0.0
  %1988 = vmatprep.subr.mxu0 0.0
  %1989 = vmatpush1.msra.mxu0 0.0
  %1990 = vmatprep.subr.mxu0 0.0
  %1991 = vmatpush1.msra.mxu0 0.0
  %1992 = vmatprep.subr.mxu0 0.0
  %1993 = vmatpush1.msra.mxu0 0.0
  %1994 = vmatprep.subr.mxu0 0.0
  %1995 = vmatpush1.msra.mxu0 0.0
  %1996 = vmatprep.subr.mxu0 0.0
  %1997 = vmatpush1.msra.mxu0 0.0
  %1998 = vmatprep.subr.mxu0 0.0
  %1999 = vmatpush1.msra.mxu0 0.0
  %2000 = vmatprep.mubr.f32.mxu0 0.0
  %2001 = vmatmul.mubr.f32.gmra.mrb[0].mxu0 %v1928
  %v2002 = vpop.f32.mrb[0].mxu0
  %v2003 = vadd.f32 0.0, %v2002
  %v2004 = vpop.f32.mrb[0].mxu0
  %v2005 = vadd.f32 0.0, %v2004
  %2006 = vdwg.mxu0
  %v2007 = vadd.f32 %v1914, %v2003
  %v2008 = vadd.f32 %v1916, %v2005
  %2009 = vrot.lane.b32.xlu0 %v1736, 1
  %v2010 = vpop.permute.xlu0 %2009
  %2011 = vrot.lane.b32.xlu0 %v1738, 1
  %v2012 = vpop.permute.xlu0 %2011
  %v2013 = vsel %vm353, %v2010, %v2012
  %v2014 = vsel %vm353, %v2012, %v2010
  %v2015 = vmul.f32 %v2014, %v360
  %v2016 = vmul.f32 %v2013, %v364
  %v2017 = vld [vmem:[%s369] sm:$0xff]
  %v2019 = vsel %vm83, %v2017, 0
  %v2022 = vsel %vm87, %v2015, 0
  %v2025 = vsel %vm87, %v2016, 0
  %2027 = vmatprep.subr.mxu0 %v2025
  %2028 = vmatpush1.msra.mxu0 %v2022
  %2029 = vmatprep.subr.mxu0 0.0
  %2030 = vmatpush1.msra.mxu0 0.0
  %2031 = vmatprep.subr.mxu0 0.0
  %2032 = vmatpush1.msra.mxu0 0.0
  %2033 = vmatprep.subr.mxu0 0.0
  %2034 = vmatpush1.msra.mxu0 0.0
  %2035 = vmatprep.subr.mxu0 0.0
  %2036 = vmatpush1.msra.mxu0 0.0
  %2037 = vmatprep.subr.mxu0 0.0
  %2038 = vmatpush1.msra.mxu0 0.0
  %2039 = vmatprep.subr.mxu0 0.0
  %2040 = vmatpush1.msra.mxu0 0.0
  %2041 = vmatprep.subr.mxu0 0.0
  %2042 = vmatpush1.msra.mxu0 0.0
  %2043 = vmatprep.subr.mxu0 0.0
  %2044 = vmatpush1.msra.mxu0 0.0
  %2045 = vmatprep.subr.mxu0 0.0
  %2046 = vmatpush1.msra.mxu0 0.0
  %2047 = vmatprep.subr.mxu0 0.0
  %2048 = vmatpush1.msra.mxu0 0.0
  %2049 = vmatprep.subr.mxu0 0.0
  %2050 = vmatpush1.msra.mxu0 0.0
  %2051 = vmatprep.subr.mxu0 0.0
  %2052 = vmatpush1.msra.mxu0 0.0
  %2053 = vmatprep.subr.mxu0 0.0
  %2054 = vmatpush1.msra.mxu0 0.0
  %2055 = vmatprep.subr.mxu0 0.0
  %2056 = vmatpush1.msra.mxu0 0.0
  %2057 = vmatprep.subr.mxu0 0.0
  %2058 = vmatpush1.msra.mxu0 0.0
  %2059 = vmatprep.subr.mxu0 0.0
  %2060 = vmatpush1.msra.mxu0 0.0
  %2061 = vmatprep.subr.mxu0 0.0
  %2062 = vmatpush1.msra.mxu0 0.0
  %2063 = vmatprep.subr.mxu0 0.0
  %2064 = vmatpush1.msra.mxu0 0.0
  %2065 = vmatprep.subr.mxu0 0.0
  %2066 = vmatpush1.msra.mxu0 0.0
  %2067 = vmatprep.subr.mxu0 0.0
  %2068 = vmatpush1.msra.mxu0 0.0
  %2069 = vmatprep.subr.mxu0 0.0
  %2070 = vmatpush1.msra.mxu0 0.0
  %2071 = vmatprep.subr.mxu0 0.0
  %2072 = vmatpush1.msra.mxu0 0.0
  %2073 = vmatprep.subr.mxu0 0.0
  %2074 = vmatpush1.msra.mxu0 0.0
  %2075 = vmatprep.subr.mxu0 0.0
  %2076 = vmatpush1.msra.mxu0 0.0
  %2077 = vmatprep.subr.mxu0 0.0
  %2078 = vmatpush1.msra.mxu0 0.0
  %2079 = vmatprep.subr.mxu0 0.0
  %2080 = vmatpush1.msra.mxu0 0.0
  %2081 = vmatprep.subr.mxu0 0.0
  %2082 = vmatpush1.msra.mxu0 0.0
  %2083 = vmatprep.subr.mxu0 0.0
  %2084 = vmatpush1.msra.mxu0 0.0
  %2085 = vmatprep.subr.mxu0 0.0
  %2086 = vmatpush1.msra.mxu0 0.0
  %2087 = vmatprep.subr.mxu0 0.0
  %2088 = vmatpush1.msra.mxu0 0.0
  %2089 = vmatprep.subr.mxu0 0.0
  %2090 = vmatpush1.msra.mxu0 0.0
  %2091 = vmatprep.mubr.f32.mxu0 0.0
  %2092 = vmatmul.mubr.f32.gmra.mrb[0].mxu0 %v2019
  %v2093 = vpop.f32.mrb[0].mxu0
  %v2094 = vadd.f32 0.0, %v2093
  %v2095 = vpop.f32.mrb[0].mxu0
  %v2096 = vadd.f32 0.0, %v2095
  %2097 = vdwg.mxu0
  %v2098 = vadd.f32 %v2007, %v2094
  %v2099 = vadd.f32 %v2008, %v2096
  %v2100 = vld [vmem:[%s453] sm:$0xff]
  %v2102 = vsel %vm83, %v2100, 0
  %v2104 = vsel %vm87, %v1736, 0
  %v2106 = vsel %vm87, %v1738, 0
  %2108 = vmatprep.subr.mxu0 %v2106
  %2109 = vmatpush1.msra.mxu0 %v2104
  %2110 = vmatprep.subr.mxu0 0.0
  %2111 = vmatpush1.msra.mxu0 0.0
  %2112 = vmatprep.subr.mxu0 0.0
  %2113 = vmatpush1.msra.mxu0 0.0
  %2114 = vmatprep.subr.mxu0 0.0
  %2115 = vmatpush1.msra.mxu0 0.0
  %2116 = vmatprep.subr.mxu0 0.0
  %2117 = vmatpush1.msra.mxu0 0.0
  %2118 = vmatprep.subr.mxu0 0.0
  %2119 = vmatpush1.msra.mxu0 0.0
  %2120 = vmatprep.subr.mxu0 0.0
  %2121 = vmatpush1.msra.mxu0 0.0
  %2122 = vmatprep.subr.mxu0 0.0
  %2123 = vmatpush1.msra.mxu0 0.0
  %2124 = vmatprep.subr.mxu0 0.0
  %2125 = vmatpush1.msra.mxu0 0.0
  %2126 = vmatprep.subr.mxu0 0.0
  %2127 = vmatpush1.msra.mxu0 0.0
  %2128 = vmatprep.subr.mxu0 0.0
  %2129 = vmatpush1.msra.mxu0 0.0
  %2130 = vmatprep.subr.mxu0 0.0
  %2131 = vmatpush1.msra.mxu0 0.0
  %2132 = vmatprep.subr.mxu0 0.0
  %2133 = vmatpush1.msra.mxu0 0.0
  %2134 = vmatprep.subr.mxu0 0.0
  %2135 = vmatpush1.msra.mxu0 0.0
  %2136 = vmatprep.subr.mxu0 0.0
  %2137 = vmatpush1.msra.mxu0 0.0
  %2138 = vmatprep.subr.mxu0 0.0
  %2139 = vmatpush1.msra.mxu0 0.0
  %2140 = vmatprep.subr.mxu0 0.0
  %2141 = vmatpush1.msra.mxu0 0.0
  %2142 = vmatprep.subr.mxu0 0.0
  %2143 = vmatpush1.msra.mxu0 0.0
  %2144 = vmatprep.subr.mxu0 0.0
  %2145 = vmatpush1.msra.mxu0 0.0
  %2146 = vmatprep.subr.mxu0 0.0
  %2147 = vmatpush1.msra.mxu0 0.0
  %2148 = vmatprep.subr.mxu0 0.0
  %2149 = vmatpush1.msra.mxu0 0.0
  %2150 = vmatprep.subr.mxu0 0.0
  %2151 = vmatpush1.msra.mxu0 0.0
  %2152 = vmatprep.subr.mxu0 0.0
  %2153 = vmatpush1.msra.mxu0 0.0
  %2154 = vmatprep.subr.mxu0 0.0
  %2155 = vmatpush1.msra.mxu0 0.0
  %2156 = vmatprep.subr.mxu0 0.0
  %2157 = vmatpush1.msra.mxu0 0.0
  %2158 = vmatprep.subr.mxu0 0.0
  %2159 = vmatpush1.msra.mxu0 0.0
  %2160 = vmatprep.subr.mxu0 0.0
  %2161 = vmatpush1.msra.mxu0 0.0
  %2162 = vmatprep.subr.mxu0 0.0
  %2163 = vmatpush1.msra.mxu0 0.0
  %2164 = vmatprep.subr.mxu0 0.0
  %2165 = vmatpush1.msra.mxu0 0.0
  %2166 = vmatprep.subr.mxu0 0.0
  %2167 = vmatpush1.msra.mxu0 0.0
  %2168 = vmatprep.subr.mxu0 0.0
  %2169 = vmatpush1.msra.mxu0 0.0
  %2170 = vmatprep.subr.mxu0 0.0
  %2171 = vmatpush1.msra.mxu0 0.0
  %2172 = vmatprep.mubr.f32.mxu0 0.0
  %2173 = vmatmul.mubr.f32.gmra.mrb[0].mxu0 %v2102
  %v2174 = vpop.f32.mrb[0].mxu0
  %v2175 = vadd.f32 0.0, %v2174
  %v2176 = vpop.f32.mrb[0].mxu0
  %v2177 = vadd.f32 0.0, %v2176
  %2178 = vdwg.mxu0
  %v2179 = vadd.f32 %v2098, %v2175
  %v2180 = vadd.f32 %v2099, %v2177
  %2181 = vrot.lane.b32.xlu0 %v1736, 127
  %v2182 = vpop.permute.xlu0 %2181
  %2183 = vrot.lane.b32.xlu0 %v1738, 127
  %v2184 = vpop.permute.xlu0 %2183
  %v2185 = vsel %vm539, %v2182, %v2184
  %v2186 = vsel %vm539, %v2184, %v2182
  %v2187 = vmul.f32 %v2185, %v546
  %v2188 = vmul.f32 %v2186, %v550
  %v2189 = vld [vmem:[%s555] sm:$0xff]
  %v2191 = vsel %vm83, %v2189, 0
  %v2194 = vsel %vm87, %v2187, 0
  %v2197 = vsel %vm87, %v2188, 0
  %2199 = vmatprep.subr.mxu0 %v2197
  %2200 = vmatpush1.msra.mxu0 %v2194
  %2201 = vmatprep.subr.mxu0 0.0
  %2202 = vmatpush1.msra.mxu0 0.0
  %2203 = vmatprep.subr.mxu0 0.0
  %2204 = vmatpush1.msra.mxu0 0.0
  %2205 = vmatprep.subr.mxu0 0.0
  %2206 = vmatpush1.msra.mxu0 0.0
  %2207 = vmatprep.subr.mxu0 0.0
  %2208 = vmatpush1.msra.mxu0 0.0
  %2209 = vmatprep.subr.mxu0 0.0
  %2210 = vmatpush1.msra.mxu0 0.0
  %2211 = vmatprep.subr.mxu0 0.0
  %2212 = vmatpush1.msra.mxu0 0.0
  %2213 = vmatprep.subr.mxu0 0.0
  %2214 = vmatpush1.msra.mxu0 0.0
  %2215 = vmatprep.subr.mxu0 0.0
  %2216 = vmatpush1.msra.mxu0 0.0
  %2217 = vmatprep.subr.mxu0 0.0
  %2218 = vmatpush1.msra.mxu0 0.0
  %2219 = vmatprep.subr.mxu0 0.0
  %2220 = vmatpush1.msra.mxu0 0.0
  %2221 = vmatprep.subr.mxu0 0.0
  %2222 = vmatpush1.msra.mxu0 0.0
  %2223 = vmatprep.subr.mxu0 0.0
  %2224 = vmatpush1.msra.mxu0 0.0
  %2225 = vmatprep.subr.mxu0 0.0
  %2226 = vmatpush1.msra.mxu0 0.0
  %2227 = vmatprep.subr.mxu0 0.0
  %2228 = vmatpush1.msra.mxu0 0.0
  %2229 = vmatprep.subr.mxu0 0.0
  %2230 = vmatpush1.msra.mxu0 0.0
  %2231 = vmatprep.subr.mxu0 0.0
  %2232 = vmatpush1.msra.mxu0 0.0
  %2233 = vmatprep.subr.mxu0 0.0
  %2234 = vmatpush1.msra.mxu0 0.0
  %2235 = vmatprep.subr.mxu0 0.0
  %2236 = vmatpush1.msra.mxu0 0.0
  %2237 = vmatprep.subr.mxu0 0.0
  %2238 = vmatpush1.msra.mxu0 0.0
  %2239 = vmatprep.subr.mxu0 0.0
  %2240 = vmatpush1.msra.mxu0 0.0
  %2241 = vmatprep.subr.mxu0 0.0
  %2242 = vmatpush1.msra.mxu0 0.0
  %2243 = vmatprep.subr.mxu0 0.0
  %2244 = vmatpush1.msra.mxu0 0.0
  %2245 = vmatprep.subr.mxu0 0.0
  %2246 = vmatpush1.msra.mxu0 0.0
  %2247 = vmatprep.subr.mxu0 0.0
  %2248 = vmatpush1.msra.mxu0 0.0
  %2249 = vmatprep.subr.mxu0 0.0
  %2250 = vmatpush1.msra.mxu0 0.0
  %2251 = vmatprep.subr.mxu0 0.0
  %2252 = vmatpush1.msra.mxu0 0.0
  %2253 = vmatprep.subr.mxu0 0.0
  %2254 = vmatpush1.msra.mxu0 0.0
  %2255 = vmatprep.subr.mxu0 0.0
  %2256 = vmatpush1.msra.mxu0 0.0
  %2257 = vmatprep.subr.mxu0 0.0
  %2258 = vmatpush1.msra.mxu0 0.0
  %2259 = vmatprep.subr.mxu0 0.0
  %2260 = vmatpush1.msra.mxu0 0.0
  %2261 = vmatprep.subr.mxu0 0.0
  %2262 = vmatpush1.msra.mxu0 0.0
  %2263 = vmatprep.mubr.f32.mxu0 0.0
  %2264 = vmatmul.mubr.f32.gmra.mrb[0].mxu0 %v2191
  %v2265 = vpop.f32.mrb[0].mxu0
  %v2266 = vadd.f32 0.0, %v2265
  %v2267 = vpop.f32.mrb[0].mxu0
  %v2268 = vadd.f32 0.0, %v2267
  %2269 = vdwg.mxu0
  %v2270 = vadd.f32 %v2179, %v2266
  %v2271 = vadd.f32 %v2180, %v2268
  %2272 = vrot.lane.b32.xlu0 %v1736, 113
  %v2273 = vpop.permute.xlu0 %2272
  %2274 = vrot.lane.b32.xlu0 %v1738, 113
  %v2275 = vpop.permute.xlu0 %2274
  %v2276 = vsel %vm643, %v2273, %v2275
  %v2277 = vsel %vm643, %v2275, %v2273
  %v2278 = vmul.f32 %v2276, %v650
  %v2279 = vmul.f32 %v2277, %v654
  %v2280 = vld [vmem:[%s659] sm:$0xff]
  %v2282 = vsel %vm83, %v2280, 0
  %v2285 = vsel %vm87, %v2278, 0
  %v2288 = vsel %vm87, %v2279, 0
  %2290 = vmatprep.subr.mxu0 %v2288
  %2291 = vmatpush1.msra.mxu0 %v2285
  %2292 = vmatprep.subr.mxu0 0.0
  %2293 = vmatpush1.msra.mxu0 0.0
  %2294 = vmatprep.subr.mxu0 0.0
  %2295 = vmatpush1.msra.mxu0 0.0
  %2296 = vmatprep.subr.mxu0 0.0
  %2297 = vmatpush1.msra.mxu0 0.0
  %2298 = vmatprep.subr.mxu0 0.0
  %2299 = vmatpush1.msra.mxu0 0.0
  %2300 = vmatprep.subr.mxu0 0.0
  %2301 = vmatpush1.msra.mxu0 0.0
  %2302 = vmatprep.subr.mxu0 0.0
  %2303 = vmatpush1.msra.mxu0 0.0
  %2304 = vmatprep.subr.mxu0 0.0
  %2305 = vmatpush1.msra.mxu0 0.0
  %2306 = vmatprep.subr.mxu0 0.0
  %2307 = vmatpush1.msra.mxu0 0.0
  %2308 = vmatprep.subr.mxu0 0.0
  %2309 = vmatpush1.msra.mxu0 0.0
  %2310 = vmatprep.subr.mxu0 0.0
  %2311 = vmatpush1.msra.mxu0 0.0
  %2312 = vmatprep.subr.mxu0 0.0
  %2313 = vmatpush1.msra.mxu0 0.0
  %2314 = vmatprep.subr.mxu0 0.0
  %2315 = vmatpush1.msra.mxu0 0.0
  %2316 = vmatprep.subr.mxu0 0.0
  %2317 = vmatpush1.msra.mxu0 0.0
  %2318 = vmatprep.subr.mxu0 0.0
  %2319 = vmatpush1.msra.mxu0 0.0
  %2320 = vmatprep.subr.mxu0 0.0
  %2321 = vmatpush1.msra.mxu0 0.0
  %2322 = vmatprep.subr.mxu0 0.0
  %2323 = vmatpush1.msra.mxu0 0.0
  %2324 = vmatprep.subr.mxu0 0.0
  %2325 = vmatpush1.msra.mxu0 0.0
  %2326 = vmatprep.subr.mxu0 0.0
  %2327 = vmatpush1.msra.mxu0 0.0
  %2328 = vmatprep.subr.mxu0 0.0
  %2329 = vmatpush1.msra.mxu0 0.0
  %2330 = vmatprep.subr.mxu0 0.0
  %2331 = vmatpush1.msra.mxu0 0.0
  %2332 = vmatprep.subr.mxu0 0.0
  %2333 = vmatpush1.msra.mxu0 0.0
  %2334 = vmatprep.subr.mxu0 0.0
  %2335 = vmatpush1.msra.mxu0 0.0
  %2336 = vmatprep.subr.mxu0 0.0
  %2337 = vmatpush1.msra.mxu0 0.0
  %2338 = vmatprep.subr.mxu0 0.0
  %2339 = vmatpush1.msra.mxu0 0.0
  %2340 = vmatprep.subr.mxu0 0.0
  %2341 = vmatpush1.msra.mxu0 0.0
  %2342 = vmatprep.subr.mxu0 0.0
  %2343 = vmatpush1.msra.mxu0 0.0
  %2344 = vmatprep.subr.mxu0 0.0
  %2345 = vmatpush1.msra.mxu0 0.0
  %2346 = vmatprep.subr.mxu0 0.0
  %2347 = vmatpush1.msra.mxu0 0.0
  %2348 = vmatprep.subr.mxu0 0.0
  %2349 = vmatpush1.msra.mxu0 0.0
  %2350 = vmatprep.subr.mxu0 0.0
  %2351 = vmatpush1.msra.mxu0 0.0
  %2352 = vmatprep.subr.mxu0 0.0
  %2353 = vmatpush1.msra.mxu0 0.0
  %2354 = vmatprep.mubr.f32.mxu0 0.0
  %2355 = vmatmul.mubr.f32.gmra.mrb[0].mxu0 %v2282
  %v2356 = vpop.f32.mrb[0].mxu0
  %v2357 = vadd.f32 0.0, %v2356
  %v2358 = vpop.f32.mrb[0].mxu0
  %v2359 = vadd.f32 0.0, %v2358
  %2360 = vdwg.mxu0
  %v2361 = vadd.f32 %v2270, %v2357
  %v2362 = vadd.f32 %v2271, %v2359
  %2363 = vrot.lane.b32.xlu0 %v1736, 112
  %v2364 = vpop.permute.xlu0 %2363
  %2365 = vrot.lane.b32.xlu0 %v1738, 112
  %v2366 = vpop.permute.xlu0 %2365
  %v2367 = vsel %vm747, %v2364, %v2366
  %v2368 = vsel %vm747, %v2366, %v2364
  %v2369 = vmul.f32 %v2367, %v754
  %v2370 = vmul.f32 %v2368, %v758
  %v2371 = vld [vmem:[%s763] sm:$0xff]
  %v2373 = vsel %vm83, %v2371, 0
  %v2376 = vsel %vm87, %v2369, 0
  %v2379 = vsel %vm87, %v2370, 0
  %2381 = vmatprep.subr.mxu0 %v2379
  %2382 = vmatpush1.msra.mxu0 %v2376
  %2383 = vmatprep.subr.mxu0 0.0
  %2384 = vmatpush1.msra.mxu0 0.0
  %2385 = vmatprep.subr.mxu0 0.0
  %2386 = vmatpush1.msra.mxu0 0.0
  %2387 = vmatprep.subr.mxu0 0.0
  %2388 = vmatpush1.msra.mxu0 0.0
  %2389 = vmatprep.subr.mxu0 0.0
  %2390 = vmatpush1.msra.mxu0 0.0
  %2391 = vmatprep.subr.mxu0 0.0
  %2392 = vmatpush1.msra.mxu0 0.0
  %2393 = vmatprep.subr.mxu0 0.0
  %2394 = vmatpush1.msra.mxu0 0.0
  %2395 = vmatprep.subr.mxu0 0.0
  %2396 = vmatpush1.msra.mxu0 0.0
  %2397 = vmatprep.subr.mxu0 0.0
  %2398 = vmatpush1.msra.mxu0 0.0
  %2399 = vmatprep.subr.mxu0 0.0
  %2400 = vmatpush1.msra.mxu0 0.0
  %2401 = vmatprep.subr.mxu0 0.0
  %2402 = vmatpush1.msra.mxu0 0.0
  %2403 = vmatprep.subr.mxu0 0.0
  %2404 = vmatpush1.msra.mxu0 0.0
  %2405 = vmatprep.subr.mxu0 0.0
  %2406 = vmatpush1.msra.mxu0 0.0
  %2407 = vmatprep.subr.mxu0 0.0
  %2408 = vmatpush1.msra.mxu0 0.0
  %2409 = vmatprep.subr.mxu0 0.0
  %2410 = vmatpush1.msra.mxu0 0.0
  %2411 = vmatprep.subr.mxu0 0.0
  %2412 = vmatpush1.msra.mxu0 0.0
  %2413 = vmatprep.subr.mxu0 0.0
  %2414 = vmatpush1.msra.mxu0 0.0
  %2415 = vmatprep.subr.mxu0 0.0
  %2416 = vmatpush1.msra.mxu0 0.0
  %2417 = vmatprep.subr.mxu0 0.0
  %2418 = vmatpush1.msra.mxu0 0.0
  %2419 = vmatprep.subr.mxu0 0.0
  %2420 = vmatpush1.msra.mxu0 0.0
  %2421 = vmatprep.subr.mxu0 0.0
  %2422 = vmatpush1.msra.mxu0 0.0
  %2423 = vmatprep.subr.mxu0 0.0
  %2424 = vmatpush1.msra.mxu0 0.0
  %2425 = vmatprep.subr.mxu0 0.0
  %2426 = vmatpush1.msra.mxu0 0.0
  %2427 = vmatprep.subr.mxu0 0.0
  %2428 = vmatpush1.msra.mxu0 0.0
  %2429 = vmatprep.subr.mxu0 0.0
  %2430 = vmatpush1.msra.mxu0 0.0
  %2431 = vmatprep.subr.mxu0 0.0
  %2432 = vmatpush1.msra.mxu0 0.0
  %2433 = vmatprep.subr.mxu0 0.0
  %2434 = vmatpush1.msra.mxu0 0.0
  %2435 = vmatprep.subr.mxu0 0.0
  %2436 = vmatpush1.msra.mxu0 0.0
  %2437 = vmatprep.subr.mxu0 0.0
  %2438 = vmatpush1.msra.mxu0 0.0
  %2439 = vmatprep.subr.mxu0 0.0
  %2440 = vmatpush1.msra.mxu0 0.0
  %2441 = vmatprep.subr.mxu0 0.0
  %2442 = vmatpush1.msra.mxu0 0.0
  %2443 = vmatprep.subr.mxu0 0.0
  %2444 = vmatpush1.msra.mxu0 0.0
  %2445 = vmatprep.mubr.f32.mxu0 0.0
  %2446 = vmatmul.mubr.f32.gmra.mrb[0].mxu0 %v2373
  %v2447 = vpop.f32.mrb[0].mxu0
  %v2448 = vadd.f32 0.0, %v2447
  %v2449 = vpop.f32.mrb[0].mxu0
  %v2450 = vadd.f32 0.0, %v2449
  %2451 = vdwg.mxu0
  %v2452 = vadd.f32 %v2361, %v2448
  %v2453 = vadd.f32 %v2362, %v2450
  %2454 = vrot.lane.b32.xlu0 %v1736, 111
  %v2455 = vpop.permute.xlu0 %2454
  %2456 = vrot.lane.b32.xlu0 %v1738, 111
  %v2457 = vpop.permute.xlu0 %2456
  %v2458 = vsel %vm851, %v2455, %v2457
  %v2459 = vsel %vm851, %v2457, %v2455
  %v2460 = vmul.f32 %v2458, %v858
  %v2461 = vmul.f32 %v2459, %v862
  %v2462 = vld [vmem:[%s867] sm:$0xff]
  %v2464 = vsel %vm83, %v2462, 0
  %v2467 = vsel %vm87, %v2460, 0
  %v2470 = vsel %vm87, %v2461, 0
  %2472 = vmatprep.subr.mxu0 %v2470
  %2473 = vmatpush1.msra.mxu0 %v2467
  %2474 = vmatprep.subr.mxu0 0.0
  %2475 = vmatpush1.msra.mxu0 0.0
  %2476 = vmatprep.subr.mxu0 0.0
  %2477 = vmatpush1.msra.mxu0 0.0
  %2478 = vmatprep.subr.mxu0 0.0
  %2479 = vmatpush1.msra.mxu0 0.0
  %2480 = vmatprep.subr.mxu0 0.0
  %2481 = vmatpush1.msra.mxu0 0.0
  %2482 = vmatprep.subr.mxu0 0.0
  %2483 = vmatpush1.msra.mxu0 0.0
  %2484 = vmatprep.subr.mxu0 0.0
  %2485 = vmatpush1.msra.mxu0 0.0
  %2486 = vmatprep.subr.mxu0 0.0
  %2487 = vmatpush1.msra.mxu0 0.0
  %2488 = vmatprep.subr.mxu0 0.0
  %2489 = vmatpush1.msra.mxu0 0.0
  %2490 = vmatprep.subr.mxu0 0.0
  %2491 = vmatpush1.msra.mxu0 0.0
  %2492 = vmatprep.subr.mxu0 0.0
  %2493 = vmatpush1.msra.mxu0 0.0
  %2494 = vmatprep.subr.mxu0 0.0
  %2495 = vmatpush1.msra.mxu0 0.0
  %2496 = vmatprep.subr.mxu0 0.0
  %2497 = vmatpush1.msra.mxu0 0.0
  %2498 = vmatprep.subr.mxu0 0.0
  %2499 = vmatpush1.msra.mxu0 0.0
  %2500 = vmatprep.subr.mxu0 0.0
  %2501 = vmatpush1.msra.mxu0 0.0
  %2502 = vmatprep.subr.mxu0 0.0
  %2503 = vmatpush1.msra.mxu0 0.0
  %2504 = vmatprep.subr.mxu0 0.0
  %2505 = vmatpush1.msra.mxu0 0.0
  %2506 = vmatprep.subr.mxu0 0.0
  %2507 = vmatpush1.msra.mxu0 0.0
  %2508 = vmatprep.subr.mxu0 0.0
  %2509 = vmatpush1.msra.mxu0 0.0
  %2510 = vmatprep.subr.mxu0 0.0
  %2511 = vmatpush1.msra.mxu0 0.0
  %2512 = vmatprep.subr.mxu0 0.0
  %2513 = vmatpush1.msra.mxu0 0.0
  %2514 = vmatprep.subr.mxu0 0.0
  %2515 = vmatpush1.msra.mxu0 0.0
  %2516 = vmatprep.subr.mxu0 0.0
  %2517 = vmatpush1.msra.mxu0 0.0
  %2518 = vmatprep.subr.mxu0 0.0
  %2519 = vmatpush1.msra.mxu0 0.0
  %2520 = vmatprep.subr.mxu0 0.0
  %2521 = vmatpush1.msra.mxu0 0.0
  %2522 = vmatprep.subr.mxu0 0.0
  %2523 = vmatpush1.msra.mxu0 0.0
  %2524 = vmatprep.subr.mxu0 0.0
  %2525 = vmatpush1.msra.mxu0 0.0
  %2526 = vmatprep.subr.mxu0 0.0
  %2527 = vmatpush1.msra.mxu0 0.0
  %2528 = vmatprep.subr.mxu0 0.0
  %2529 = vmatpush1.msra.mxu0 0.0
  %2530 = vmatprep.subr.mxu0 0.0
  %2531 = vmatpush1.msra.mxu0 0.0
  %2532 = vmatprep.subr.mxu0 0.0
  %2533 = vmatpush1.msra.mxu0 0.0
  %2534 = vmatprep.subr.mxu0 0.0
  %2535 = vmatpush1.msra.mxu0 0.0
  %2536 = vmatprep.mubr.f32.mxu0 0.0
  %2537 = vmatmul.mubr.f32.gmra.mrb[0].mxu0 %v2464
  %v2538 = vpop.f32.mrb[0].mxu0
  %v2539 = vadd.f32 0.0, %v2538
  %v2540 = vpop.f32.mrb[0].mxu0
  %v2541 = vadd.f32 0.0, %v2540
  %2542 = vdwg.mxu0
  %v2543 = vadd.f32 %v2452, %v2539
  %v2544 = vadd.f32 %v2453, %v2541
  %v2545 = vld [vmem:[%s3] sm:$0xff]
  %2547 = vset.pattern.permute.xlu0 0
  %2548 = vperm.xlu0 %2547, %v2545
  %v2549 = vpop.permute.xlu0 %2548
  %v2551 = vadd.f32 %v2543, %v2549
  %v2552 = vadd.f32 %v2544, %v2549
  %v2553 = vmax.f32 %v2551, 0.0
  %v2554 = vmax.f32 %v2552, 0.0
  %2555 = vrot.lane.b32.xlu0 %v2553, 17
  %v2556 = vpop.permute.xlu0 %2555
  %2557 = vrot.lane.b32.xlu0 %v2554, 17
  %v2558 = vpop.permute.xlu0 %2557
  %v2559 = vsel %vm44, %v2556, %v2558
  %v2560 = vsel %vm44, %v2558, %v2556
  %v2561 = vmul.f32 %v2560, %v51
  %v2562 = vmul.f32 %v2559, %v55
  %v2563 = vld [vmem:[%s4] sm:$0xff]
  %2564 = vrot.lane.b32.xlu0 %v2553, 16
  %v2565 = vpop.permute.xlu0 %2564
  %2566 = vrot.lane.b32.xlu0 %v2554, 16
  %v2567 = vpop.permute.xlu0 %2566
  %v2568 = vsel %vm65, %v2565, %v2567
  %v2569 = vsel %vm65, %v2567, %v2565
  %v2570 = vmul.f32 %v2569, %v72
  %v2571 = vmul.f32 %v2568, %v76
  %v2572 = vld [vmem:[%s978] sm:$0xff]
  %v2574 = vsel %vm980, %v2572, 0
  %2576 = vmatprep.subr.mxu0 %v2571
  %2577 = vmatpush1.msra.mxu0 %v2570
  %2578 = vmatprep.subr.mxu0 0.0
  %2579 = vmatpush1.msra.mxu0 0.0
  %2580 = vmatprep.subr.mxu0 0.0
  %2581 = vmatpush1.msra.mxu0 0.0
  %2582 = vmatprep.subr.mxu0 0.0
  %2583 = vmatpush1.msra.mxu0 0.0
  %2584 = vmatprep.subr.mxu0 0.0
  %2585 = vmatpush1.msra.mxu0 0.0
  %2586 = vmatprep.subr.mxu0 0.0
  %2587 = vmatpush1.msra.mxu0 0.0
  %2588 = vmatprep.subr.mxu0 0.0
  %2589 = vmatpush1.msra.mxu0 0.0
  %2590 = vmatprep.subr.mxu0 0.0
  %2591 = vmatpush1.msra.mxu0 0.0
  %2592 = vmatprep.subr.mxu0 0.0
  %2593 = vmatpush1.msra.mxu0 0.0
  %2594 = vmatprep.subr.mxu0 0.0
  %2595 = vmatpush1.msra.mxu0 0.0
  %2596 = vmatprep.subr.mxu0 0.0
  %2597 = vmatpush1.msra.mxu0 0.0
  %2598 = vmatprep.subr.mxu0 0.0
  %2599 = vmatpush1.msra.mxu0 0.0
  %2600 = vmatprep.subr.mxu0 0.0
  %2601 = vmatpush1.msra.mxu0 0.0
  %2602 = vmatprep.subr.mxu0 0.0
  %2603 = vmatpush1.msra.mxu0 0.0
  %2604 = vmatprep.subr.mxu0 0.0
  %2605 = vmatpush1.msra.mxu0 0.0
  %2606 = vmatprep.subr.mxu0 0.0
  %2607 = vmatpush1.msra.mxu0 0.0
  %2608 = vmatprep.subr.mxu0 0.0
  %2609 = vmatpush1.msra.mxu0 0.0
  %2610 = vmatprep.subr.mxu0 0.0
  %2611 = vmatpush1.msra.mxu0 0.0
  %2612 = vmatprep.subr.mxu0 0.0
  %2613 = vmatpush1.msra.mxu0 0.0
  %2614 = vmatprep.subr.mxu0 0.0
  %2615 = vmatpush1.msra.mxu0 0.0
  %2616 = vmatprep.subr.mxu0 0.0
  %2617 = vmatpush1.msra.mxu0 0.0
  %2618 = vmatprep.subr.mxu0 0.0
  %2619 = vmatpush1.msra.mxu0 0.0
  %2620 = vmatprep.subr.mxu0 0.0
  %2621 = vmatpush1.msra.mxu0 0.0
  %2622 = vmatprep.subr.mxu0 0.0
  %2623 = vmatpush1.msra.mxu0 0.0
  %2624 = vmatprep.subr.mxu0 0.0
  %2625 = vmatpush1.msra.mxu0 0.0
  %2626 = vmatprep.subr.mxu0 0.0
  %2627 = vmatpush1.msra.mxu0 0.0
  %2628 = vmatprep.subr.mxu0 0.0
  %2629 = vmatpush1.msra.mxu0 0.0
  %2630 = vmatprep.subr.mxu0 0.0
  %2631 = vmatpush1.msra.mxu0 0.0
  %2632 = vmatprep.subr.mxu0 0.0
  %2633 = vmatpush1.msra.mxu0 0.0
  %2634 = vmatprep.subr.mxu0 0.0
  %2635 = vmatpush1.msra.mxu0 0.0
  %2636 = vmatprep.subr.mxu0 0.0
  %2637 = vmatpush1.msra.mxu0 0.0
  %2638 = vmatprep.subr.mxu0 0.0
  %2639 = vmatpush1.msra.mxu0 0.0
  %2640 = vmatprep.mubr.f32.mxu0 0.0
  %2641 = vmatmul.mubr.f32.gmra.mrb[0].mxu0 %v2574
  %v2642 = vpop.f32.mrb[0].mxu0
  %v2643 = vadd.f32 0.0, %v2642
  %v2644 = vpop.f32.mrb[0].mxu0
  %v2645 = vadd.f32 0.0, %v2644
  %2646 = vdwg.mxu0
  %v2648 = vsel %vm980, %v2563, 0
  %2650 = vmatprep.subr.mxu0 %v2562
  %2651 = vmatpush1.msra.mxu0 %v2561
  %2652 = vmatprep.subr.mxu0 0.0
  %2653 = vmatpush1.msra.mxu0 0.0
  %2654 = vmatprep.subr.mxu0 0.0
  %2655 = vmatpush1.msra.mxu0 0.0
  %2656 = vmatprep.subr.mxu0 0.0
  %2657 = vmatpush1.msra.mxu0 0.0
  %2658 = vmatprep.subr.mxu0 0.0
  %2659 = vmatpush1.msra.mxu0 0.0
  %2660 = vmatprep.subr.mxu0 0.0
  %2661 = vmatpush1.msra.mxu0 0.0
  %2662 = vmatprep.subr.mxu0 0.0
  %2663 = vmatpush1.msra.mxu0 0.0
  %2664 = vmatprep.subr.mxu0 0.0
  %2665 = vmatpush1.msra.mxu0 0.0
  %2666 = vmatprep.subr.mxu0 0.0
  %2667 = vmatpush1.msra.mxu0 0.0
  %2668 = vmatprep.subr.mxu0 0.0
  %2669 = vmatpush1.msra.mxu0 0.0
  %2670 = vmatprep.subr.mxu0 0.0
  %2671 = vmatpush1.msra.mxu0 0.0
  %2672 = vmatprep.subr.mxu0 0.0
  %2673 = vmatpush1.msra.mxu0 0.0
  %2674 = vmatprep.subr.mxu0 0.0
  %2675 = vmatpush1.msra.mxu0 0.0
  %2676 = vmatprep.subr.mxu0 0.0
  %2677 = vmatpush1.msra.mxu0 0.0
  %2678 = vmatprep.subr.mxu0 0.0
  %2679 = vmatpush1.msra.mxu0 0.0
  %2680 = vmatprep.subr.mxu0 0.0
  %2681 = vmatpush1.msra.mxu0 0.0
  %2682 = vmatprep.subr.mxu0 0.0
  %2683 = vmatpush1.msra.mxu0 0.0
  %2684 = vmatprep.subr.mxu0 0.0
  %2685 = vmatpush1.msra.mxu0 0.0
  %2686 = vmatprep.subr.mxu0 0.0
  %2687 = vmatpush1.msra.mxu0 0.0
  %2688 = vmatprep.subr.mxu0 0.0
  %2689 = vmatpush1.msra.mxu0 0.0
  %2690 = vmatprep.subr.mxu0 0.0
  %2691 = vmatpush1.msra.mxu0 0.0
  %2692 = vmatprep.subr.mxu0 0.0
  %2693 = vmatpush1.msra.mxu0 0.0
  %2694 = vmatprep.subr.mxu0 0.0
  %2695 = vmatpush1.msra.mxu0 0.0
  %2696 = vmatprep.subr.mxu0 0.0
  %2697 = vmatpush1.msra.mxu0 0.0
  %2698 = vmatprep.subr.mxu0 0.0
  %2699 = vmatpush1.msra.mxu0 0.0
  %2700 = vmatprep.subr.mxu0 0.0
  %2701 = vmatpush1.msra.mxu0 0.0
  %2702 = vmatprep.subr.mxu0 0.0
  %2703 = vmatpush1.msra.mxu0 0.0
  %2704 = vmatprep.subr.mxu0 0.0
  %2705 = vmatpush1.msra.mxu0 0.0
  %2706 = vmatprep.subr.mxu0 0.0
  %2707 = vmatpush1.msra.mxu0 0.0
  %2708 = vmatprep.subr.mxu0 0.0
  %2709 = vmatpush1.msra.mxu0 0.0
  %2710 = vmatprep.subr.mxu0 0.0
  %2711 = vmatpush1.msra.mxu0 0.0
  %2712 = vmatprep.subr.mxu0 0.0
  %2713 = vmatpush1.msra.mxu0 0.0
  %2714 = vmatprep.mubr.f32.mxu0 0.0
  %2715 = vmatmul.mubr.f32.gmra.mrb[0].mxu0 %v2648
  %v2716 = vpop.f32.mrb[0].mxu0
  %v2717 = vadd.f32 %v2643, %v2716
  %v2718 = vpop.f32.mrb[0].mxu0
  %v2719 = vadd.f32 %v2645, %v2718
  %2720 = vdwg.mxu0
  %2721 = vrot.lane.b32.xlu0 %v2553, 15
  %v2722 = vpop.permute.xlu0 %2721
  %2723 = vrot.lane.b32.xlu0 %v2554, 15
  %v2724 = vpop.permute.xlu0 %2723
  %v2725 = vsel %vm249, %v2722, %v2724
  %v2726 = vsel %vm249, %v2724, %v2722
  %v2727 = vmul.f32 %v2726, %v256
  %v2728 = vmul.f32 %v2725, %v260
  %v2729 = vld [vmem:[%s1137] sm:$0xff]
  %v2731 = vsel %vm980, %v2729, 0
  %2733 = vmatprep.subr.mxu0 %v2728
  %2734 = vmatpush1.msra.mxu0 %v2727
  %2735 = vmatprep.subr.mxu0 0.0
  %2736 = vmatpush1.msra.mxu0 0.0
  %2737 = vmatprep.subr.mxu0 0.0
  %2738 = vmatpush1.msra.mxu0 0.0
  %2739 = vmatprep.subr.mxu0 0.0
  %2740 = vmatpush1.msra.mxu0 0.0
  %2741 = vmatprep.subr.mxu0 0.0
  %2742 = vmatpush1.msra.mxu0 0.0
  %2743 = vmatprep.subr.mxu0 0.0
  %2744 = vmatpush1.msra.mxu0 0.0
  %2745 = vmatprep.subr.mxu0 0.0
  %2746 = vmatpush1.msra.mxu0 0.0
  %2747 = vmatprep.subr.mxu0 0.0
  %2748 = vmatpush1.msra.mxu0 0.0
  %2749 = vmatprep.subr.mxu0 0.0
  %2750 = vmatpush1.msra.mxu0 0.0
  %2751 = vmatprep.subr.mxu0 0.0
  %2752 = vmatpush1.msra.mxu0 0.0
  %2753 = vmatprep.subr.mxu0 0.0
  %2754 = vmatpush1.msra.mxu0 0.0
  %2755 = vmatprep.subr.mxu0 0.0
  %2756 = vmatpush1.msra.mxu0 0.0
  %2757 = vmatprep.subr.mxu0 0.0
  %2758 = vmatpush1.msra.mxu0 0.0
  %2759 = vmatprep.subr.mxu0 0.0
  %2760 = vmatpush1.msra.mxu0 0.0
  %2761 = vmatprep.subr.mxu0 0.0
  %2762 = vmatpush1.msra.mxu0 0.0
  %2763 = vmatprep.subr.mxu0 0.0
  %2764 = vmatpush1.msra.mxu0 0.0
  %2765 = vmatprep.subr.mxu0 0.0
  %2766 = vmatpush1.msra.mxu0 0.0
  %2767 = vmatprep.subr.mxu0 0.0
  %2768 = vmatpush1.msra.mxu0 0.0
  %2769 = vmatprep.subr.mxu0 0.0
  %2770 = vmatpush1.msra.mxu0 0.0
  %2771 = vmatprep.subr.mxu0 0.0
  %2772 = vmatpush1.msra.mxu0 0.0
  %2773 = vmatprep.subr.mxu0 0.0
  %2774 = vmatpush1.msra.mxu0 0.0
  %2775 = vmatprep.subr.mxu0 0.0
  %2776 = vmatpush1.msra.mxu0 0.0
  %2777 = vmatprep.subr.mxu0 0.0
  %2778 = vmatpush1.msra.mxu0 0.0
  %2779 = vmatprep.subr.mxu0 0.0
  %2780 = vmatpush1.msra.mxu0 0.0
  %2781 = vmatprep.subr.mxu0 0.0
  %2782 = vmatpush1.msra.mxu0 0.0
  %2783 = vmatprep.subr.mxu0 0.0
  %2784 = vmatpush1.msra.mxu0 0.0
  %2785 = vmatprep.subr.mxu0 0.0
  %2786 = vmatpush1.msra.mxu0 0.0
  %2787 = vmatprep.subr.mxu0 0.0
  %2788 = vmatpush1.msra.mxu0 0.0
  %2789 = vmatprep.subr.mxu0 0.0
  %2790 = vmatpush1.msra.mxu0 0.0
  %2791 = vmatprep.subr.mxu0 0.0
  %2792 = vmatpush1.msra.mxu0 0.0
  %2793 = vmatprep.subr.mxu0 0.0
  %2794 = vmatpush1.msra.mxu0 0.0
  %2795 = vmatprep.subr.mxu0 0.0
  %2796 = vmatpush1.msra.mxu0 0.0
  %2797 = vmatprep.mubr.f32.mxu0 0.0
  %2798 = vmatmul.mubr.f32.gmra.mrb[0].mxu0 %v2731
  %v2799 = vpop.f32.mrb[0].mxu0
  %v2800 = vadd.f32 0.0, %v2799
  %v2801 = vpop.f32.mrb[0].mxu0
  %v2802 = vadd.f32 0.0, %v2801
  %2803 = vdwg.mxu0
  %v2804 = vadd.f32 %v2717, %v2800
  %v2805 = vadd.f32 %v2719, %v2802
  %2806 = vrot.lane.b32.xlu0 %v2553, 1
  %v2807 = vpop.permute.xlu0 %2806
  %2808 = vrot.lane.b32.xlu0 %v2554, 1
  %v2809 = vpop.permute.xlu0 %2808
  %v2810 = vsel %vm353, %v2807, %v2809
  %v2811 = vsel %vm353, %v2809, %v2807
  %v2812 = vmul.f32 %v2811, %v360
  %v2813 = vmul.f32 %v2810, %v364
  %v2814 = vld [vmem:[%s1223] sm:$0xff]
  %v2816 = vsel %vm980, %v2814, 0
  %2818 = vmatprep.subr.mxu0 %v2813
  %2819 = vmatpush1.msra.mxu0 %v2812
  %2820 = vmatprep.subr.mxu0 0.0
  %2821 = vmatpush1.msra.mxu0 0.0
  %2822 = vmatprep.subr.mxu0 0.0
  %2823 = vmatpush1.msra.mxu0 0.0
  %2824 = vmatprep.subr.mxu0 0.0
  %2825 = vmatpush1.msra.mxu0 0.0
  %2826 = vmatprep.subr.mxu0 0.0
  %2827 = vmatpush1.msra.mxu0 0.0
  %2828 = vmatprep.subr.mxu0 0.0
  %2829 = vmatpush1.msra.mxu0 0.0
  %2830 = vmatprep.subr.mxu0 0.0
  %2831 = vmatpush1.msra.mxu0 0.0
  %2832 = vmatprep.subr.mxu0 0.0
  %2833 = vmatpush1.msra.mxu0 0.0
  %2834 = vmatprep.subr.mxu0 0.0
  %2835 = vmatpush1.msra.mxu0 0.0
  %2836 = vmatprep.subr.mxu0 0.0
  %2837 = vmatpush1.msra.mxu0 0.0
  %2838 = vmatprep.subr.mxu0 0.0
  %2839 = vmatpush1.msra.mxu0 0.0
  %2840 = vmatprep.subr.mxu0 0.0
  %2841 = vmatpush1.msra.mxu0 0.0
  %2842 = vmatprep.subr.mxu0 0.0
  %2843 = vmatpush1.msra.mxu0 0.0
  %2844 = vmatprep.subr.mxu0 0.0
  %2845 = vmatpush1.msra.mxu0 0.0
  %2846 = vmatprep.subr.mxu0 0.0
  %2847 = vmatpush1.msra.mxu0 0.0
  %2848 = vmatprep.subr.mxu0 0.0
  %2849 = vmatpush1.msra.mxu0 0.0
  %2850 = vmatprep.subr.mxu0 0.0
  %2851 = vmatpush1.msra.mxu0 0.0
  %2852 = vmatprep.subr.mxu0 0.0
  %2853 = vmatpush1.msra.mxu0 0.0
  %2854 = vmatprep.subr.mxu0 0.0
  %2855 = vmatpush1.msra.mxu0 0.0
  %2856 = vmatprep.subr.mxu0 0.0
  %2857 = vmatpush1.msra.mxu0 0.0
  %2858 = vmatprep.subr.mxu0 0.0
  %2859 = vmatpush1.msra.mxu0 0.0
  %2860 = vmatprep.subr.mxu0 0.0
  %2861 = vmatpush1.msra.mxu0 0.0
  %2862 = vmatprep.subr.mxu0 0.0
  %2863 = vmatpush1.msra.mxu0 0.0
  %2864 = vmatprep.subr.mxu0 0.0
  %2865 = vmatpush1.msra.mxu0 0.0
  %2866 = vmatprep.subr.mxu0 0.0
  %2867 = vmatpush1.msra.mxu0 0.0
  %2868 = vmatprep.subr.mxu0 0.0
  %2869 = vmatpush1.msra.mxu0 0.0
  %2870 = vmatprep.subr.mxu0 0.0
  %2871 = vmatpush1.msra.mxu0 0.0
  %2872 = vmatprep.subr.mxu0 0.0
  %2873 = vmatpush1.msra.mxu0 0.0
  %2874 = vmatprep.subr.mxu0 0.0
  %2875 = vmatpush1.msra.mxu0 0.0
  %2876 = vmatprep.subr.mxu0 0.0
  %2877 = vmatpush1.msra.mxu0 0.0
  %2878 = vmatprep.subr.mxu0 0.0
  %2879 = vmatpush1.msra.mxu0 0.0
  %2880 = vmatprep.subr.mxu0 0.0
  %2881 = vmatpush1.msra.mxu0 0.0
  %2882 = vmatprep.mubr.f32.mxu0 0.0
  %2883 = vmatmul.mubr.f32.gmra.mrb[0].mxu0 %v2816
  %v2884 = vpop.f32.mrb[0].mxu0
  %v2885 = vadd.f32 0.0, %v2884
  %v2886 = vpop.f32.mrb[0].mxu0
  %v2887 = vadd.f32 0.0, %v2886
  %2888 = vdwg.mxu0
  %v2889 = vadd.f32 %v2804, %v2885
  %v2890 = vadd.f32 %v2805, %v2887
  %v2891 = vld [vmem:[%s1301] sm:$0xff]
  %v2893 = vsel %vm980, %v2891, 0
  %2895 = vmatprep.subr.mxu0 %v2554
  %2896 = vmatpush1.msra.mxu0 %v2553
  %2897 = vmatprep.subr.mxu0 0.0
  %2898 = vmatpush1.msra.mxu0 0.0
  %2899 = vmatprep.subr.mxu0 0.0
  %2900 = vmatpush1.msra.mxu0 0.0
  %2901 = vmatprep.subr.mxu0 0.0
  %2902 = vmatpush1.msra.mxu0 0.0
  %2903 = vmatprep.subr.mxu0 0.0
  %2904 = vmatpush1.msra.mxu0 0.0
  %2905 = vmatprep.subr.mxu0 0.0
  %2906 = vmatpush1.msra.mxu0 0.0
  %2907 = vmatprep.subr.mxu0 0.0
  %2908 = vmatpush1.msra.mxu0 0.0
  %2909 = vmatprep.subr.mxu0 0.0
  %2910 = vmatpush1.msra.mxu0 0.0
  %2911 = vmatprep.subr.mxu0 0.0
  %2912 = vmatpush1.msra.mxu0 0.0
  %2913 = vmatprep.subr.mxu0 0.0
  %2914 = vmatpush1.msra.mxu0 0.0
  %2915 = vmatprep.subr.mxu0 0.0
  %2916 = vmatpush1.msra.mxu0 0.0
  %2917 = vmatprep.subr.mxu0 0.0
  %2918 = vmatpush1.msra.mxu0 0.0
  %2919 = vmatprep.subr.mxu0 0.0
  %2920 = vmatpush1.msra.mxu0 0.0
  %2921 = vmatprep.subr.mxu0 0.0
  %2922 = vmatpush1.msra.mxu0 0.0
  %2923 = vmatprep.subr.mxu0 0.0
  %2924 = vmatpush1.msra.mxu0 0.0
  %2925 = vmatprep.subr.mxu0 0.0
  %2926 = vmatpush1.msra.mxu0 0.0
  %2927 = vmatprep.subr.mxu0 0.0
  %2928 = vmatpush1.msra.mxu0 0.0
  %2929 = vmatprep.subr.mxu0 0.0
  %2930 = vmatpush1.msra.mxu0 0.0
  %2931 = vmatprep.subr.mxu0 0.0
  %2932 = vmatpush1.msra.mxu0 0.0
  %2933 = vmatprep.subr.mxu0 0.0
  %2934 = vmatpush1.msra.mxu0 0.0
  %2935 = vmatprep.subr.mxu0 0.0
  %2936 = vmatpush1.msra.mxu0 0.0
  %2937 = vmatprep.subr.mxu0 0.0
  %2938 = vmatpush1.msra.mxu0 0.0
  %2939 = vmatprep.subr.mxu0 0.0
  %2940 = vmatpush1.msra.mxu0 0.0
  %2941 = vmatprep.subr.mxu0 0.0
  %2942 = vmatpush1.msra.mxu0 0.0
  %2943 = vmatprep.subr.mxu0 0.0
  %2944 = vmatpush1.msra.mxu0 0.0
  %2945 = vmatprep.subr.mxu0 0.0
  %2946 = vmatpush1.msra.mxu0 0.0
  %2947 = vmatprep.subr.mxu0 0.0
  %2948 = vmatpush1.msra.mxu0 0.0
  %2949 = vmatprep.subr.mxu0 0.0
  %2950 = vmatpush1.msra.mxu0 0.0
  %2951 = vmatprep.subr.mxu0 0.0
  %2952 = vmatpush1.msra.mxu0 0.0
  %2953 = vmatprep.subr.mxu0 0.0
  %2954 = vmatpush1.msra.mxu0 0.0
  %2955 = vmatprep.subr.mxu0 0.0
  %2956 = vmatpush1.msra.mxu0 0.0
  %2957 = vmatprep.subr.mxu0 0.0
  %2958 = vmatpush1.msra.mxu0 0.0
  %2959 = vmatprep.mubr.f32.mxu0 0.0
  %2960 = vmatmul.mubr.f32.gmra.mrb[0].mxu0 %v2893
  %v2961 = vpop.f32.mrb[0].mxu0
  %v2962 = vadd.f32 0.0, %v2961
  %v2963 = vpop.f32.mrb[0].mxu0
  %v2964 = vadd.f32 0.0, %v2963
  %2965 = vdwg.mxu0
  %v2966 = vadd.f32 %v2889, %v2962
  %v2967 = vadd.f32 %v2890, %v2964
  %2968 = vrot.lane.b32.xlu0 %v2553, 127
  %v2969 = vpop.permute.xlu0 %2968
  %2970 = vrot.lane.b32.xlu0 %v2554, 127
  %v2971 = vpop.permute.xlu0 %2970
  %v2972 = vsel %vm539, %v2969, %v2971
  %v2973 = vsel %vm539, %v2971, %v2969
  %v2974 = vmul.f32 %v2972, %v546
  %v2975 = vmul.f32 %v2973, %v550
  %v2976 = vld [vmem:[%s1387] sm:$0xff]
  %v2978 = vsel %vm980, %v2976, 0
  %2980 = vmatprep.subr.mxu0 %v2975
  %2981 = vmatpush1.msra.mxu0 %v2974
  %2982 = vmatprep.subr.mxu0 0.0
  %2983 = vmatpush1.msra.mxu0 0.0
  %2984 = vmatprep.subr.mxu0 0.0
  %2985 = vmatpush1.msra.mxu0 0.0
  %2986 = vmatprep.subr.mxu0 0.0
  %2987 = vmatpush1.msra.mxu0 0.0
  %2988 = vmatprep.subr.mxu0 0.0
  %2989 = vmatpush1.msra.mxu0 0.0
  %2990 = vmatprep.subr.mxu0 0.0
  %2991 = vmatpush1.msra.mxu0 0.0
  %2992 = vmatprep.subr.mxu0 0.0
  %2993 = vmatpush1.msra.mxu0 0.0
  %2994 = vmatprep.subr.mxu0 0.0
  %2995 = vmatpush1.msra.mxu0 0.0
  %2996 = vmatprep.subr.mxu0 0.0
  %2997 = vmatpush1.msra.mxu0 0.0
  %2998 = vmatprep.subr.mxu0 0.0
  %2999 = vmatpush1.msra.mxu0 0.0
  %3000 = vmatprep.subr.mxu0 0.0
  %3001 = vmatpush1.msra.mxu0 0.0
  %3002 = vmatprep.subr.mxu0 0.0
  %3003 = vmatpush1.msra.mxu0 0.0
  %3004 = vmatprep.subr.mxu0 0.0
  %3005 = vmatpush1.msra.mxu0 0.0
  %3006 = vmatprep.subr.mxu0 0.0
  %3007 = vmatpush1.msra.mxu0 0.0
  %3008 = vmatprep.subr.mxu0 0.0
  %3009 = vmatpush1.msra.mxu0 0.0
  %3010 = vmatprep.subr.mxu0 0.0
  %3011 = vmatpush1.msra.mxu0 0.0
  %3012 = vmatprep.subr.mxu0 0.0
  %3013 = vmatpush1.msra.mxu0 0.0
  %3014 = vmatprep.subr.mxu0 0.0
  %3015 = vmatpush1.msra.mxu0 0.0
  %3016 = vmatprep.subr.mxu0 0.0
  %3017 = vmatpush1.msra.mxu0 0.0
  %3018 = vmatprep.subr.mxu0 0.0
  %3019 = vmatpush1.msra.mxu0 0.0
  %3020 = vmatprep.subr.mxu0 0.0
  %3021 = vmatpush1.msra.mxu0 0.0
  %3022 = vmatprep.subr.mxu0 0.0
  %3023 = vmatpush1.msra.mxu0 0.0
  %3024 = vmatprep.subr.mxu0 0.0
  %3025 = vmatpush1.msra.mxu0 0.0
  %3026 = vmatprep.subr.mxu0 0.0
  %3027 = vmatpush1.msra.mxu0 0.0
  %3028 = vmatprep.subr.mxu0 0.0
  %3029 = vmatpush1.msra.mxu0 0.0
  %3030 = vmatprep.subr.mxu0 0.0
  %3031 = vmatpush1.msra.mxu0 0.0
  %3032 = vmatprep.subr.mxu0 0.0
  %3033 = vmatpush1.msra.mxu0 0.0
  %3034 = vmatprep.subr.mxu0 0.0
  %3035 = vmatpush1.msra.mxu0 0.0
  %3036 = vmatprep.subr.mxu0 0.0
  %3037 = vmatpush1.msra.mxu0 0.0
  %3038 = vmatprep.subr.mxu0 0.0
  %3039 = vmatpush1.msra.mxu0 0.0
  %3040 = vmatprep.subr.mxu0 0.0
  %3041 = vmatpush1.msra.mxu0 0.0
  %3042 = vmatprep.subr.mxu0 0.0
  %3043 = vmatpush1.msra.mxu0 0.0
  %3044 = vmatprep.mubr.f32.mxu0 0.0
  %3045 = vmatmul.mubr.f32.gmra.mrb[0].mxu0 %v2978
  %v3046 = vpop.f32.mrb[0].mxu0
  %v3047 = vadd.f32 0.0, %v3046
  %v3048 = vpop.f32.mrb[0].mxu0
  %v3049 = vadd.f32 0.0, %v3048
  %3050 = vdwg.mxu0
  %v3051 = vadd.f32 %v2966, %v3047
  %v3052 = vadd.f32 %v2967, %v3049
  %3053 = vrot.lane.b32.xlu0 %v2553, 113
  %v3054 = vpop.permute.xlu0 %3053
  %3055 = vrot.lane.b32.xlu0 %v2554, 113
  %v3056 = vpop.permute.xlu0 %3055
  %v3057 = vsel %vm643, %v3054, %v3056
  %v3058 = vsel %vm643, %v3056, %v3054
  %v3059 = vmul.f32 %v3057, %v650
  %v3060 = vmul.f32 %v3058, %v654
  %v3061 = vld [vmem:[%s1473] sm:$0xff]
  %v3063 = vsel %vm980, %v3061, 0
  %3065 = vmatprep.subr.mxu0 %v3060
  %3066 = vmatpush1.msra.mxu0 %v3059
  %3067 = vmatprep.subr.mxu0 0.0
  %3068 = vmatpush1.msra.mxu0 0.0
  %3069 = vmatprep.subr.mxu0 0.0
  %3070 = vmatpush1.msra.mxu0 0.0
  %3071 = vmatprep.subr.mxu0 0.0
  %3072 = vmatpush1.msra.mxu0 0.0
  %3073 = vmatprep.subr.mxu0 0.0
  %3074 = vmatpush1.msra.mxu0 0.0
  %3075 = vmatprep.subr.mxu0 0.0
  %3076 = vmatpush1.msra.mxu0 0.0
  %3077 = vmatprep.subr.mxu0 0.0
  %3078 = vmatpush1.msra.mxu0 0.0
  %3079 = vmatprep.subr.mxu0 0.0
  %3080 = vmatpush1.msra.mxu0 0.0
  %3081 = vmatprep.subr.mxu0 0.0
  %3082 = vmatpush1.msra.mxu0 0.0
  %3083 = vmatprep.subr.mxu0 0.0
  %3084 = vmatpush1.msra.mxu0 0.0
  %3085 = vmatprep.subr.mxu0 0.0
  %3086 = vmatpush1.msra.mxu0 0.0
  %3087 = vmatprep.subr.mxu0 0.0
  %3088 = vmatpush1.msra.mxu0 0.0
  %3089 = vmatprep.subr.mxu0 0.0
  %3090 = vmatpush1.msra.mxu0 0.0
  %3091 = vmatprep.subr.mxu0 0.0
  %3092 = vmatpush1.msra.mxu0 0.0
  %3093 = vmatprep.subr.mxu0 0.0
  %3094 = vmatpush1.msra.mxu0 0.0
  %3095 = vmatprep.subr.mxu0 0.0
  %3096 = vmatpush1.msra.mxu0 0.0
  %3097 = vmatprep.subr.mxu0 0.0
  %3098 = vmatpush1.msra.mxu0 0.0
  %3099 = vmatprep.subr.mxu0 0.0
  %3100 = vmatpush1.msra.mxu0 0.0
  %3101 = vmatprep.subr.mxu0 0.0
  %3102 = vmatpush1.msra.mxu0 0.0
  %3103 = vmatprep.subr.mxu0 0.0
  %3104 = vmatpush1.msra.mxu0 0.0
  %3105 = vmatprep.subr.mxu0 0.0
  %3106 = vmatpush1.msra.mxu0 0.0
  %3107 = vmatprep.subr.mxu0 0.0
  %3108 = vmatpush1.msra.mxu0 0.0
  %3109 = vmatprep.subr.mxu0 0.0
  %3110 = vmatpush1.msra.mxu0 0.0
  %3111 = vmatprep.subr.mxu0 0.0
  %3112 = vmatpush1.msra.mxu0 0.0
  %3113 = vmatprep.subr.mxu0 0.0
  %3114 = vmatpush1.msra.mxu0 0.0
  %3115 = vmatprep.subr.mxu0 0.0
  %3116 = vmatpush1.msra.mxu0 0.0
  %3117 = vmatprep.subr.mxu0 0.0
  %3118 = vmatpush1.msra.mxu0 0.0
  %3119 = vmatprep.subr.mxu0 0.0
  %3120 = vmatpush1.msra.mxu0 0.0
  %3121 = vmatprep.subr.mxu0 0.0
  %3122 = vmatpush1.msra.mxu0 0.0
  %3123 = vmatprep.subr.mxu0 0.0
  %3124 = vmatpush1.msra.mxu0 0.0
  %3125 = vmatprep.subr.mxu0 0.0
  %3126 = vmatpush1.msra.mxu0 0.0
  %3127 = vmatprep.subr.mxu0 0.0
  %3128 = vmatpush1.msra.mxu0 0.0
  %3129 = vmatprep.mubr.f32.mxu0 0.0
  %3130 = vmatmul.mubr.f32.gmra.mrb[0].mxu0 %v3063
  %v3131 = vpop.f32.mrb[0].mxu0
  %v3132 = vadd.f32 0.0, %v3131
  %v3133 = vpop.f32.mrb[0].mxu0
  %v3134 = vadd.f32 0.0, %v3133
  %3135 = vdwg.mxu0
  %v3136 = vadd.f32 %v3051, %v3132
  %v3137 = vadd.f32 %v3052, %v3134
  %3138 = vrot.lane.b32.xlu0 %v2553, 112
  %v3139 = vpop.permute.xlu0 %3138
  %3140 = vrot.lane.b32.xlu0 %v2554, 112
  %v3141 = vpop.permute.xlu0 %3140
  %v3142 = vsel %vm747, %v3139, %v3141
  %v3143 = vsel %vm747, %v3141, %v3139
  %v3144 = vmul.f32 %v3142, %v754
  %v3145 = vmul.f32 %v3143, %v758
  %v3146 = vld [vmem:[%s1559] sm:$0xff]
  %v3148 = vsel %vm980, %v3146, 0
  %3150 = vmatprep.subr.mxu0 %v3145
  %3151 = vmatpush1.msra.mxu0 %v3144
  %3152 = vmatprep.subr.mxu0 0.0
  %3153 = vmatpush1.msra.mxu0 0.0
  %3154 = vmatprep.subr.mxu0 0.0
  %3155 = vmatpush1.msra.mxu0 0.0
  %3156 = vmatprep.subr.mxu0 0.0
  %3157 = vmatpush1.msra.mxu0 0.0
  %3158 = vmatprep.subr.mxu0 0.0
  %3159 = vmatpush1.msra.mxu0 0.0
  %3160 = vmatprep.subr.mxu0 0.0
  %3161 = vmatpush1.msra.mxu0 0.0
  %3162 = vmatprep.subr.mxu0 0.0
  %3163 = vmatpush1.msra.mxu0 0.0
  %3164 = vmatprep.subr.mxu0 0.0
  %3165 = vmatpush1.msra.mxu0 0.0
  %3166 = vmatprep.subr.mxu0 0.0
  %3167 = vmatpush1.msra.mxu0 0.0
  %3168 = vmatprep.subr.mxu0 0.0
  %3169 = vmatpush1.msra.mxu0 0.0
  %3170 = vmatprep.subr.mxu0 0.0
  %3171 = vmatpush1.msra.mxu0 0.0
  %3172 = vmatprep.subr.mxu0 0.0
  %3173 = vmatpush1.msra.mxu0 0.0
  %3174 = vmatprep.subr.mxu0 0.0
  %3175 = vmatpush1.msra.mxu0 0.0
  %3176 = vmatprep.subr.mxu0 0.0
  %3177 = vmatpush1.msra.mxu0 0.0
  %3178 = vmatprep.subr.mxu0 0.0
  %3179 = vmatpush1.msra.mxu0 0.0
  %3180 = vmatprep.subr.mxu0 0.0
  %3181 = vmatpush1.msra.mxu0 0.0
  %3182 = vmatprep.subr.mxu0 0.0
  %3183 = vmatpush1.msra.mxu0 0.0
  %3184 = vmatprep.subr.mxu0 0.0
  %3185 = vmatpush1.msra.mxu0 0.0
  %3186 = vmatprep.subr.mxu0 0.0
  %3187 = vmatpush1.msra.mxu0 0.0
  %3188 = vmatprep.subr.mxu0 0.0
  %3189 = vmatpush1.msra.mxu0 0.0
  %3190 = vmatprep.subr.mxu0 0.0
  %3191 = vmatpush1.msra.mxu0 0.0
  %3192 = vmatprep.subr.mxu0 0.0
  %3193 = vmatpush1.msra.mxu0 0.0
  %3194 = vmatprep.subr.mxu0 0.0
  %3195 = vmatpush1.msra.mxu0 0.0
  %3196 = vmatprep.subr.mxu0 0.0
  %3197 = vmatpush1.msra.mxu0 0.0
  %3198 = vmatprep.subr.mxu0 0.0
  %3199 = vmatpush1.msra.mxu0 0.0
  %3200 = vmatprep.subr.mxu0 0.0
  %3201 = vmatpush1.msra.mxu0 0.0
  %3202 = vmatprep.subr.mxu0 0.0
  %3203 = vmatpush1.msra.mxu0 0.0
  %3204 = vmatprep.subr.mxu0 0.0
  %3205 = vmatpush1.msra.mxu0 0.0
  %3206 = vmatprep.subr.mxu0 0.0
  %3207 = vmatpush1.msra.mxu0 0.0
  %3208 = vmatprep.subr.mxu0 0.0
  %3209 = vmatpush1.msra.mxu0 0.0
  %3210 = vmatprep.subr.mxu0 0.0
  %3211 = vmatpush1.msra.mxu0 0.0
  %3212 = vmatprep.subr.mxu0 0.0
  %3213 = vmatpush1.msra.mxu0 0.0
  %3214 = vmatprep.mubr.f32.mxu0 0.0
  %3215 = vmatmul.mubr.f32.gmra.mrb[0].mxu0 %v3148
  %v3216 = vpop.f32.mrb[0].mxu0
  %v3217 = vadd.f32 0.0, %v3216
  %v3218 = vpop.f32.mrb[0].mxu0
  %v3219 = vadd.f32 0.0, %v3218
  %3220 = vdwg.mxu0
  %v3221 = vadd.f32 %v3136, %v3217
  %v3222 = vadd.f32 %v3137, %v3219
  %3223 = vrot.lane.b32.xlu0 %v2553, 111
  %v3224 = vpop.permute.xlu0 %3223
  %3225 = vrot.lane.b32.xlu0 %v2554, 111
  %v3226 = vpop.permute.xlu0 %3225
  %v3227 = vsel %vm851, %v3224, %v3226
  %v3228 = vsel %vm851, %v3226, %v3224
  %v3229 = vmul.f32 %v3227, %v858
  %v3230 = vmul.f32 %v3228, %v862
  %v3231 = vld [vmem:[%s1645] sm:$0xff]
  %v3233 = vsel %vm980, %v3231, 0
  %3235 = vmatprep.subr.mxu0 %v3230
  %3236 = vmatpush1.msra.mxu0 %v3229
  %3237 = vmatprep.subr.mxu0 0.0
  %3238 = vmatpush1.msra.mxu0 0.0
  %3239 = vmatprep.subr.mxu0 0.0
  %3240 = vmatpush1.msra.mxu0 0.0
  %3241 = vmatprep.subr.mxu0 0.0
  %3242 = vmatpush1.msra.mxu0 0.0
  %3243 = vmatprep.subr.mxu0 0.0
  %3244 = vmatpush1.msra.mxu0 0.0
  %3245 = vmatprep.subr.mxu0 0.0
  %3246 = vmatpush1.msra.mxu0 0.0
  %3247 = vmatprep.subr.mxu0 0.0
  %3248 = vmatpush1.msra.mxu0 0.0
  %3249 = vmatprep.subr.mxu0 0.0
  %3250 = vmatpush1.msra.mxu0 0.0
  %3251 = vmatprep.subr.mxu0 0.0
  %3252 = vmatpush1.msra.mxu0 0.0
  %3253 = vmatprep.subr.mxu0 0.0
  %3254 = vmatpush1.msra.mxu0 0.0
  %3255 = vmatprep.subr.mxu0 0.0
  %3256 = vmatpush1.msra.mxu0 0.0
  %3257 = vmatprep.subr.mxu0 0.0
  %3258 = vmatpush1.msra.mxu0 0.0
  %3259 = vmatprep.subr.mxu0 0.0
  %3260 = vmatpush1.msra.mxu0 0.0
  %3261 = vmatprep.subr.mxu0 0.0
  %3262 = vmatpush1.msra.mxu0 0.0
  %3263 = vmatprep.subr.mxu0 0.0
  %3264 = vmatpush1.msra.mxu0 0.0
  %3265 = vmatprep.subr.mxu0 0.0
  %3266 = vmatpush1.msra.mxu0 0.0
  %3267 = vmatprep.subr.mxu0 0.0
  %3268 = vmatpush1.msra.mxu0 0.0
  %3269 = vmatprep.subr.mxu0 0.0
  %3270 = vmatpush1.msra.mxu0 0.0
  %3271 = vmatprep.subr.mxu0 0.0
  %3272 = vmatpush1.msra.mxu0 0.0
  %3273 = vmatprep.subr.mxu0 0.0
  %3274 = vmatpush1.msra.mxu0 0.0
  %3275 = vmatprep.subr.mxu0 0.0
  %3276 = vmatpush1.msra.mxu0 0.0
  %3277 = vmatprep.subr.mxu0 0.0
  %3278 = vmatpush1.msra.mxu0 0.0
  %3279 = vmatprep.subr.mxu0 0.0
  %3280 = vmatpush1.msra.mxu0 0.0
  %3281 = vmatprep.subr.mxu0 0.0
  %3282 = vmatpush1.msra.mxu0 0.0
  %3283 = vmatprep.subr.mxu0 0.0
  %3284 = vmatpush1.msra.mxu0 0.0
  %3285 = vmatprep.subr.mxu0 0.0
  %3286 = vmatpush1.msra.mxu0 0.0
  %3287 = vmatprep.subr.mxu0 0.0
  %3288 = vmatpush1.msra.mxu0 0.0
  %3289 = vmatprep.subr.mxu0 0.0
  %3290 = vmatpush1.msra.mxu0 0.0
  %3291 = vmatprep.subr.mxu0 0.0
  %3292 = vmatpush1.msra.mxu0 0.0
  %3293 = vmatprep.subr.mxu0 0.0
  %3294 = vmatpush1.msra.mxu0 0.0
  %3295 = vmatprep.subr.mxu0 0.0
  %3296 = vmatpush1.msra.mxu0 0.0
  %3297 = vmatprep.subr.mxu0 0.0
  %3298 = vmatpush1.msra.mxu0 0.0
  %3299 = vmatprep.mubr.f32.mxu0 0.0
  %3300 = vmatmul.mubr.f32.gmra.mrb[0].mxu0 %v3233
  %v3301 = vpop.f32.mrb[0].mxu0
  %v3302 = vadd.f32 0.0, %v3301
  %v3303 = vpop.f32.mrb[0].mxu0
  %v3304 = vadd.f32 0.0, %v3303
  %3305 = vdwg.mxu0
  %v3306 = vadd.f32 %v3221, %v3302
  %v3307 = vadd.f32 %v3222, %v3304
  %v3308 = vld [vmem:[%s5] sm:$0xff]
  %3310 = vset.pattern.permute.xlu0 0
  %3311 = vperm.xlu0 %3310, %v3308
  %v3312 = vpop.permute.xlu0 %3311
  %v3314 = vadd.f32 %v3306, %v3312
  %v3315 = vadd.f32 %v3307, %v3312
  %v3316 = vmax.f32 %v3314, 0.0
  %v3317 = vmax.f32 %v3315, 0.0
  %s3318 = scalar_lea.vmem %s6, 16
  %3319 = vst [vmem:[%s3318] sm:$0xff] %v3316
  %3320 = vst [vmem:[%s3318 + $0x8] sm:$0xff] %v3317
  // Predicated region
  $region26: #{conv_block_forward.1} parent=0 // pred_check
    _
  $region27: #{conv_block_forward.1} parent=0 // pred_check_branch
    %3322 = sbr.rel (0) target = $region29
  $region28: #{conv_block_forward.1} parent=0 // pred_region
    _
  $region29: #{conv_block_forward.1} parent=0 // pred_fallthru
    _
  // Predicated region
  $region30: #{conv_block_forward.1} parent=0 // pred_check
    _
  $region31: #{conv_block_forward.1} parent=0 // pred_check_branch
    %3324 = sbr.rel (0) target = $region33
  $region32: #{conv_block_forward.1} parent=0 // pred_region
    _
  $region33: #{conv_block_forward.1} parent=0 // pred_fallthru
    _

</llo_original>
